<compile_context>
chip_gen: v7x
topology: tpu7x:2x2x1
jax: 0.10.0
libtpu: 0.0.40
codegen_flags: <defaults>
</compile_context>

<pallas_src>
import functools

import jax
import jax.numpy as jnp
import numpy as np
from jax.experimental import pallas as pl
from jax.experimental.pallas import tpu as pltpu

LANE = 128  # TPU lane width; all feature dims are padded to this.


def _round_up(x, m):
    return (x + m - 1) // m * m


def _cdiv(a, b):
    return -(-a // b)


# ----------------------------- Pallas kernel ------------------------------ #

def _skipnet_kernel(num_blocks, resnet_depth, x_ref, w_ref, b_ref, out_ref):
    """One grid step processes a (TILE_B, LANE) activation tile.

    x_ref   : [TILE_B, D]   activation tile (f32)
    w_ref   : [L, D, D]     all layer weights, stacked & zero-padded to D = 128
    b_ref   : [L, 1, D]     all layer biases, stacked & zero-padded
    out_ref : [TILE_B, D]   output tile (f32; real latent dims sliced by wrapper)
    """
    compute_dtype = w_ref.dtype  # bf16 (default, MXU-native) or f32 (exact path)

    def linear(h, layer):
        w = w_ref[layer]                              # [D, D], static slice into the stack
        b = b_ref[layer].astype(jnp.float32)          # [1, D]
        # Only the matmul operands are narrowed; accumulation, bias add,
        # relu and the residual add stay in f32.
        return jnp.dot(h.astype(compute_dtype), w,
                       preferred_element_type=jnp.float32) + b

    h = x_ref[...].astype(jnp.float32)

    # NOTE(perf): the 14-layer chain is statically unrolled; if bundle dumps ever show
    # vreg spills (ld/st slot saturation), wrap the resnet_depth inner loop in
    # lax.fori_loop(..., unroll=True) with dynamic w_ref[layer] indexing.
    idx = 0
    # functions[0]: Linear(input_dim, skip_dim) followed by relu
    h = jnp.maximum(linear(h, idx), 0.0)
    idx += 1

    # functions[1 .. num_blocks]: ResnetBlock(skip_dim), each followed by relu
    for _ in range(num_blocks):
        block_in = h
        for _ in range(resnet_depth):                 # forward_functions[:-1] : linear + relu
            h = jnp.maximum(linear(h, idx), 0.0)
            idx += 1
        h = linear(h, idx) + block_in                 # forward_functions[-1] + residual
        idx += 1
        h = jnp.maximum(h, 0.0)                       # relu applied by the outer loop

    # functions[-1]: Linear(skip_dim, latent_dim); output_activ = Identity
    h = linear(h, idx)
    out_ref[...] = h.astype(out_ref.dtype)


# ------------------------------ batch tiling -------------------------------- #

def _choose_batch_tiling(batch, tile_b_max=1024, megacore_split_threshold=512):
    """Pick (tile_b, batch_pad) such that:
       * tile_b <= tile_b_max and is a multiple of 8 (sublane alignment),
       * padded garbage rows are < 8 per grid step (no round_up(batch, tile) blow-up),
       * grid has >= 2 steps for medium/large batches so both v7x TCs get work."""
    batch8 = _round_up(max(batch, 1), 8)
    n_tiles = _cdiv(batch8, tile_b_max)
    if n_tiles == 1 and batch8 >= megacore_split_threshold:
        n_tiles = 2                                   # keep both v7x TensorCores busy
    tile_b = _round_up(_cdiv(batch8, n_tiles), 8)
    return tile_b, tile_b * n_tiles


# ------------------------------- wrapper ----------------------------------- #

def skipnet_forward(x, w_stack, b_stack, *, num_blocks, resnet_depth,
                    latent_dim, tile_b_max=1024):
    """x: [B, input_dim] f32.  w_stack: [L, 128, 128], b_stack: [L, 1, 128]
    (zero-padded, bf16 or f32).  Returns [B, latent_dim] f32."""
    batch, in_dim = x.shape
    n_layers, dim_pad, _ = w_stack.shape
    assert n_layers == 1 + num_blocks * (resnet_depth + 1) + 1
    assert dim_pad % LANE == 0
    assert in_dim <= dim_pad and latent_dim <= dim_pad

    tile_b, batch_pad = _choose_batch_tiling(batch, tile_b_max)

    # Lane-pad input features and pad the batch (exact zero padding).
    x_pad = jnp.zeros((batch_pad, dim_pad), jnp.float32)
    x_pad = x_pad.at[:batch, :in_dim].set(x.astype(jnp.float32))

    grid = (batch_pad // tile_b,)
    kernel = functools.partial(_skipnet_kernel, num_blocks, resnet_depth)

    def make_in_specs(single_buffer_weights):
        w_kwargs = {}
        if single_buffer_weights:
            # Grid-invariant blocks never get refilled -> one pipeline buffer is enough;
            # frees ~0.5-1.8 MiB of VMEM headroom (most relevant on v7x, 64 MiB physical).
            w_kwargs["pipeline_mode"] = pl.Buffered(buffer_count=1)
        return [
            # Activation tiles stream over the batch grid (double-buffered by Pallas).
            pl.BlockSpec((tile_b, dim_pad), lambda i: (i, 0)),
            # Weights / biases: one block each, resident in VMEM across all grid steps.
            pl.BlockSpec((n_layers, dim_pad, dim_pad), lambda i: (0, 0, 0), **w_kwargs),
            pl.BlockSpec((n_layers, 1, dim_pad), lambda i: (0, 0, 0), **w_kwargs),
        ]

    def call(single_buffer_weights):
        return pl.pallas_call(
            kernel,
            out_shape=jax.ShapeDtypeStruct((batch_pad, dim_pad), jnp.float32),
            grid=grid,
            in_specs=make_in_specs(single_buffer_weights),
            out_specs=pl.BlockSpec((tile_b, dim_pad), lambda i: (i, 0)),
            compiler_params=pltpu.CompilerParams(
                dimension_semantics=("parallel",),     # batch axis shards across TCs on v7x
                vmem_limit_bytes=32 * 1024 * 1024,     # safe on v5e/v6e/v7x at tile_b<=2048
            ),
        )(x_pad, w_stack, b_stack)

    try:
        out = call(single_buffer_weights=True)
    except Exception:
        # Fallback if this JAX build rejects Buffered(1) for top-level pallas_call specs.
        out = call(single_buffer_weights=False)

    return out[:batch, :latent_dim]


# --------------------------- parameter creation ---------------------------- #

def _init_linear(key, in_dim, out_dim):
    """PyTorch-default-style init: U(-1/sqrt(in), 1/sqrt(in))."""
    kw, kb = jax.random.split(key)
    bound = 1.0 / np.sqrt(in_dim)
    w = jax.random.uniform(kw, (in_dim, out_dim), jnp.float32, -bound, bound)
    b = jax.random.uniform(kb, (1, out_dim), jnp.float32, -bound, bound)
    return w, b


def make_skipnet_params(key, input_dim, latent_dim, skip_dim, num_blocks, resnet_depth):
    dims = [(input_dim, skip_dim)]
    for _ in range(num_blocks):
        dims += [(skip_dim, skip_dim)] * (resnet_depth + 1)
    dims.append((skip_dim, latent_dim))
    keys = jax.random.split(key, len(dims))
    return [_init_linear(k, din, dout) for k, (din, dout) in zip(keys, dims)]


def stack_and_pad_params(params, dim_pad=LANE, dtype=jnp.bfloat16):
    """Stack all layers into one weight tensor + one bias tensor, zero-padded to dim_pad."""
    assert dim_pad % LANE == 0, "padded lane dim must be a multiple of 128"
    max_dim = max(max(w.shape) for w, _ in params)
    assert max_dim <= dim_pad, (
        f"real layer dim {max_dim} exceeds padded lane dim {dim_pad}")
    n_layers = len(params)
    w_stack = np.zeros((n_layers, dim_pad, dim_pad), np.float32)
    b_stack = np.zeros((n_layers, 1, dim_pad), np.float32)
    for i, (w, b) in enumerate(params):
        din, dout = w.shape
        w_stack[i, :din, :dout] = np.asarray(w)
        b_stack[i, :, :dout] = np.asarray(b)
    return jnp.asarray(w_stack, dtype), jnp.asarray(b_stack, dtype)


# ------------------------------ reference ---------------------------------- #

def skipnet_reference(x, w_stack, b_stack, *, num_blocks, resnet_depth, latent_dim):
    """Pure-JAX reference with the SAME dtype handling as the kernel: LHS cast to the
    weight dtype, f32 accumulation, f32 bias/relu/residual."""
    compute_dtype = w_stack.dtype
    w = w_stack
    b = jnp.asarray(b_stack, jnp.float32)
    dim_pad = w.shape[1]
    batch, in_dim = x.shape
    h = jnp.zeros((batch, dim_pad), jnp.float32).at[:, :in_dim].set(x.astype(jnp.float32))

    def lin(h, i):
        return jnp.dot(h.astype(compute_dtype), w[i],
                       preferred_element_type=jnp.float32) + b[i]

    idx = 0
    h = jnp.maximum(lin(h, idx), 0.0)
    idx += 1
    for _ in range(num_blocks):
        block_in = h
        for _ in range(resnet_depth):
            h = jnp.maximum(lin(h, idx), 0.0)
            idx += 1
        h = lin(h, idx) + block_in
        idx += 1
        h = jnp.maximum(h, 0.0)
    h = lin(h, idx)
    return h[:, :latent_dim]


# --------------------------------- main ------------------------------------ #

if __name__ == "__main__":
    INPUT_DIM = 16
    LATENT_DIM = 8
    SKIP_DIM = 32
    NUM_BLOCKS = 3
    RESNET_DEPTH = 3

    key = jax.random.PRNGKey(0)
    kx1, kx2, kp = jax.random.split(key, 3)

    params = make_skipnet_params(kp, INPUT_DIM, LATENT_DIM, SKIP_DIM,
                                 NUM_BLOCKS, RESNET_DEPTH)

    # ---- 1) f32 weights, tiny batch: exact path (tight tolerance, single grid step) ----
    x_small = jax.random.normal(kx1, (8, INPUT_DIM), jnp.float32)
    w_f32, b_f32 = stack_and_pad_params(params, LANE, jnp.float32)
    out = jax.block_until_ready(
        skipnet_forward(x_small, w_f32, b_f32, num_blocks=NUM_BLOCKS,
                        resnet_depth=RESNET_DEPTH, latent_dim=LATENT_DIM))
    ref = skipnet_reference(x_small, w_f32, b_f32, num_blocks=NUM_BLOCKS,
                            resnet_depth=RESNET_DEPTH, latent_dim=LATENT_DIM)
    np.testing.assert_allclose(np.asarray(out), np.asarray(ref), rtol=1e-5, atol=1e-5)

    # ---- 2) bf16 weights (default / MXU-native on v5e/v6e/v7x), medium batch:
    #         exercises the new tiling (grid of 2 tiles, minimal batch padding) ----
    x_med = jax.random.normal(kx2, (520, INPUT_DIM), jnp.float32)
    w_bf16, b_bf16 = stack_and_pad_params(params, LANE, jnp.bfloat16)
    out_bf16 = jax.block_until_ready(
        skipnet_forward(x_med, w_bf16, b_bf16, num_blocks=NUM_BLOCKS,
                        resnet_depth=RESNET_DEPTH, latent_dim=LATENT_DIM))
    ref_bf16 = skipnet_reference(x_med, w_bf16, b_bf16, num_blocks=NUM_BLOCKS,
                                 resnet_depth=RESNET_DEPTH, latent_dim=LATENT_DIM)
    # Reference applies the identical bf16 quantization; only f32 accumulation-order
    # differences remain.
    np.testing.assert_allclose(np.asarray(out_bf16), np.asarray(ref_bf16),
                               rtol=2e-3, atol=2e-3)

    print("KERNEL_OK")
</pallas_src>

<mosaic_0001>
module attributes {stable_mosaic.version = 11 : i64} {
  func.func @_skipnet_kernel(%arg0: i32, %arg1: memref<8x128xf32, #tpu.memory_space<vmem>>, %arg2: memref<14x128x128xf32, #tpu.memory_space<vmem>>, %arg3: memref<14x1x128xf32, #tpu.memory_space<vmem>>, %arg4: memref<8x128xf32, #tpu.memory_space<vmem>>) attributes {dimension_semantics = [#tpu.dimension_semantics<parallel>], iteration_bounds = array<i64: 1>, scalar_prefetch = 0 : i64, scratch_operands = 0 : i64, tpu.core_type = #tpu.core_type<tc>, window_params = [{transform_indices = @transform_0, window_bounds = array<i64: 8, 128>}, {pipeline_mode = #tpu.pipeline_mode<synchronous>, transform_indices = @transform_1, window_bounds = array<i64: 14, 128, 128>}, {pipeline_mode = #tpu.pipeline_mode<synchronous>, transform_indices = @transform_2, window_bounds = array<i64: 14, 1, 128>}, {transform_indices = @transform_3, window_bounds = array<i64: 8, 128>}]} {
    %c0 = arith.constant 0 : index
    %c0_0 = arith.constant 0 : index
    %0 = vector.load %arg1[%c0, %c0_0] : memref<8x128xf32, #tpu.memory_space<vmem>>, vector<8x128xf32>
    %c0_1 = arith.constant 0 : index
    %c0_2 = arith.constant 0 : index
    %c0_3 = arith.constant 0 : index
    %1 = vector.load %arg2[%c0_1, %c0_2, %c0_3] : memref<14x128x128xf32, #tpu.memory_space<vmem>>, vector<1x128x128xf32>
    %2 = vector.shape_cast %1 : vector<1x128x128xf32> to vector<128x128xf32>
    %c0_4 = arith.constant 0 : index
    %c0_5 = arith.constant 0 : index
    %c0_6 = arith.constant 0 : index
    %3 = vector.load %arg3[%c0_4, %c0_5, %c0_6] : memref<14x1x128xf32, #tpu.memory_space<vmem>>, vector<1x1x128xf32>
    %4 = vector.shape_cast %3 : vector<1x1x128xf32> to vector<1x128xf32>
    %cst = arith.constant dense<0.000000e+00> : vector<8x128xf32>
    %5 = tpu.matmul %0, %2, %cst {dimension_numbers = #tpu.dot_dimension_numbers<[1], [0], [0], [1], [0, 0, 1, 1], [], []>} : vector<8x128xf32>, vector<128x128xf32>, vector<8x128xf32> -> vector<8x128xf32>
    %6 = vector.broadcast %4 : vector<1x128xf32> to vector<8x128xf32>
    %7 = arith.addf %5, %6 : vector<8x128xf32>
    %cst_7 = arith.constant 0.000000e+00 : f32
    %8 = vector.broadcast %cst_7 : f32 to vector<8x128xf32>
    %9 = arith.maximumf %7, %8 : vector<8x128xf32>
    %c1 = arith.constant 1 : index
    %c0_8 = arith.constant 0 : index
    %c0_9 = arith.constant 0 : index
    %10 = vector.load %arg2[%c1, %c0_8, %c0_9] : memref<14x128x128xf32, #tpu.memory_space<vmem>>, vector<1x128x128xf32>
    %11 = vector.shape_cast %10 : vector<1x128x128xf32> to vector<128x128xf32>
    %c1_10 = arith.constant 1 : index
    %c0_11 = arith.constant 0 : index
    %c0_12 = arith.constant 0 : index
    %12 = vector.load %arg3[%c1_10, %c0_11, %c0_12] : memref<14x1x128xf32, #tpu.memory_space<vmem>>, vector<1x1x128xf32>
    %13 = vector.shape_cast %12 : vector<1x1x128xf32> to vector<1x128xf32>
    %cst_13 = arith.constant dense<0.000000e+00> : vector<8x128xf32>
    %14 = tpu.matmul %9, %11, %cst_13 {dimension_numbers = #tpu.dot_dimension_numbers<[1], [0], [0], [1], [0, 0, 1, 1], [], []>} : vector<8x128xf32>, vector<128x128xf32>, vector<8x128xf32> -> vector<8x128xf32>
    %15 = vector.broadcast %13 : vector<1x128xf32> to vector<8x128xf32>
    %16 = arith.addf %14, %15 : vector<8x128xf32>
    %cst_14 = arith.constant 0.000000e+00 : f32
    %17 = vector.broadcast %cst_14 : f32 to vector<8x128xf32>
    %18 = arith.maximumf %16, %17 : vector<8x128xf32>
    %c2 = arith.constant 2 : index
    %c0_15 = arith.constant 0 : index
    %c0_16 = arith.constant 0 : index
    %19 = vector.load %arg2[%c2, %c0_15, %c0_16] : memref<14x128x128xf32, #tpu.memory_space<vmem>>, vector<1x128x128xf32>
    %20 = vector.shape_cast %19 : vector<1x128x128xf32> to vector<128x128xf32>
    %c2_17 = arith.constant 2 : index
    %c0_18 = arith.constant 0 : index
    %c0_19 = arith.constant 0 : index
    %21 = vector.load %arg3[%c2_17, %c0_18, %c0_19] : memref<14x1x128xf32, #tpu.memory_space<vmem>>, vector<1x1x128xf32>
    %22 = vector.shape_cast %21 : vector<1x1x128xf32> to vector<1x128xf32>
    %cst_20 = arith.constant dense<0.000000e+00> : vector<8x128xf32>
    %23 = tpu.matmul %18, %20, %cst_20 {dimension_numbers = #tpu.dot_dimension_numbers<[1], [0], [0], [1], [0, 0, 1, 1], [], []>} : vector<8x128xf32>, vector<128x128xf32>, vector<8x128xf32> -> vector<8x128xf32>
    %24 = vector.broadcast %22 : vector<1x128xf32> to vector<8x128xf32>
    %25 = arith.addf %23, %24 : vector<8x128xf32>
    %cst_21 = arith.constant 0.000000e+00 : f32
    %26 = vector.broadcast %cst_21 : f32 to vector<8x128xf32>
    %27 = arith.maximumf %25, %26 : vector<8x128xf32>
    %c3 = arith.constant 3 : index
    %c0_22 = arith.constant 0 : index
    %c0_23 = arith.constant 0 : index
    %28 = vector.load %arg2[%c3, %c0_22, %c0_23] : memref<14x128x128xf32, #tpu.memory_space<vmem>>, vector<1x128x128xf32>
    %29 = vector.shape_cast %28 : vector<1x128x128xf32> to vector<128x128xf32>
    %c3_24 = arith.constant 3 : index
    %c0_25 = arith.constant 0 : index
    %c0_26 = arith.constant 0 : index
    %30 = vector.load %arg3[%c3_24, %c0_25, %c0_26] : memref<14x1x128xf32, #tpu.memory_space<vmem>>, vector<1x1x128xf32>
    %31 = vector.shape_cast %30 : vector<1x1x128xf32> to vector<1x128xf32>
    %cst_27 = arith.constant dense<0.000000e+00> : vector<8x128xf32>
    %32 = tpu.matmul %27, %29, %cst_27 {dimension_numbers = #tpu.dot_dimension_numbers<[1], [0], [0], [1], [0, 0, 1, 1], [], []>} : vector<8x128xf32>, vector<128x128xf32>, vector<8x128xf32> -> vector<8x128xf32>
    %33 = vector.broadcast %31 : vector<1x128xf32> to vector<8x128xf32>
    %34 = arith.addf %32, %33 : vector<8x128xf32>
    %cst_28 = arith.constant 0.000000e+00 : f32
    %35 = vector.broadcast %cst_28 : f32 to vector<8x128xf32>
    %36 = arith.maximumf %34, %35 : vector<8x128xf32>
    %c4 = arith.constant 4 : index
    %c0_29 = arith.constant 0 : index
    %c0_30 = arith.constant 0 : index
    %37 = vector.load %arg2[%c4, %c0_29, %c0_30] : memref<14x128x128xf32, #tpu.memory_space<vmem>>, vector<1x128x128xf32>
    %38 = vector.shape_cast %37 : vector<1x128x128xf32> to vector<128x128xf32>
    %c4_31 = arith.constant 4 : index
    %c0_32 = arith.constant 0 : index
    %c0_33 = arith.constant 0 : index
    %39 = vector.load %arg3[%c4_31, %c0_32, %c0_33] : memref<14x1x128xf32, #tpu.memory_space<vmem>>, vector<1x1x128xf32>
    %40 = vector.shape_cast %39 : vector<1x1x128xf32> to vector<1x128xf32>
    %cst_34 = arith.constant dense<0.000000e+00> : vector<8x128xf32>
    %41 = tpu.matmul %36, %38, %cst_34 {dimension_numbers = #tpu.dot_dimension_numbers<[1], [0], [0], [1], [0, 0, 1, 1], [], []>} : vector<8x128xf32>, vector<128x128xf32>, vector<8x128xf32> -> vector<8x128xf32>
    %42 = vector.broadcast %40 : vector<1x128xf32> to vector<8x128xf32>
    %43 = arith.addf %41, %42 : vector<8x128xf32>
    %44 = arith.addf %43, %9 : vector<8x128xf32>
    %cst_35 = arith.constant 0.000000e+00 : f32
    %45 = vector.broadcast %cst_35 : f32 to vector<8x128xf32>
    %46 = arith.maximumf %44, %45 : vector<8x128xf32>
    %c5 = arith.constant 5 : index
    %c0_36 = arith.constant 0 : index
    %c0_37 = arith.constant 0 : index
    %47 = vector.load %arg2[%c5, %c0_36, %c0_37] : memref<14x128x128xf32, #tpu.memory_space<vmem>>, vector<1x128x128xf32>
    %48 = vector.shape_cast %47 : vector<1x128x128xf32> to vector<128x128xf32>
    %c5_38 = arith.constant 5 : index
    %c0_39 = arith.constant 0 : index
    %c0_40 = arith.constant 0 : index
    %49 = vector.load %arg3[%c5_38, %c0_39, %c0_40] : memref<14x1x128xf32, #tpu.memory_space<vmem>>, vector<1x1x128xf32>
    %50 = vector.shape_cast %49 : vector<1x1x128xf32> to vector<1x128xf32>
    %cst_41 = arith.constant dense<0.000000e+00> : vector<8x128xf32>
    %51 = tpu.matmul %46, %48, %cst_41 {dimension_numbers = #tpu.dot_dimension_numbers<[1], [0], [0], [1], [0, 0, 1, 1], [], []>} : vector<8x128xf32>, vector<128x128xf32>, vector<8x128xf32> -> vector<8x128xf32>
    %52 = vector.broadcast %50 : vector<1x128xf32> to vector<8x128xf32>
    %53 = arith.addf %51, %52 : vector<8x128xf32>
    %cst_42 = arith.constant 0.000000e+00 : f32
    %54 = vector.broadcast %cst_42 : f32 to vector<8x128xf32>
    %55 = arith.maximumf %53, %54 : vector<8x128xf32>
    %c6 = arith.constant 6 : index
    %c0_43 = arith.constant 0 : index
    %c0_44 = arith.constant 0 : index
    %56 = vector.load %arg2[%c6, %c0_43, %c0_44] : memref<14x128x128xf32, #tpu.memory_space<vmem>>, vector<1x128x128xf32>
    %57 = vector.shape_cast %56 : vector<1x128x128xf32> to vector<128x128xf32>
    %c6_45 = arith.constant 6 : index
    %c0_46 = arith.constant 0 : index
    %c0_47 = arith.constant 0 : index
    %58 = vector.load %arg3[%c6_45, %c0_46, %c0_47] : memref<14x1x128xf32, #tpu.memory_space<vmem>>, vector<1x1x128xf32>
    %59 = vector.shape_cast %58 : vector<1x1x128xf32> to vector<1x128xf32>
    %cst_48 = arith.constant dense<0.000000e+00> : vector<8x128xf32>
    %60 = tpu.matmul %55, %57, %cst_48 {dimension_numbers = #tpu.dot_dimension_numbers<[1], [0], [0], [1], [0, 0, 1, 1], [], []>} : vector<8x128xf32>, vector<128x128xf32>, vector<8x128xf32> -> vector<8x128xf32>
    %61 = vector.broadcast %59 : vector<1x128xf32> to vector<8x128xf32>
    %62 = arith.addf %60, %61 : vector<8x128xf32>
    %cst_49 = arith.constant 0.000000e+00 : f32
    %63 = vector.broadcast %cst_49 : f32 to vector<8x128xf32>
    %64 = arith.maximumf %62, %63 : vector<8x128xf32>
    %c7 = arith.constant 7 : index
    %c0_50 = arith.constant 0 : index
    %c0_51 = arith.constant 0 : index
    %65 = vector.load %arg2[%c7, %c0_50, %c0_51] : memref<14x128x128xf32, #tpu.memory_space<vmem>>, vector<1x128x128xf32>
    %66 = vector.shape_cast %65 : vector<1x128x128xf32> to vector<128x128xf32>
    %c7_52 = arith.constant 7 : index
    %c0_53 = arith.constant 0 : index
    %c0_54 = arith.constant 0 : index
    %67 = vector.load %arg3[%c7_52, %c0_53, %c0_54] : memref<14x1x128xf32, #tpu.memory_space<vmem>>, vector<1x1x128xf32>
    %68 = vector.shape_cast %67 : vector<1x1x128xf32> to vector<1x128xf32>
    %cst_55 = arith.constant dense<0.000000e+00> : vector<8x128xf32>
    %69 = tpu.matmul %64, %66, %cst_55 {dimension_numbers = #tpu.dot_dimension_numbers<[1], [0], [0], [1], [0, 0, 1, 1], [], []>} : vector<8x128xf32>, vector<128x128xf32>, vector<8x128xf32> -> vector<8x128xf32>
    %70 = vector.broadcast %68 : vector<1x128xf32> to vector<8x128xf32>
    %71 = arith.addf %69, %70 : vector<8x128xf32>
    %cst_56 = arith.constant 0.000000e+00 : f32
    %72 = vector.broadcast %cst_56 : f32 to vector<8x128xf32>
    %73 = arith.maximumf %71, %72 : vector<8x128xf32>
    %c8 = arith.constant 8 : index
    %c0_57 = arith.constant 0 : index
    %c0_58 = arith.constant 0 : index
    %74 = vector.load %arg2[%c8, %c0_57, %c0_58] : memref<14x128x128xf32, #tpu.memory_space<vmem>>, vector<1x128x128xf32>
    %75 = vector.shape_cast %74 : vector<1x128x128xf32> to vector<128x128xf32>
    %c8_59 = arith.constant 8 : index
    %c0_60 = arith.constant 0 : index
    %c0_61 = arith.constant 0 : index
    %76 = vector.load %arg3[%c8_59, %c0_60, %c0_61] : memref<14x1x128xf32, #tpu.memory_space<vmem>>, vector<1x1x128xf32>
    %77 = vector.shape_cast %76 : vector<1x1x128xf32> to vector<1x128xf32>
    %cst_62 = arith.constant dense<0.000000e+00> : vector<8x128xf32>
    %78 = tpu.matmul %73, %75, %cst_62 {dimension_numbers = #tpu.dot_dimension_numbers<[1], [0], [0], [1], [0, 0, 1, 1], [], []>} : vector<8x128xf32>, vector<128x128xf32>, vector<8x128xf32> -> vector<8x128xf32>
    %79 = vector.broadcast %77 : vector<1x128xf32> to vector<8x128xf32>
    %80 = arith.addf %78, %79 : vector<8x128xf32>
    %81 = arith.addf %80, %46 : vector<8x128xf32>
    %cst_63 = arith.constant 0.000000e+00 : f32
    %82 = vector.broadcast %cst_63 : f32 to vector<8x128xf32>
    %83 = arith.maximumf %81, %82 : vector<8x128xf32>
    %c9 = arith.constant 9 : index
    %c0_64 = arith.constant 0 : index
    %c0_65 = arith.constant 0 : index
    %84 = vector.load %arg2[%c9, %c0_64, %c0_65] : memref<14x128x128xf32, #tpu.memory_space<vmem>>, vector<1x128x128xf32>
    %85 = vector.shape_cast %84 : vector<1x128x128xf32> to vector<128x128xf32>
    %c9_66 = arith.constant 9 : index
    %c0_67 = arith.constant 0 : index
    %c0_68 = arith.constant 0 : index
    %86 = vector.load %arg3[%c9_66, %c0_67, %c0_68] : memref<14x1x128xf32, #tpu.memory_space<vmem>>, vector<1x1x128xf32>
    %87 = vector.shape_cast %86 : vector<1x1x128xf32> to vector<1x128xf32>
    %cst_69 = arith.constant dense<0.000000e+00> : vector<8x128xf32>
    %88 = tpu.matmul %83, %85, %cst_69 {dimension_numbers = #tpu.dot_dimension_numbers<[1], [0], [0], [1], [0, 0, 1, 1], [], []>} : vector<8x128xf32>, vector<128x128xf32>, vector<8x128xf32> -> vector<8x128xf32>
    %89 = vector.broadcast %87 : vector<1x128xf32> to vector<8x128xf32>
    %90 = arith.addf %88, %89 : vector<8x128xf32>
    %cst_70 = arith.constant 0.000000e+00 : f32
    %91 = vector.broadcast %cst_70 : f32 to vector<8x128xf32>
    %92 = arith.maximumf %90, %91 : vector<8x128xf32>
    %c10 = arith.constant 10 : index
    %c0_71 = arith.constant 0 : index
    %c0_72 = arith.constant 0 : index
    %93 = vector.load %arg2[%c10, %c0_71, %c0_72] : memref<14x128x128xf32, #tpu.memory_space<vmem>>, vector<1x128x128xf32>
    %94 = vector.shape_cast %93 : vector<1x128x128xf32> to vector<128x128xf32>
    %c10_73 = arith.constant 10 : index
    %c0_74 = arith.constant 0 : index
    %c0_75 = arith.constant 0 : index
    %95 = vector.load %arg3[%c10_73, %c0_74, %c0_75] : memref<14x1x128xf32, #tpu.memory_space<vmem>>, vector<1x1x128xf32>
    %96 = vector.shape_cast %95 : vector<1x1x128xf32> to vector<1x128xf32>
    %cst_76 = arith.constant dense<0.000000e+00> : vector<8x128xf32>
    %97 = tpu.matmul %92, %94, %cst_76 {dimension_numbers = #tpu.dot_dimension_numbers<[1], [0], [0], [1], [0, 0, 1, 1], [], []>} : vector<8x128xf32>, vector<128x128xf32>, vector<8x128xf32> -> vector<8x128xf32>
    %98 = vector.broadcast %96 : vector<1x128xf32> to vector<8x128xf32>
    %99 = arith.addf %97, %98 : vector<8x128xf32>
    %cst_77 = arith.constant 0.000000e+00 : f32
    %100 = vector.broadcast %cst_77 : f32 to vector<8x128xf32>
    %101 = arith.maximumf %99, %100 : vector<8x128xf32>
    %c11 = arith.constant 11 : index
    %c0_78 = arith.constant 0 : index
    %c0_79 = arith.constant 0 : index
    %102 = vector.load %arg2[%c11, %c0_78, %c0_79] : memref<14x128x128xf32, #tpu.memory_space<vmem>>, vector<1x128x128xf32>
    %103 = vector.shape_cast %102 : vector<1x128x128xf32> to vector<128x128xf32>
    %c11_80 = arith.constant 11 : index
    %c0_81 = arith.constant 0 : index
    %c0_82 = arith.constant 0 : index
    %104 = vector.load %arg3[%c11_80, %c0_81, %c0_82] : memref<14x1x128xf32, #tpu.memory_space<vmem>>, vector<1x1x128xf32>
    %105 = vector.shape_cast %104 : vector<1x1x128xf32> to vector<1x128xf32>
    %cst_83 = arith.constant dense<0.000000e+00> : vector<8x128xf32>
    %106 = tpu.matmul %101, %103, %cst_83 {dimension_numbers = #tpu.dot_dimension_numbers<[1], [0], [0], [1], [0, 0, 1, 1], [], []>} : vector<8x128xf32>, vector<128x128xf32>, vector<8x128xf32> -> vector<8x128xf32>
    %107 = vector.broadcast %105 : vector<1x128xf32> to vector<8x128xf32>
    %108 = arith.addf %106, %107 : vector<8x128xf32>
    %cst_84 = arith.constant 0.000000e+00 : f32
    %109 = vector.broadcast %cst_84 : f32 to vector<8x128xf32>
    %110 = arith.maximumf %108, %109 : vector<8x128xf32>
    %c12 = arith.constant 12 : index
    %c0_85 = arith.constant 0 : index
    %c0_86 = arith.constant 0 : index
    %111 = vector.load %arg2[%c12, %c0_85, %c0_86] : memref<14x128x128xf32, #tpu.memory_space<vmem>>, vector<1x128x128xf32>
    %112 = vector.shape_cast %111 : vector<1x128x128xf32> to vector<128x128xf32>
    %c12_87 = arith.constant 12 : index
    %c0_88 = arith.constant 0 : index
    %c0_89 = arith.constant 0 : index
    %113 = vector.load %arg3[%c12_87, %c0_88, %c0_89] : memref<14x1x128xf32, #tpu.memory_space<vmem>>, vector<1x1x128xf32>
    %114 = vector.shape_cast %113 : vector<1x1x128xf32> to vector<1x128xf32>
    %cst_90 = arith.constant dense<0.000000e+00> : vector<8x128xf32>
    %115 = tpu.matmul %110, %112, %cst_90 {dimension_numbers = #tpu.dot_dimension_numbers<[1], [0], [0], [1], [0, 0, 1, 1], [], []>} : vector<8x128xf32>, vector<128x128xf32>, vector<8x128xf32> -> vector<8x128xf32>
    %116 = vector.broadcast %114 : vector<1x128xf32> to vector<8x128xf32>
    %117 = arith.addf %115, %116 : vector<8x128xf32>
    %118 = arith.addf %117, %83 : vector<8x128xf32>
    %cst_91 = arith.constant 0.000000e+00 : f32
    %119 = vector.broadcast %cst_91 : f32 to vector<8x128xf32>
    %120 = arith.maximumf %118, %119 : vector<8x128xf32>
    %c13 = arith.constant 13 : index
    %c0_92 = arith.constant 0 : index
    %c0_93 = arith.constant 0 : index
    %121 = vector.load %arg2[%c13, %c0_92, %c0_93] : memref<14x128x128xf32, #tpu.memory_space<vmem>>, vector<1x128x128xf32>
    %122 = vector.shape_cast %121 : vector<1x128x128xf32> to vector<128x128xf32>
    %c13_94 = arith.constant 13 : index
    %c0_95 = arith.constant 0 : index
    %c0_96 = arith.constant 0 : index
    %123 = vector.load %arg3[%c13_94, %c0_95, %c0_96] : memref<14x1x128xf32, #tpu.memory_space<vmem>>, vector<1x1x128xf32>
    %124 = vector.shape_cast %123 : vector<1x1x128xf32> to vector<1x128xf32>
    %cst_97 = arith.constant dense<0.000000e+00> : vector<8x128xf32>
    %125 = tpu.matmul %120, %122, %cst_97 {dimension_numbers = #tpu.dot_dimension_numbers<[1], [0], [0], [1], [0, 0, 1, 1], [], []>} : vector<8x128xf32>, vector<128x128xf32>, vector<8x128xf32> -> vector<8x128xf32>
    %126 = vector.broadcast %124 : vector<1x128xf32> to vector<8x128xf32>
    %127 = arith.addf %125, %126 : vector<8x128xf32>
    %c0_98 = arith.constant 0 : index
    %c0_99 = arith.constant 0 : index
    %128 = vector.load %arg4[%c0_98, %c0_99] : memref<8x128xf32, #tpu.memory_space<vmem>>, vector<8x128xf32>
    tpu.vector_store %arg4[%c0_98, %c0_99], %127 {strides = array<i32>} : memref<8x128xf32, #tpu.memory_space<vmem>>, vector<8x128xf32>,
    return
  }
  func.func @transform_0(%arg0: i32) -> (i32, i32) {
    %c0_i32 = arith.constant 0 : i32
    %c0_i32_0 = arith.constant 0 : i32
    return %arg0, %c0_i32 : i32, i32
  }
  func.func @transform_1(%arg0: i32) -> (i32, i32, i32) {
    %c0_i32 = arith.constant 0 : i32
    %c0_i32_0 = arith.constant 0 : i32
    %c0_i32_1 = arith.constant 0 : i32
    %c0_i32_2 = arith.constant 0 : i32
    return %c0_i32, %c0_i32_0, %c0_i32_1 : i32, i32, i32
  }
  func.func @transform_2(%arg0: i32) -> (i32, i32, i32) {
    %c0_i32 = arith.constant 0 : i32
    %c0_i32_0 = arith.constant 0 : i32
    %c0_i32_1 = arith.constant 0 : i32
    %c0_i32_2 = arith.constant 0 : i32
    return %c0_i32, %c0_i32_0, %c0_i32_1 : i32, i32, i32
  }
  func.func @transform_3(%arg0: i32) -> (i32, i32) {
    %c0_i32 = arith.constant 0 : i32
    %c0_i32_0 = arith.constant 0 : i32
    return %arg0, %c0_i32 : i32, i32
  }
}

module attributes {stable_mosaic.version = 11 : i64} {
  func.func @_skipnet_kernel(%arg0: i32, %arg1: memref<8x128xf32, #tpu.memory_space<vmem>>, %arg2: memref<14x128x128xf32, #tpu.memory_space<vmem>>, %arg3: memref<14x1x128xf32, #tpu.memory_space<vmem>>, %arg4: memref<8x128xf32, #tpu.memory_space<vmem>>) attributes {dimension_semantics = [#tpu.dimension_semantics<parallel>], iteration_bounds = array<i64: 1>, scalar_prefetch = 0 : i64, scratch_operands = 0 : i64, tpu.core_type = #tpu.core_type<tc>, window_params = [{transform_indices = @transform_0, window_bounds = array<i64: 8, 128>}, {pipeline_mode = #tpu.pipeline_mode<synchronous>, transform_indices = @transform_1, window_bounds = array<i64: 14, 128, 128>}, {pipeline_mode = #tpu.pipeline_mode<synchronous>, transform_indices = @transform_2, window_bounds = array<i64: 14, 1, 128>}, {transform_indices = @transform_3, window_bounds = array<i64: 8, 128>}]} {
    %c0 = arith.constant 0 : index
    %c0_0 = arith.constant 0 : index
    %0 = vector.load %arg1[%c0, %c0_0] : memref<8x128xf32, #tpu.memory_space<vmem>>, vector<8x128xf32>
    %c0_1 = arith.constant 0 : index
    %c0_2 = arith.constant 0 : index
    %c0_3 = arith.constant 0 : index
    %1 = vector.load %arg2[%c0_1, %c0_2, %c0_3] : memref<14x128x128xf32, #tpu.memory_space<vmem>>, vector<1x128x128xf32>
    %2 = vector.shape_cast %1 : vector<1x128x128xf32> to vector<128x128xf32>
    %c0_4 = arith.constant 0 : index
    %c0_5 = arith.constant 0 : index
    %c0_6 = arith.constant 0 : index
    %3 = vector.load %arg3[%c0_4, %c0_5, %c0_6] : memref<14x1x128xf32, #tpu.memory_space<vmem>>, vector<1x1x128xf32>
    %4 = vector.shape_cast %3 : vector<1x1x128xf32> to vector<1x128xf32>
    %cst = arith.constant dense<0.000000e+00> : vector<8x128xf32>
    %5 = tpu.matmul %0, %2, %cst {dimension_numbers = #tpu.dot_dimension_numbers<[1], [0], [0], [1], [0, 0, 1, 1], [], []>} : vector<8x128xf32>, vector<128x128xf32>, vector<8x128xf32> -> vector<8x128xf32>
    %6 = vector.broadcast %4 : vector<1x128xf32> to vector<8x128xf32>
    %7 = arith.addf %5, %6 : vector<8x128xf32>
    %cst_7 = arith.constant 0.000000e+00 : f32
    %8 = vector.broadcast %cst_7 : f32 to vector<8x128xf32>
    %9 = arith.maximumf %7, %8 : vector<8x128xf32>
    %c1 = arith.constant 1 : index
    %c0_8 = arith.constant 0 : index
    %c0_9 = arith.constant 0 : index
    %10 = vector.load %arg2[%c1, %c0_8, %c0_9] : memref<14x128x128xf32, #tpu.memory_space<vmem>>, vector<1x128x128xf32>
    %11 = vector.shape_cast %10 : vector<1x128x128xf32> to vector<128x128xf32>
    %c1_10 = arith.constant 1 : index
    %c0_11 = arith.constant 0 : index
    %c0_12 = arith.constant 0 : index
    %12 = vector.load %arg3[%c1_10, %c0_11, %c0_12] : memref<14x1x128xf32, #tpu.memory_space<vmem>>, vector<1x1x128xf32>
    %13 = vector.shape_cast %12 : vector<1x1x128xf32> to vector<1x128xf32>
    %cst_13 = arith.constant dense<0.000000e+00> : vector<8x128xf32>
    %14 = tpu.matmul %9, %11, %cst_13 {dimension_numbers = #tpu.dot_dimension_numbers<[1], [0], [0], [1], [0, 0, 1, 1], [], []>} : vector<8x128xf32>, vector<128x128xf32>, vector<8x128xf32> -> vector<8x128xf32>
    %15 = vector.broadcast %13 : vector<1x128xf32> to vector<8x128xf32>
    %16 = arith.addf %14, %15 : vector<8x128xf32>
    %cst_14 = arith.constant 0.000000e+00 : f32
    %17 = vector.broadcast %cst_14 : f32 to vector<8x128xf32>
    %18 = arith.maximumf %16, %17 : vector<8x128xf32>
    %c2 = arith.constant 2 : index
    %c0_15 = arith.constant 0 : index
    %c0_16 = arith.constant 0 : index
    %19 = vector.load %arg2[%c2, %c0_15, %c0_16] : memref<14x128x128xf32, #tpu.memory_space<vmem>>, vector<1x128x128xf32>
    %20 = vector.shape_cast %19 : vector<1x128x128xf32> to vector<128x128xf32>
    %c2_17 = arith.constant 2 : index
    %c0_18 = arith.constant 0 : index
    %c0_19 = arith.constant 0 : index
    %21 = vector.load %arg3[%c2_17, %c0_18, %c0_19] : memref<14x1x128xf32, #tpu.memory_space<vmem>>, vector<1x1x128xf32>
    %22 = vector.shape_cast %21 : vector<1x1x128xf32> to vector<1x128xf32>
    %cst_20 = arith.constant dense<0.000000e+00> : vector<8x128xf32>
    %23 = tpu.matmul %18, %20, %cst_20 {dimension_numbers = #tpu.dot_dimension_numbers<[1], [0], [0], [1], [0, 0, 1, 1], [], []>} : vector<8x128xf32>, vector<128x128xf32>, vector<8x128xf32> -> vector<8x128xf32>
    %24 = vector.broadcast %22 : vector<1x128xf32> to vector<8x128xf32>
    %25 = arith.addf %23, %24 : vector<8x128xf32>
    %cst_21 = arith.constant 0.000000e+00 : f32
    %26 = vector.broadcast %cst_21 : f32 to vector<8x128xf32>
    %27 = arith.maximumf %25, %26 : vector<8x128xf32>
    %c3 = arith.constant 3 : index
    %c0_22 = arith.constant 0 : index
    %c0_23 = arith.constant 0 : index
    %28 = vector.load %arg2[%c3, %c0_22, %c0_23] : memref<14x128x128xf32, #tpu.memory_space<vmem>>, vector<1x128x128xf32>
    %29 = vector.shape_cast %28 : vector<1x128x128xf32> to vector<128x128xf32>
    %c3_24 = arith.constant 3 : index
    %c0_25 = arith.constant 0 : index
    %c0_26 = arith.constant 0 : index
    %30 = vector.load %arg3[%c3_24, %c0_25, %c0_26] : memref<14x1x128xf32, #tpu.memory_space<vmem>>, vector<1x1x128xf32>
    %31 = vector.shape_cast %30 : vector<1x1x128xf32> to vector<1x128xf32>
    %cst_27 = arith.constant dense<0.000000e+00> : vector<8x128xf32>
    %32 = tpu.matmul %27, %29, %cst_27 {dimension_numbers = #tpu.dot_dimension_numbers<[1], [0], [0], [1], [0, 0, 1, 1], [], []>} : vector<8x128xf32>, vector<128x128xf32>, vector<8x128xf32> -> vector<8x128xf32>
    %33 = vector.broadcast %31 : vector<1x128xf32> to vector<8x128xf32>
    %34 = arith.addf %32, %33 : vector<8x128xf32>
    %cst_28 = arith.constant 0.000000e+00 : f32
    %35 = vector.broadcast %cst_28 : f32 to vector<8x128xf32>
    %36 = arith.maximumf %34, %35 : vector<8x128xf32>
    %c4 = arith.constant 4 : index
    %c0_29 = arith.constant 0 : index
    %c0_30 = arith.constant 0 : index
    %37 = vector.load %arg2[%c4, %c0_29, %c0_30] : memref<14x128x128xf32, #tpu.memory_space<vmem>>, vector<1x128x128xf32>
    %38 = vector.shape_cast %37 : vector<1x128x128xf32> to vector<128x128xf32>
    %c4_31 = arith.constant 4 : index
    %c0_32 = arith.constant 0 : index
    %c0_33 = arith.constant 0 : index
    %39 = vector.load %arg3[%c4_31, %c0_32, %c0_33] : memref<14x1x128xf32, #tpu.memory_space<vmem>>, vector<1x1x128xf32>
    %40 = vector.shape_cast %39 : vector<1x1x128xf32> to vector<1x128xf32>
    %cst_34 = arith.constant dense<0.000000e+00> : vector<8x128xf32>
    %41 = tpu.matmul %36, %38, %cst_34 {dimension_numbers = #tpu.dot_dimension_numbers<[1], [0], [0], [1], [0, 0, 1, 1], [], []>} : vector<8x128xf32>, vector<128x128xf32>, vector<8x128xf32> -> vector<8x128xf32>
    %42 = vector.broadcast %40 : vector<1x128xf32> to vector<8x128xf32>
    %43 = arith.addf %41, %42 : vector<8x128xf32>
    %44 = arith.addf %43, %9 : vector<8x128xf32>
    %cst_35 = arith.constant 0.000000e+00 : f32
    %45 = vector.broadcast %cst_35 : f32 to vector<8x128xf32>
    %46 = arith.maximumf %44, %45 : vector<8x128xf32>
    %c5 = arith.constant 5 : index
    %c0_36 = arith.constant 0 : index
    %c0_37 = arith.constant 0 : index
    %47 = vector.load %arg2[%c5, %c0_36, %c0_37] : memref<14x128x128xf32, #tpu.memory_space<vmem>>, vector<1x128x128xf32>
    %48 = vector.shape_cast %47 : vector<1x128x128xf32> to vector<128x128xf32>
    %c5_38 = arith.constant 5 : index
    %c0_39 = arith.constant 0 : index
    %c0_40 = arith.constant 0 : index
    %49 = vector.load %arg3[%c5_38, %c0_39, %c0_40] : memref<14x1x128xf32, #tpu.memory_space<vmem>>, vector<1x1x128xf32>
    %50 = vector.shape_cast %49 : vector<1x1x128xf32> to vector<1x128xf32>
    %cst_41 = arith.constant dense<0.000000e+00> : vector<8x128xf32>
    %51 = tpu.matmul %46, %48, %cst_41 {dimension_numbers = #tpu.dot_dimension_numbers<[1], [0], [0], [1], [0, 0, 1, 1], [], []>} : vector<8x128xf32>, vector<128x128xf32>, vector<8x128xf32> -> vector<8x128xf32>
    %52 = vector.broadcast %50 : vector<1x128xf32> to vector<8x128xf32>
    %53 = arith.addf %51, %52 : vector<8x128xf32>
    %cst_42 = arith.constant 0.000000e+00 : f32
    %54 = vector.broadcast %cst_42 : f32 to vector<8x128xf32>
    %55 = arith.maximumf %53, %54 : vector<8x128xf32>
    %c6 = arith.constant 6 : index
    %c0_43 = arith.constant 0 : index
    %c0_44 = arith.constant 0 : index
    %56 = vector.load %arg2[%c6, %c0_43, %c0_44] : memref<14x128x128xf32, #tpu.memory_space<vmem>>, vector<1x128x128xf32>
    %57 = vector.shape_cast %56 : vector<1x128x128xf32> to vector<128x128xf32>
    %c6_45 = arith.constant 6 : index
    %c0_46 = arith.constant 0 : index
    %c0_47 = arith.constant 0 : index
    %58 = vector.load %arg3[%c6_45, %c0_46, %c0_47] : memref<14x1x128xf32, #tpu.memory_space<vmem>>, vector<1x1x128xf32>
    %59 = vector.shape_cast %58 : vector<1x1x128xf32> to vector<1x128xf32>
    %cst_48 = arith.constant dense<0.000000e+00> : vector<8x128xf32>
    %60 = tpu.matmul %55, %57, %cst_48 {dimension_numbers = #tpu.dot_dimension_numbers<[1], [0], [0], [1], [0, 0, 1, 1], [], []>} : vector<8x128xf32>, vector<128x128xf32>, vector<8x128xf32> -> vector<8x128xf32>
    %61 = vector.broadcast %59 : vector<1x128xf32> to vector<8x128xf32>
    %62 = arith.addf %60, %61 : vector<8x128xf32>
    %cst_49 = arith.constant 0.000000e+00 : f32
    %63 = vector.broadcast %cst_49 : f32 to vector<8x128xf32>
    %64 = arith.maximumf %62, %63 : vector<8x128xf32>
    %c7 = arith.constant 7 : index
    %c0_50 = arith.constant 0 : index
    %c0_51 = arith.constant 0 : index
    %65 = vector.load %arg2[%c7, %c0_50, %c0_51] : memref<14x128x128xf32, #tpu.memory_space<vmem>>, vector<1x128x128xf32>
    %66 = vector.shape_cast %65 : vector<1x128x128xf32> to vector<128x128xf32>
    %c7_52 = arith.constant 7 : index
    %c0_53 = arith.constant 0 : index
    %c0_54 = arith.constant 0 : index
    %67 = vector.load %arg3[%c7_52, %c0_53, %c0_54] : memref<14x1x128xf32, #tpu.memory_space<vmem>>, vector<1x1x128xf32>
    %68 = vector.shape_cast %67 : vector<1x1x128xf32> to vector<1x128xf32>
    %cst_55 = arith.constant dense<0.000000e+00> : vector<8x128xf32>
    %69 = tpu.matmul %64, %66, %cst_55 {dimension_numbers = #tpu.dot_dimension_numbers<[1], [0], [0], [1], [0, 0, 1, 1], [], []>} : vector<8x128xf32>, vector<128x128xf32>, vector<8x128xf32> -> vector<8x128xf32>
    %70 = vector.broadcast %68 : vector<1x128xf32> to vector<8x128xf32>
    %71 = arith.addf %69, %70 : vector<8x128xf32>
    %cst_56 = arith.constant 0.000000e+00 : f32
    %72 = vector.broadcast %cst_56 : f32 to vector<8x128xf32>
    %73 = arith.maximumf %71, %72 : vector<8x128xf32>
    %c8 = arith.constant 8 : index
    %c0_57 = arith.constant 0 : index
    %c0_58 = arith.constant 0 : index
    %74 = vector.load %arg2[%c8, %c0_57, %c0_58] : memref<14x128x128xf32, #tpu.memory_space<vmem>>, vector<1x128x128xf32>
    %75 = vector.shape_cast %74 : vector<1x128x128xf32> to vector<128x128xf32>
    %c8_59 = arith.constant 8 : index
    %c0_60 = arith.constant 0 : index
    %c0_61 = arith.constant 0 : index
    %76 = vector.load %arg3[%c8_59, %c0_60, %c0_61] : memref<14x1x128xf32, #tpu.memory_space<vmem>>, vector<1x1x128xf32>
    %77 = vector.shape_cast %76 : vector<1x1x128xf32> to vector<1x128xf32>
    %cst_62 = arith.constant dense<0.000000e+00> : vector<8x128xf32>
    %78 = tpu.matmul %73, %75, %cst_62 {dimension_numbers = #tpu.dot_dimension_numbers<[1], [0], [0], [1], [0, 0, 1, 1], [], []>} : vector<8x128xf32>, vector<128x128xf32>, vector<8x128xf32> -> vector<8x128xf32>
    %79 = vector.broadcast %77 : vector<1x128xf32> to vector<8x128xf32>
    %80 = arith.addf %78, %79 : vector<8x128xf32>
    %81 = arith.addf %80, %46 : vector<8x128xf32>
    %cst_63 = arith.constant 0.000000e+00 : f32
    %82 = vector.broadcast %cst_63 : f32 to vector<8x128xf32>
    %83 = arith.maximumf %81, %82 : vector<8x128xf32>
    %c9 = arith.constant 9 : index
    %c0_64 = arith.constant 0 : index
    %c0_65 = arith.constant 0 : index
    %84 = vector.load %arg2[%c9, %c0_64, %c0_65] : memref<14x128x128xf32, #tpu.memory_space<vmem>>, vector<1x128x128xf32>
    %85 = vector.shape_cast %84 : vector<1x128x128xf32> to vector<128x128xf32>
    %c9_66 = arith.constant 9 : index
    %c0_67 = arith.constant 0 : index
    %c0_68 = arith.constant 0 : index
    %86 = vector.load %arg3[%c9_66, %c0_67, %c0_68] : memref<14x1x128xf32, #tpu.memory_space<vmem>>, vector<1x1x128xf32>
    %87 = vector.shape_cast %86 : vector<1x1x128xf32> to vector<1x128xf32>
    %cst_69 = arith.constant dense<0.000000e+00> : vector<8x128xf32>
    %88 = tpu.matmul %83, %85, %cst_69 {dimension_numbers = #tpu.dot_dimension_numbers<[1], [0], [0], [1], [0, 0, 1, 1], [], []>} : vector<8x128xf32>, vector<128x128xf32>, vector<8x128xf32> -> vector<8x128xf32>
    %89 = vector.broadcast %87 : vector<1x128xf32> to vector<8x128xf32>
    %90 = arith.addf %88, %89 : vector<8x128xf32>
    %cst_70 = arith.constant 0.000000e+00 : f32
    %91 = vector.broadcast %cst_70 : f32 to vector<8x128xf32>
    %92 = arith.maximumf %90, %91 : vector<8x128xf32>
    %c10 = arith.constant 10 : index
    %c0_71 = arith.constant 0 : index
    %c0_72 = arith.constant 0 : index
    %93 = vector.load %arg2[%c10, %c0_71, %c0_72] : memref<14x128x128xf32, #tpu.memory_space<vmem>>, vector<1x128x128xf32>
    %94 = vector.shape_cast %93 : vector<1x128x128xf32> to vector<128x128xf32>
    %c10_73 = arith.constant 10 : index
    %c0_74 = arith.constant 0 : index
    %c0_75 = arith.constant 0 : index
    %95 = vector.load %arg3[%c10_73, %c0_74, %c0_75] : memref<14x1x128xf32, #tpu.memory_space<vmem>>, vector<1x1x128xf32>
    %96 = vector.shape_cast %95 : vector<1x1x128xf32> to vector<1x128xf32>
    %cst_76 = arith.constant dense<0.000000e+00> : vector<8x128xf32>
    %97 = tpu.matmul %92, %94, %cst_76 {dimension_numbers = #tpu.dot_dimension_numbers<[1], [0], [0], [1], [0, 0, 1, 1], [], []>} : vector<8x128xf32>, vector<128x128xf32>, vector<8x128xf32> -> vector<8x128xf32>
    %98 = vector.broadcast %96 : vector<1x128xf32> to vector<8x128xf32>
    %99 = arith.addf %97, %98 : vector<8x128xf32>
    %cst_77 = arith.constant 0.000000e+00 : f32
    %100 = vector.broadcast %cst_77 : f32 to vector<8x128xf32>
    %101 = arith.maximumf %99, %100 : vector<8x128xf32>
    %c11 = arith.constant 11 : index
    %c0_78 = arith.constant 0 : index
    %c0_79 = arith.constant 0 : index
    %102 = vector.load %arg2[%c11, %c0_78, %c0_79] : memref<14x128x128xf32, #tpu.memory_space<vmem>>, vector<1x128x128xf32>
    %103 = vector.shape_cast %102 : vector<1x128x128xf32> to vector<128x128xf32>
    %c11_80 = arith.constant 11 : index
    %c0_81 = arith.constant 0 : index
    %c0_82 = arith.constant 0 : index
    %104 = vector.load %arg3[%c11_80, %c0_81, %c0_82] : memref<14x1x128xf32, #tpu.memory_space<vmem>>, vector<1x1x128xf32>
    %105 = vector.shape_cast %104 : vector<1x1x128xf32> to vector<1x128xf32>
    %cst_83 = arith.constant dense<0.000000e+00> : vector<8x128xf32>
    %106 = tpu.matmul %101, %103, %cst_83 {dimension_numbers = #tpu.dot_dimension_numbers<[1], [0], [0], [1], [0, 0, 1, 1], [], []>} : vector<8x128xf32>, vector<128x128xf32>, vector<8x128xf32> -> vector<8x128xf32>
    %107 = vector.broadcast %105 : vector<1x128xf32> to vector<8x128xf32>
    %108 = arith.addf %106, %107 : vector<8x128xf32>
    %cst_84 = arith.constant 0.000000e+00 : f32
    %109 = vector.broadcast %cst_84 : f32 to vector<8x128xf32>
    %110 = arith.maximumf %108, %109 : vector<8x128xf32>
    %c12 = arith.constant 12 : index
    %c0_85 = arith.constant 0 : index
    %c0_86 = arith.constant 0 : index
    %111 = vector.load %arg2[%c12, %c0_85, %c0_86] : memref<14x128x128xf32, #tpu.memory_space<vmem>>, vector<1x128x128xf32>
    %112 = vector.shape_cast %111 : vector<1x128x128xf32> to vector<128x128xf32>
    %c12_87 = arith.constant 12 : index
    %c0_88 = arith.constant 0 : index
    %c0_89 = arith.constant 0 : index
    %113 = vector.load %arg3[%c12_87, %c0_88, %c0_89] : memref<14x1x128xf32, #tpu.memory_space<vmem>>, vector<1x1x128xf32>
    %114 = vector.shape_cast %113 : vector<1x1x128xf32> to vector<1x128xf32>
    %cst_90 = arith.constant dense<0.000000e+00> : vector<8x128xf32>
    %115 = tpu.matmul %110, %112, %cst_90 {dimension_numbers = #tpu.dot_dimension_numbers<[1], [0], [0], [1], [0, 0, 1, 1], [], []>} : vector<8x128xf32>, vector<128x128xf32>, vector<8x128xf32> -> vector<8x128xf32>
    %116 = vector.broadcast %114 : vector<1x128xf32> to vector<8x128xf32>
    %117 = arith.addf %115, %116 : vector<8x128xf32>
    %118 = arith.addf %117, %83 : vector<8x128xf32>
    %cst_91 = arith.constant 0.000000e+00 : f32
    %119 = vector.broadcast %cst_91 : f32 to vector<8x128xf32>
    %120 = arith.maximumf %118, %119 : vector<8x128xf32>
    %c13 = arith.constant 13 : index
    %c0_92 = arith.constant 0 : index
    %c0_93 = arith.constant 0 : index
    %121 = vector.load %arg2[%c13, %c0_92, %c0_93] : memref<14x128x128xf32, #tpu.memory_space<vmem>>, vector<1x128x128xf32>
    %122 = vector.shape_cast %121 : vector<1x128x128xf32> to vector<128x128xf32>
    %c13_94 = arith.constant 13 : index
    %c0_95 = arith.constant 0 : index
    %c0_96 = arith.constant 0 : index
    %123 = vector.load %arg3[%c13_94, %c0_95, %c0_96] : memref<14x1x128xf32, #tpu.memory_space<vmem>>, vector<1x1x128xf32>
    %124 = vector.shape_cast %123 : vector<1x1x128xf32> to vector<1x128xf32>
    %cst_97 = arith.constant dense<0.000000e+00> : vector<8x128xf32>
    %125 = tpu.matmul %120, %122, %cst_97 {dimension_numbers = #tpu.dot_dimension_numbers<[1], [0], [0], [1], [0, 0, 1, 1], [], []>} : vector<8x128xf32>, vector<128x128xf32>, vector<8x128xf32> -> vector<8x128xf32>
    %126 = vector.broadcast %124 : vector<1x128xf32> to vector<8x128xf32>
    %127 = arith.addf %125, %126 : vector<8x128xf32>
    %c0_98 = arith.constant 0 : index
    %c0_99 = arith.constant 0 : index
    %128 = vector.load %arg4[%c0_98, %c0_99] : memref<8x128xf32, #tpu.memory_space<vmem>>, vector<8x128xf32>
    tpu.vector_store %arg4[%c0_98, %c0_99], %127 {strides = array<i32>} : memref<8x128xf32, #tpu.memory_space<vmem>>, vector<8x128xf32>,
    return
  }
  func.func @transform_0(%arg0: i32) -> (i32, i32) {
    %c0_i32 = arith.constant 0 : i32
    %c0_i32_0 = arith.constant 0 : i32
    return %arg0, %c0_i32 : i32, i32
  }
  func.func @transform_1(%arg0: i32) -> (i32, i32, i32) {
    %c0_i32 = arith.constant 0 : i32
    %c0_i32_0 = arith.constant 0 : i32
    %c0_i32_1 = arith.constant 0 : i32
    %c0_i32_2 = arith.constant 0 : i32
    return %c0_i32, %c0_i32_0, %c0_i32_1 : i32, i32, i32
  }
  func.func @transform_2(%arg0: i32) -> (i32, i32, i32) {
    %c0_i32 = arith.constant 0 : i32
    %c0_i32_0 = arith.constant 0 : i32
    %c0_i32_1 = arith.constant 0 : i32
    %c0_i32_2 = arith.constant 0 : i32
    return %c0_i32, %c0_i32_0, %c0_i32_1 : i32, i32, i32
  }
  func.func @transform_3(%arg0: i32) -> (i32, i32) {
    %c0_i32 = arith.constant 0 : i32
    %c0_i32_0 = arith.constant 0 : i32
    return %arg0, %c0_i32 : i32, i32
  }
}

</mosaic_0001>

<llo_original>
// kernel: tpu_custom_call.1
$region0: #{tpu_custom_call.1}
  #allocation0 [shape = 'u32[]', space=smem, size = 0x4, offset = 0x4, fixed_abs, tag = 'smem constant byte address 0x4 - core index']
  #allocation1 [shape = 'u32[144,128]{1,0:T(1,128)}', space=vmem, size = 0x12000, scoped, tag = 'internal scratch']
  %s0 = inlined_call_operand.hbm [shape: f32[8,128], index: 0, kind: input, shape index: {}]
  %s1 = inlined_call_operand.hbm [shape: f32[14,128,128], index: 1, kind: input, shape index: {}]
  %s2 = inlined_call_operand.hbm [shape: f32[14,1,128], index: 2, kind: input, shape index: {}]
  %s3 = inlined_call_operand.hbm [shape: f32[8,128], index: 3, kind: output, shape index: {}]
  %s4 = sld [smem:[#allocation0]]
  $region34: #{tpu_custom_call.1} parent=0
    _
  %s6 = ssub.s32 1, %s4
  %s7 = scalar_select 0, %s6, %s4
  $region1: #{tpu_custom_call.1} parent=0
    #allocation2 [shape = 'u8[4096]{0}', space=vmem, size = 0x1000, scoped, tag = 'input window, operand 0, single buffered']
    #allocation3 [shape = 's32[1]{0}', space=sflag, size = 0x4, scoped, tag = 'scoped memory for tpu_custom_call.1']
    #allocation4 [shape = 's32[1]{0}', space=sflag, size = 0x4, scoped, tag = 'scoped memory for tpu_custom_call.1']
    #allocation5 [shape = 'u8[917504]{0}', space=vmem, size = 0xe0000, scoped, tag = 'input window, operand 1, single buffered']
    #allocation6 [shape = 's32[1]{0}', space=sflag, size = 0x4, scoped, tag = 'scoped memory for tpu_custom_call.1']
    #allocation7 [shape = 'u8[7168]{0}', space=vmem, size = 0x1c00, scoped, tag = 'input window, operand 2, single buffered']
    #allocation8 [shape = 'u8[4096]{0}', space=vmem, size = 0x1000, scoped, tag = 'output window, operand 0, single buffered']
    %8 = vsyncpa [#allocation3], 0
    %9 = vsyncpa [#allocation6], 0
    %10 = vsyncpa [#allocation4], 0
    // Predicated region
    $region2: #{tpu_custom_call.1} parent=1 // pred_check
      _
    $region3: #{tpu_custom_call.1} parent=1 // pred_check_branch
      %12 = sbr.rel (0) target = $region5
    $region4: #{tpu_custom_call.1} parent=1 // pred_region
      %s14 = ssub.s32 128, 128
      %15 = vsyncadd [#allocation3], %s14
      %s17 = sshll.u32 [#allocation2], 4
      %s18 = int_to_ptr.vmem [resolvable:$true] %s17
      %20 = dma.hbm_to_vmem [thread:$0]  %s0, 128, %s18, [#allocation3]
    $region5: #{tpu_custom_call.1} parent=1 // pred_fallthru
      _
    // Predicated region
    $region6: #{tpu_custom_call.1} parent=1 // pred_check
      _
    $region7: #{tpu_custom_call.1} parent=1 // pred_check_branch
      %22 = sbr.rel (0) target = $region9
    $region8: #{tpu_custom_call.1} parent=1 // pred_region
      %s24 = ssub.s32 28672, 28672
      %25 = vsyncadd [#allocation6], %s24
      %s26 = sshll.u32 [#allocation5], 4
      %s27 = int_to_ptr.vmem [resolvable:$true] %s26
      %32 = dma.hbm_to_vmem [thread:$0]  %s1, 28672, %s27, [#allocation6], 128, 128, 8
    $region9: #{tpu_custom_call.1} parent=1 // pred_fallthru
      _
    // Predicated region
    $region10: #{tpu_custom_call.1} parent=1 // pred_check
      _
    $region11: #{tpu_custom_call.1} parent=1 // pred_check_branch
      %34 = sbr.rel (0) target = $region13
    $region12: #{tpu_custom_call.1} parent=1 // pred_region
      %s36 = ssub.s32 224, 224
      %37 = vsyncadd [#allocation6], %s36
      %s38 = sshll.u32 [#allocation7], 4
      %s39 = int_to_ptr.vmem [resolvable:$true] %s38
      %44 = dma.hbm_to_vmem [thread:$0]  %s2, 224, %s39, [#allocation6], 16, 16, 1
    $region13: #{tpu_custom_call.1} parent=1 // pred_fallthru
      _
    // Predicated region
    $region14: #{tpu_custom_call.1} parent=1 // pred_check
      _
    $region15: #{tpu_custom_call.1} parent=1 // pred_check_branch
      %46 = sbr.rel (0) target = $region17
    $region16: #{tpu_custom_call.1} parent=1 // pred_region
      %47 = dma.done [#allocation3], 128
    $region17: #{tpu_custom_call.1} parent=1 // pred_fallthru
      _
    // Predicated region
    $region18: #{tpu_custom_call.1} parent=1 // pred_check
      _
    $region19: #{tpu_custom_call.1} parent=1 // pred_check_branch
      %49 = sbr.rel (0) target = $region21
    $region20: #{tpu_custom_call.1} parent=1 // pred_region
      %50 = dma.done [#allocation6], 28672
    $region21: #{tpu_custom_call.1} parent=1 // pred_fallthru
      _
    // Predicated region
    $region22: #{tpu_custom_call.1} parent=1 // pred_check
      _
    $region23: #{tpu_custom_call.1} parent=1 // pred_check_branch
      %52 = sbr.rel (0) target = $region25
    $region24: #{tpu_custom_call.1} parent=1 // pred_region
      %53 = dma.done [#allocation6], 224
    $region25: #{tpu_custom_call.1} parent=1 // pred_fallthru
      _
    %v54 = vld [vmem:[#allocation2] sm:$0xff]
    %v55 = vld [vmem:[#allocation5] sm:$0xff]
    %v56 = vld [vmem:[#allocation5 + $0x8] sm:$0xff]
    %v57 = vld [vmem:[#allocation5 + $0x10] sm:$0xff]
    %v58 = vld [vmem:[#allocation5 + $0x18] sm:$0xff]
    %v59 = vld [vmem:[#allocation5 + $0x20] sm:$0xff]
    %v60 = vld [vmem:[#allocation5 + $0x28] sm:$0xff]
    %v61 = vld [vmem:[#allocation5 + $0x30] sm:$0xff]
    %v62 = vld [vmem:[#allocation5 + $0x38] sm:$0xff]
    %v63 = vld [vmem:[#allocation5 + $0x40] sm:$0xff]
    %v64 = vld [vmem:[#allocation5 + $0x48] sm:$0xff]
    %v65 = vld [vmem:[#allocation5 + $0x50] sm:$0xff]
    %v66 = vld [vmem:[#allocation5 + $0x58] sm:$0xff]
    %v67 = vld [vmem:[#allocation5 + $0x60] sm:$0xff]
    %v68 = vld [vmem:[#allocation5 + $0x68] sm:$0xff]
    %v69 = vld [vmem:[#allocation5 + $0x70] sm:$0xff]
    %v70 = vld [vmem:[#allocation5 + $0x78] sm:$0xff]
    %v71 = vld [vmem:[#allocation7] sm:$0x1]
    %v73 = vlaneseq
    %v74 = vshrl.u32 %v73, 7
    %v75 = vsub.s32 0, %v74
    %v76 = vrot.slane %v71, %v75
    %78 = vmatprep.subr.mxu0 0.0
    %79 = vmatpush1.msra.mxu0 %v55
    %80 = vmatprep.subr.mxu0 0.0
    %81 = vmatpush1.msra.mxu0 %v56
    %82 = vmatprep.subr.mxu0 0.0
    %83 = vmatpush1.msra.mxu0 %v57
    %84 = vmatprep.subr.mxu0 0.0
    %85 = vmatpush1.msra.mxu0 %v58
    %86 = vmatprep.subr.mxu0 0.0
    %87 = vmatpush1.msra.mxu0 %v59
    %88 = vmatprep.subr.mxu0 0.0
    %89 = vmatpush1.msra.mxu0 %v60
    %90 = vmatprep.subr.mxu0 0.0
    %91 = vmatpush1.msra.mxu0 %v61
    %92 = vmatprep.subr.mxu0 0.0
    %93 = vmatpush1.msra.mxu0 %v62
    %94 = vmatprep.subr.mxu0 0.0
    %95 = vmatpush1.msra.mxu0 %v63
    %96 = vmatprep.subr.mxu0 0.0
    %97 = vmatpush1.msra.mxu0 %v64
    %98 = vmatprep.subr.mxu0 0.0
    %99 = vmatpush1.msra.mxu0 %v65
    %100 = vmatprep.subr.mxu0 0.0
    %101 = vmatpush1.msra.mxu0 %v66
    %102 = vmatprep.subr.mxu0 0.0
    %103 = vmatpush1.msra.mxu0 %v67
    %104 = vmatprep.subr.mxu0 0.0
    %105 = vmatpush1.msra.mxu0 %v68
    %106 = vmatprep.subr.mxu0 0.0
    %107 = vmatpush1.msra.mxu0 %v69
    %108 = vmatprep.subr.mxu0 0.0
    %109 = vmatpush1.msra.mxu0 %v70
    %110 = vmatprep.subr.mxu0 0.0
    %111 = vmatpush1.msra.mxu0 0.0
    %112 = vmatprep.subr.mxu0 0.0
    %113 = vmatpush1.msra.mxu0 0.0
    %114 = vmatprep.subr.mxu0 0.0
    %115 = vmatpush1.msra.mxu0 0.0
    %116 = vmatprep.subr.mxu0 0.0
    %117 = vmatpush1.msra.mxu0 0.0
    %118 = vmatprep.subr.mxu0 0.0
    %119 = vmatpush1.msra.mxu0 0.0
    %120 = vmatprep.subr.mxu0 0.0
    %121 = vmatpush1.msra.mxu0 0.0
    %122 = vmatprep.subr.mxu0 0.0
    %123 = vmatpush1.msra.mxu0 0.0
    %124 = vmatprep.subr.mxu0 0.0
    %125 = vmatpush1.msra.mxu0 0.0
    %126 = vmatprep.subr.mxu0 0.0
    %127 = vmatpush1.msra.mxu0 0.0
    %128 = vmatprep.subr.mxu0 0.0
    %129 = vmatpush1.msra.mxu0 0.0
    %130 = vmatprep.subr.mxu0 0.0
    %131 = vmatpush1.msra.mxu0 0.0
    %132 = vmatprep.subr.mxu0 0.0
    %133 = vmatpush1.msra.mxu0 0.0
    %134 = vmatprep.subr.mxu0 0.0
    %135 = vmatpush1.msra.mxu0 0.0
    %136 = vmatprep.subr.mxu0 0.0
    %137 = vmatpush1.msra.mxu0 0.0
    %138 = vmatprep.subr.mxu0 0.0
    %139 = vmatpush1.msra.mxu0 0.0
    %140 = vmatprep.subr.mxu0 0.0
    %141 = vmatpush1.msra.mxu0 0.0
    %142 = vmatprep.mubr.f32.mxu0 0.0
    %143 = vmatmul.mubr.f32.gmra.mrb[0].mxu0 %v54
    %v144 = vpop.f32.mrb[0].mxu0
    %v145 = vadd.f32 %v76, %v144
    %v146 = vpop.f32.mrb[0].mxu0
    %147 = vdwg.mxu0
    %v148 = vmax.f32 %v145, 0.0
    %s149 = scalar_lea.vmem [#allocation5], 128
    %v150 = vld [vmem:[%s149] sm:$0xff]
    %v151 = vld [vmem:[%s149 + $0x8] sm:$0xff]
    %v152 = vld [vmem:[%s149 + $0x10] sm:$0xff]
    %v153 = vld [vmem:[%s149 + $0x18] sm:$0xff]
    %v154 = vld [vmem:[%s149 + $0x20] sm:$0xff]
    %v155 = vld [vmem:[%s149 + $0x28] sm:$0xff]
    %v156 = vld [vmem:[%s149 + $0x30] sm:$0xff]
    %v157 = vld [vmem:[%s149 + $0x38] sm:$0xff]
    %v158 = vld [vmem:[%s149 + $0x40] sm:$0xff]
    %v159 = vld [vmem:[%s149 + $0x48] sm:$0xff]
    %v160 = vld [vmem:[%s149 + $0x50] sm:$0xff]
    %v161 = vld [vmem:[%s149 + $0x58] sm:$0xff]
    %v162 = vld [vmem:[%s149 + $0x60] sm:$0xff]
    %v163 = vld [vmem:[%s149 + $0x68] sm:$0xff]
    %v164 = vld [vmem:[%s149 + $0x70] sm:$0xff]
    %v165 = vld [vmem:[%s149 + $0x78] sm:$0xff]
    %s166 = scalar_lea.vmem [#allocation7], 1
    %v167 = vld [vmem:[%s166] sm:$0x1]
    %v169 = vlaneseq
    %v170 = vshrl.u32 %v169, 7
    %v171 = vsub.s32 0, %v170
    %v172 = vrot.slane %v167, %v171
    %174 = vmatprep.subr.mxu0 0.0
    %175 = vmatpush1.msra.mxu0 %v150
    %176 = vmatprep.subr.mxu0 0.0
    %177 = vmatpush1.msra.mxu0 %v151
    %178 = vmatprep.subr.mxu0 0.0
    %179 = vmatpush1.msra.mxu0 %v152
    %180 = vmatprep.subr.mxu0 0.0
    %181 = vmatpush1.msra.mxu0 %v153
    %182 = vmatprep.subr.mxu0 0.0
    %183 = vmatpush1.msra.mxu0 %v154
    %184 = vmatprep.subr.mxu0 0.0
    %185 = vmatpush1.msra.mxu0 %v155
    %186 = vmatprep.subr.mxu0 0.0
    %187 = vmatpush1.msra.mxu0 %v156
    %188 = vmatprep.subr.mxu0 0.0
    %189 = vmatpush1.msra.mxu0 %v157
    %190 = vmatprep.subr.mxu0 0.0
    %191 = vmatpush1.msra.mxu0 %v158
    %192 = vmatprep.subr.mxu0 0.0
    %193 = vmatpush1.msra.mxu0 %v159
    %194 = vmatprep.subr.mxu0 0.0
    %195 = vmatpush1.msra.mxu0 %v160
    %196 = vmatprep.subr.mxu0 0.0
    %197 = vmatpush1.msra.mxu0 %v161
    %198 = vmatprep.subr.mxu0 0.0
    %199 = vmatpush1.msra.mxu0 %v162
    %200 = vmatprep.subr.mxu0 0.0
    %201 = vmatpush1.msra.mxu0 %v163
    %202 = vmatprep.subr.mxu0 0.0
    %203 = vmatpush1.msra.mxu0 %v164
    %204 = vmatprep.subr.mxu0 0.0
    %205 = vmatpush1.msra.mxu0 %v165
    %206 = vmatprep.subr.mxu0 0.0
    %207 = vmatpush1.msra.mxu0 0.0
    %208 = vmatprep.subr.mxu0 0.0
    %209 = vmatpush1.msra.mxu0 0.0
    %210 = vmatprep.subr.mxu0 0.0
    %211 = vmatpush1.msra.mxu0 0.0
    %212 = vmatprep.subr.mxu0 0.0
    %213 = vmatpush1.msra.mxu0 0.0
    %214 = vmatprep.subr.mxu0 0.0
    %215 = vmatpush1.msra.mxu0 0.0
    %216 = vmatprep.subr.mxu0 0.0
    %217 = vmatpush1.msra.mxu0 0.0
    %218 = vmatprep.subr.mxu0 0.0
    %219 = vmatpush1.msra.mxu0 0.0
    %220 = vmatprep.subr.mxu0 0.0
    %221 = vmatpush1.msra.mxu0 0.0
    %222 = vmatprep.subr.mxu0 0.0
    %223 = vmatpush1.msra.mxu0 0.0
    %224 = vmatprep.subr.mxu0 0.0
    %225 = vmatpush1.msra.mxu0 0.0
    %226 = vmatprep.subr.mxu0 0.0
    %227 = vmatpush1.msra.mxu0 0.0
    %228 = vmatprep.subr.mxu0 0.0
    %229 = vmatpush1.msra.mxu0 0.0
    %230 = vmatprep.subr.mxu0 0.0
    %231 = vmatpush1.msra.mxu0 0.0
    %232 = vmatprep.subr.mxu0 0.0
    %233 = vmatpush1.msra.mxu0 0.0
    %234 = vmatprep.subr.mxu0 0.0
    %235 = vmatpush1.msra.mxu0 0.0
    %236 = vmatprep.subr.mxu0 0.0
    %237 = vmatpush1.msra.mxu0 0.0
    %238 = vmatprep.mubr.f32.mxu0 0.0
    %239 = vmatmul.mubr.f32.gmra.mrb[0].mxu0 %v148
    %v240 = vpop.f32.mrb[0].mxu0
    %v241 = vadd.f32 %v172, %v240
    %v242 = vpop.f32.mrb[0].mxu0
    %243 = vdwg.mxu0
    %v244 = vmax.f32 %v241, 0.0
    %s245 = scalar_lea.vmem [#allocation5], 256
    %v246 = vld [vmem:[%s245] sm:$0xff]
    %v247 = vld [vmem:[%s245 + $0x8] sm:$0xff]
    %v248 = vld [vmem:[%s245 + $0x10] sm:$0xff]
    %v249 = vld [vmem:[%s245 + $0x18] sm:$0xff]
    %v250 = vld [vmem:[%s245 + $0x20] sm:$0xff]
    %v251 = vld [vmem:[%s245 + $0x28] sm:$0xff]
    %v252 = vld [vmem:[%s245 + $0x30] sm:$0xff]
    %v253 = vld [vmem:[%s245 + $0x38] sm:$0xff]
    %v254 = vld [vmem:[%s245 + $0x40] sm:$0xff]
    %v255 = vld [vmem:[%s245 + $0x48] sm:$0xff]
    %v256 = vld [vmem:[%s245 + $0x50] sm:$0xff]
    %v257 = vld [vmem:[%s245 + $0x58] sm:$0xff]
    %v258 = vld [vmem:[%s245 + $0x60] sm:$0xff]
    %v259 = vld [vmem:[%s245 + $0x68] sm:$0xff]
    %v260 = vld [vmem:[%s245 + $0x70] sm:$0xff]
    %v261 = vld [vmem:[%s245 + $0x78] sm:$0xff]
    %s262 = scalar_lea.vmem [#allocation7], 2
    %v263 = vld [vmem:[%s262] sm:$0x1]
    %v265 = vlaneseq
    %v266 = vshrl.u32 %v265, 7
    %v267 = vsub.s32 0, %v266
    %v268 = vrot.slane %v263, %v267
    %270 = vmatprep.subr.mxu0 0.0
    %271 = vmatpush1.msra.mxu0 %v246
    %272 = vmatprep.subr.mxu0 0.0
    %273 = vmatpush1.msra.mxu0 %v247
    %274 = vmatprep.subr.mxu0 0.0
    %275 = vmatpush1.msra.mxu0 %v248
    %276 = vmatprep.subr.mxu0 0.0
    %277 = vmatpush1.msra.mxu0 %v249
    %278 = vmatprep.subr.mxu0 0.0
    %279 = vmatpush1.msra.mxu0 %v250
    %280 = vmatprep.subr.mxu0 0.0
    %281 = vmatpush1.msra.mxu0 %v251
    %282 = vmatprep.subr.mxu0 0.0
    %283 = vmatpush1.msra.mxu0 %v252
    %284 = vmatprep.subr.mxu0 0.0
    %285 = vmatpush1.msra.mxu0 %v253
    %286 = vmatprep.subr.mxu0 0.0
    %287 = vmatpush1.msra.mxu0 %v254
    %288 = vmatprep.subr.mxu0 0.0
    %289 = vmatpush1.msra.mxu0 %v255
    %290 = vmatprep.subr.mxu0 0.0
    %291 = vmatpush1.msra.mxu0 %v256
    %292 = vmatprep.subr.mxu0 0.0
    %293 = vmatpush1.msra.mxu0 %v257
    %294 = vmatprep.subr.mxu0 0.0
    %295 = vmatpush1.msra.mxu0 %v258
    %296 = vmatprep.subr.mxu0 0.0
    %297 = vmatpush1.msra.mxu0 %v259
    %298 = vmatprep.subr.mxu0 0.0
    %299 = vmatpush1.msra.mxu0 %v260
    %300 = vmatprep.subr.mxu0 0.0
    %301 = vmatpush1.msra.mxu0 %v261
    %302 = vmatprep.subr.mxu0 0.0
    %303 = vmatpush1.msra.mxu0 0.0
    %304 = vmatprep.subr.mxu0 0.0
    %305 = vmatpush1.msra.mxu0 0.0
    %306 = vmatprep.subr.mxu0 0.0
    %307 = vmatpush1.msra.mxu0 0.0
    %308 = vmatprep.subr.mxu0 0.0
    %309 = vmatpush1.msra.mxu0 0.0
    %310 = vmatprep.subr.mxu0 0.0
    %311 = vmatpush1.msra.mxu0 0.0
    %312 = vmatprep.subr.mxu0 0.0
    %313 = vmatpush1.msra.mxu0 0.0
    %314 = vmatprep.subr.mxu0 0.0
    %315 = vmatpush1.msra.mxu0 0.0
    %316 = vmatprep.subr.mxu0 0.0
    %317 = vmatpush1.msra.mxu0 0.0
    %318 = vmatprep.subr.mxu0 0.0
    %319 = vmatpush1.msra.mxu0 0.0
    %320 = vmatprep.subr.mxu0 0.0
    %321 = vmatpush1.msra.mxu0 0.0
    %322 = vmatprep.subr.mxu0 0.0
    %323 = vmatpush1.msra.mxu0 0.0
    %324 = vmatprep.subr.mxu0 0.0
    %325 = vmatpush1.msra.mxu0 0.0
    %326 = vmatprep.subr.mxu0 0.0
    %327 = vmatpush1.msra.mxu0 0.0
    %328 = vmatprep.subr.mxu0 0.0
    %329 = vmatpush1.msra.mxu0 0.0
    %330 = vmatprep.subr.mxu0 0.0
    %331 = vmatpush1.msra.mxu0 0.0
    %332 = vmatprep.subr.mxu0 0.0
    %333 = vmatpush1.msra.mxu0 0.0
    %334 = vmatprep.mubr.f32.mxu0 0.0
    %335 = vmatmul.mubr.f32.gmra.mrb[0].mxu0 %v244
    %v336 = vpop.f32.mrb[0].mxu0
    %v337 = vadd.f32 %v268, %v336
    %v338 = vpop.f32.mrb[0].mxu0
    %339 = vdwg.mxu0
    %v340 = vmax.f32 %v337, 0.0
    %s341 = scalar_lea.vmem [#allocation5], 384
    %v342 = vld [vmem:[%s341] sm:$0xff]
    %v343 = vld [vmem:[%s341 + $0x8] sm:$0xff]
    %v344 = vld [vmem:[%s341 + $0x10] sm:$0xff]
    %v345 = vld [vmem:[%s341 + $0x18] sm:$0xff]
    %v346 = vld [vmem:[%s341 + $0x20] sm:$0xff]
    %v347 = vld [vmem:[%s341 + $0x28] sm:$0xff]
    %v348 = vld [vmem:[%s341 + $0x30] sm:$0xff]
    %v349 = vld [vmem:[%s341 + $0x38] sm:$0xff]
    %v350 = vld [vmem:[%s341 + $0x40] sm:$0xff]
    %v351 = vld [vmem:[%s341 + $0x48] sm:$0xff]
    %v352 = vld [vmem:[%s341 + $0x50] sm:$0xff]
    %v353 = vld [vmem:[%s341 + $0x58] sm:$0xff]
    %v354 = vld [vmem:[%s341 + $0x60] sm:$0xff]
    %v355 = vld [vmem:[%s341 + $0x68] sm:$0xff]
    %v356 = vld [vmem:[%s341 + $0x70] sm:$0xff]
    %v357 = vld [vmem:[%s341 + $0x78] sm:$0xff]
    %s358 = scalar_lea.vmem [#allocation7], 3
    %v359 = vld [vmem:[%s358] sm:$0x1]
    %v361 = vlaneseq
    %v362 = vshrl.u32 %v361, 7
    %v363 = vsub.s32 0, %v362
    %v364 = vrot.slane %v359, %v363
    %366 = vmatprep.subr.mxu0 0.0
    %367 = vmatpush1.msra.mxu0 %v342
    %368 = vmatprep.subr.mxu0 0.0
    %369 = vmatpush1.msra.mxu0 %v343
    %370 = vmatprep.subr.mxu0 0.0
    %371 = vmatpush1.msra.mxu0 %v344
    %372 = vmatprep.subr.mxu0 0.0
    %373 = vmatpush1.msra.mxu0 %v345
    %374 = vmatprep.subr.mxu0 0.0
    %375 = vmatpush1.msra.mxu0 %v346
    %376 = vmatprep.subr.mxu0 0.0
    %377 = vmatpush1.msra.mxu0 %v347
    %378 = vmatprep.subr.mxu0 0.0
    %379 = vmatpush1.msra.mxu0 %v348
    %380 = vmatprep.subr.mxu0 0.0
    %381 = vmatpush1.msra.mxu0 %v349
    %382 = vmatprep.subr.mxu0 0.0
    %383 = vmatpush1.msra.mxu0 %v350
    %384 = vmatprep.subr.mxu0 0.0
    %385 = vmatpush1.msra.mxu0 %v351
    %386 = vmatprep.subr.mxu0 0.0
    %387 = vmatpush1.msra.mxu0 %v352
    %388 = vmatprep.subr.mxu0 0.0
    %389 = vmatpush1.msra.mxu0 %v353
    %390 = vmatprep.subr.mxu0 0.0
    %391 = vmatpush1.msra.mxu0 %v354
    %392 = vmatprep.subr.mxu0 0.0
    %393 = vmatpush1.msra.mxu0 %v355
    %394 = vmatprep.subr.mxu0 0.0
    %395 = vmatpush1.msra.mxu0 %v356
    %396 = vmatprep.subr.mxu0 0.0
    %397 = vmatpush1.msra.mxu0 %v357
    %398 = vmatprep.subr.mxu0 0.0
    %399 = vmatpush1.msra.mxu0 0.0
    %400 = vmatprep.subr.mxu0 0.0
    %401 = vmatpush1.msra.mxu0 0.0
    %402 = vmatprep.subr.mxu0 0.0
    %403 = vmatpush1.msra.mxu0 0.0
    %404 = vmatprep.subr.mxu0 0.0
    %405 = vmatpush1.msra.mxu0 0.0
    %406 = vmatprep.subr.mxu0 0.0
    %407 = vmatpush1.msra.mxu0 0.0
    %408 = vmatprep.subr.mxu0 0.0
    %409 = vmatpush1.msra.mxu0 0.0
    %410 = vmatprep.subr.mxu0 0.0
    %411 = vmatpush1.msra.mxu0 0.0
    %412 = vmatprep.subr.mxu0 0.0
    %413 = vmatpush1.msra.mxu0 0.0
    %414 = vmatprep.subr.mxu0 0.0
    %415 = vmatpush1.msra.mxu0 0.0
    %416 = vmatprep.subr.mxu0 0.0
    %417 = vmatpush1.msra.mxu0 0.0
    %418 = vmatprep.subr.mxu0 0.0
    %419 = vmatpush1.msra.mxu0 0.0
    %420 = vmatprep.subr.mxu0 0.0
    %421 = vmatpush1.msra.mxu0 0.0
    %422 = vmatprep.subr.mxu0 0.0
    %423 = vmatpush1.msra.mxu0 0.0
    %424 = vmatprep.subr.mxu0 0.0
    %425 = vmatpush1.msra.mxu0 0.0
    %426 = vmatprep.subr.mxu0 0.0
    %427 = vmatpush1.msra.mxu0 0.0
    %428 = vmatprep.subr.mxu0 0.0
    %429 = vmatpush1.msra.mxu0 0.0
    %430 = vmatprep.mubr.f32.mxu0 0.0
    %431 = vmatmul.mubr.f32.gmra.mrb[0].mxu0 %v340
    %v432 = vpop.f32.mrb[0].mxu0
    %v433 = vadd.f32 %v364, %v432
    %v434 = vpop.f32.mrb[0].mxu0
    %435 = vdwg.mxu0
    %v436 = vmax.f32 %v433, 0.0
    %s437 = scalar_lea.vmem [#allocation5], 512
    %v438 = vld [vmem:[%s437] sm:$0xff]
    %v439 = vld [vmem:[%s437 + $0x8] sm:$0xff]
    %v440 = vld [vmem:[%s437 + $0x10] sm:$0xff]
    %v441 = vld [vmem:[%s437 + $0x18] sm:$0xff]
    %v442 = vld [vmem:[%s437 + $0x20] sm:$0xff]
    %v443 = vld [vmem:[%s437 + $0x28] sm:$0xff]
    %v444 = vld [vmem:[%s437 + $0x30] sm:$0xff]
    %v445 = vld [vmem:[%s437 + $0x38] sm:$0xff]
    %v446 = vld [vmem:[%s437 + $0x40] sm:$0xff]
    %v447 = vld [vmem:[%s437 + $0x48] sm:$0xff]
    %v448 = vld [vmem:[%s437 + $0x50] sm:$0xff]
    %v449 = vld [vmem:[%s437 + $0x58] sm:$0xff]
    %v450 = vld [vmem:[%s437 + $0x60] sm:$0xff]
    %v451 = vld [vmem:[%s437 + $0x68] sm:$0xff]
    %v452 = vld [vmem:[%s437 + $0x70] sm:$0xff]
    %v453 = vld [vmem:[%s437 + $0x78] sm:$0xff]
    %s454 = scalar_lea.vmem [#allocation7], 4
    %v455 = vld [vmem:[%s454] sm:$0x1]
    %v457 = vlaneseq
    %v458 = vshrl.u32 %v457, 7
    %v459 = vsub.s32 0, %v458
    %v460 = vrot.slane %v455, %v459
    %462 = vmatprep.subr.mxu0 0.0
    %463 = vmatpush1.msra.mxu0 %v438
    %464 = vmatprep.subr.mxu0 0.0
    %465 = vmatpush1.msra.mxu0 %v439
    %466 = vmatprep.subr.mxu0 0.0
    %467 = vmatpush1.msra.mxu0 %v440
    %468 = vmatprep.subr.mxu0 0.0
    %469 = vmatpush1.msra.mxu0 %v441
    %470 = vmatprep.subr.mxu0 0.0
    %471 = vmatpush1.msra.mxu0 %v442
    %472 = vmatprep.subr.mxu0 0.0
    %473 = vmatpush1.msra.mxu0 %v443
    %474 = vmatprep.subr.mxu0 0.0
    %475 = vmatpush1.msra.mxu0 %v444
    %476 = vmatprep.subr.mxu0 0.0
    %477 = vmatpush1.msra.mxu0 %v445
    %478 = vmatprep.subr.mxu0 0.0
    %479 = vmatpush1.msra.mxu0 %v446
    %480 = vmatprep.subr.mxu0 0.0
    %481 = vmatpush1.msra.mxu0 %v447
    %482 = vmatprep.subr.mxu0 0.0
    %483 = vmatpush1.msra.mxu0 %v448
    %484 = vmatprep.subr.mxu0 0.0
    %485 = vmatpush1.msra.mxu0 %v449
    %486 = vmatprep.subr.mxu0 0.0
    %487 = vmatpush1.msra.mxu0 %v450
    %488 = vmatprep.subr.mxu0 0.0
    %489 = vmatpush1.msra.mxu0 %v451
    %490 = vmatprep.subr.mxu0 0.0
    %491 = vmatpush1.msra.mxu0 %v452
    %492 = vmatprep.subr.mxu0 0.0
    %493 = vmatpush1.msra.mxu0 %v453
    %494 = vmatprep.subr.mxu0 0.0
    %495 = vmatpush1.msra.mxu0 0.0
    %496 = vmatprep.subr.mxu0 0.0
    %497 = vmatpush1.msra.mxu0 0.0
    %498 = vmatprep.subr.mxu0 0.0
    %499 = vmatpush1.msra.mxu0 0.0
    %500 = vmatprep.subr.mxu0 0.0
    %501 = vmatpush1.msra.mxu0 0.0
    %502 = vmatprep.subr.mxu0 0.0
    %503 = vmatpush1.msra.mxu0 0.0
    %504 = vmatprep.subr.mxu0 0.0
    %505 = vmatpush1.msra.mxu0 0.0
    %506 = vmatprep.subr.mxu0 0.0
    %507 = vmatpush1.msra.mxu0 0.0
    %508 = vmatprep.subr.mxu0 0.0
    %509 = vmatpush1.msra.mxu0 0.0
    %510 = vmatprep.subr.mxu0 0.0
    %511 = vmatpush1.msra.mxu0 0.0
    %512 = vmatprep.subr.mxu0 0.0
    %513 = vmatpush1.msra.mxu0 0.0
    %514 = vmatprep.subr.mxu0 0.0
    %515 = vmatpush1.msra.mxu0 0.0
    %516 = vmatprep.subr.mxu0 0.0
    %517 = vmatpush1.msra.mxu0 0.0
    %518 = vmatprep.subr.mxu0 0.0
    %519 = vmatpush1.msra.mxu0 0.0
    %520 = vmatprep.subr.mxu0 0.0
    %521 = vmatpush1.msra.mxu0 0.0
    %522 = vmatprep.subr.mxu0 0.0
    %523 = vmatpush1.msra.mxu0 0.0
    %524 = vmatprep.subr.mxu0 0.0
    %525 = vmatpush1.msra.mxu0 0.0
    %526 = vmatprep.mubr.f32.mxu0 0.0
    %527 = vmatmul.mubr.f32.gmra.mrb[0].mxu0 %v436
    %v528 = vpop.f32.mrb[0].mxu0
    %v529 = vadd.f32 %v460, %v528
    %v530 = vpop.f32.mrb[0].mxu0
    %531 = vdwg.mxu0
    %v532 = vadd.f32 %v529, %v148
    %v533 = vmax.f32 %v532, 0.0
    %s534 = scalar_lea.vmem [#allocation5], 640
    %v535 = vld [vmem:[%s534] sm:$0xff]
    %v536 = vld [vmem:[%s534 + $0x8] sm:$0xff]
    %v537 = vld [vmem:[%s534 + $0x10] sm:$0xff]
    %v538 = vld [vmem:[%s534 + $0x18] sm:$0xff]
    %v539 = vld [vmem:[%s534 + $0x20] sm:$0xff]
    %v540 = vld [vmem:[%s534 + $0x28] sm:$0xff]
    %v541 = vld [vmem:[%s534 + $0x30] sm:$0xff]
    %v542 = vld [vmem:[%s534 + $0x38] sm:$0xff]
    %v543 = vld [vmem:[%s534 + $0x40] sm:$0xff]
    %v544 = vld [vmem:[%s534 + $0x48] sm:$0xff]
    %v545 = vld [vmem:[%s534 + $0x50] sm:$0xff]
    %v546 = vld [vmem:[%s534 + $0x58] sm:$0xff]
    %v547 = vld [vmem:[%s534 + $0x60] sm:$0xff]
    %v548 = vld [vmem:[%s534 + $0x68] sm:$0xff]
    %v549 = vld [vmem:[%s534 + $0x70] sm:$0xff]
    %v550 = vld [vmem:[%s534 + $0x78] sm:$0xff]
    %s551 = scalar_lea.vmem [#allocation7], 5
    %v552 = vld [vmem:[%s551] sm:$0x1]
    %v554 = vlaneseq
    %v555 = vshrl.u32 %v554, 7
    %v556 = vsub.s32 0, %v555
    %v557 = vrot.slane %v552, %v556
    %559 = vmatprep.subr.mxu0 0.0
    %560 = vmatpush1.msra.mxu0 %v535
    %561 = vmatprep.subr.mxu0 0.0
    %562 = vmatpush1.msra.mxu0 %v536
    %563 = vmatprep.subr.mxu0 0.0
    %564 = vmatpush1.msra.mxu0 %v537
    %565 = vmatprep.subr.mxu0 0.0
    %566 = vmatpush1.msra.mxu0 %v538
    %567 = vmatprep.subr.mxu0 0.0
    %568 = vmatpush1.msra.mxu0 %v539
    %569 = vmatprep.subr.mxu0 0.0
    %570 = vmatpush1.msra.mxu0 %v540
    %571 = vmatprep.subr.mxu0 0.0
    %572 = vmatpush1.msra.mxu0 %v541
    %573 = vmatprep.subr.mxu0 0.0
    %574 = vmatpush1.msra.mxu0 %v542
    %575 = vmatprep.subr.mxu0 0.0
    %576 = vmatpush1.msra.mxu0 %v543
    %577 = vmatprep.subr.mxu0 0.0
    %578 = vmatpush1.msra.mxu0 %v544
    %579 = vmatprep.subr.mxu0 0.0
    %580 = vmatpush1.msra.mxu0 %v545
    %581 = vmatprep.subr.mxu0 0.0
    %582 = vmatpush1.msra.mxu0 %v546
    %583 = vmatprep.subr.mxu0 0.0
    %584 = vmatpush1.msra.mxu0 %v547
    %585 = vmatprep.subr.mxu0 0.0
    %586 = vmatpush1.msra.mxu0 %v548
    %587 = vmatprep.subr.mxu0 0.0
    %588 = vmatpush1.msra.mxu0 %v549
    %589 = vmatprep.subr.mxu0 0.0
    %590 = vmatpush1.msra.mxu0 %v550
    %591 = vmatprep.subr.mxu0 0.0
    %592 = vmatpush1.msra.mxu0 0.0
    %593 = vmatprep.subr.mxu0 0.0
    %594 = vmatpush1.msra.mxu0 0.0
    %595 = vmatprep.subr.mxu0 0.0
    %596 = vmatpush1.msra.mxu0 0.0
    %597 = vmatprep.subr.mxu0 0.0
    %598 = vmatpush1.msra.mxu0 0.0
    %599 = vmatprep.subr.mxu0 0.0
    %600 = vmatpush1.msra.mxu0 0.0
    %601 = vmatprep.subr.mxu0 0.0
    %602 = vmatpush1.msra.mxu0 0.0
    %603 = vmatprep.subr.mxu0 0.0
    %604 = vmatpush1.msra.mxu0 0.0
    %605 = vmatprep.subr.mxu0 0.0
    %606 = vmatpush1.msra.mxu0 0.0
    %607 = vmatprep.subr.mxu0 0.0
    %608 = vmatpush1.msra.mxu0 0.0
    %609 = vmatprep.subr.mxu0 0.0
    %610 = vmatpush1.msra.mxu0 0.0
    %611 = vmatprep.subr.mxu0 0.0
    %612 = vmatpush1.msra.mxu0 0.0
    %613 = vmatprep.subr.mxu0 0.0
    %614 = vmatpush1.msra.mxu0 0.0
    %615 = vmatprep.subr.mxu0 0.0
    %616 = vmatpush1.msra.mxu0 0.0
    %617 = vmatprep.subr.mxu0 0.0
    %618 = vmatpush1.msra.mxu0 0.0
    %619 = vmatprep.subr.mxu0 0.0
    %620 = vmatpush1.msra.mxu0 0.0
    %621 = vmatprep.subr.mxu0 0.0
    %622 = vmatpush1.msra.mxu0 0.0
    %623 = vmatprep.mubr.f32.mxu0 0.0
    %624 = vmatmul.mubr.f32.gmra.mrb[0].mxu0 %v533
    %v625 = vpop.f32.mrb[0].mxu0
    %v626 = vadd.f32 %v557, %v625
    %v627 = vpop.f32.mrb[0].mxu0
    %628 = vdwg.mxu0
    %v629 = vmax.f32 %v626, 0.0
    %s630 = scalar_lea.vmem [#allocation5], 768
    %v631 = vld [vmem:[%s630] sm:$0xff]
    %v632 = vld [vmem:[%s630 + $0x8] sm:$0xff]
    %v633 = vld [vmem:[%s630 + $0x10] sm:$0xff]
    %v634 = vld [vmem:[%s630 + $0x18] sm:$0xff]
    %v635 = vld [vmem:[%s630 + $0x20] sm:$0xff]
    %v636 = vld [vmem:[%s630 + $0x28] sm:$0xff]
    %v637 = vld [vmem:[%s630 + $0x30] sm:$0xff]
    %v638 = vld [vmem:[%s630 + $0x38] sm:$0xff]
    %v639 = vld [vmem:[%s630 + $0x40] sm:$0xff]
    %v640 = vld [vmem:[%s630 + $0x48] sm:$0xff]
    %v641 = vld [vmem:[%s630 + $0x50] sm:$0xff]
    %v642 = vld [vmem:[%s630 + $0x58] sm:$0xff]
    %v643 = vld [vmem:[%s630 + $0x60] sm:$0xff]
    %v644 = vld [vmem:[%s630 + $0x68] sm:$0xff]
    %v645 = vld [vmem:[%s630 + $0x70] sm:$0xff]
    %v646 = vld [vmem:[%s630 + $0x78] sm:$0xff]
    %s647 = scalar_lea.vmem [#allocation7], 6
    %v648 = vld [vmem:[%s647] sm:$0x1]
    %v650 = vlaneseq
    %v651 = vshrl.u32 %v650, 7
    %v652 = vsub.s32 0, %v651
    %v653 = vrot.slane %v648, %v652
    %655 = vmatprep.subr.mxu0 0.0
    %656 = vmatpush1.msra.mxu0 %v631
    %657 = vmatprep.subr.mxu0 0.0
    %658 = vmatpush1.msra.mxu0 %v632
    %659 = vmatprep.subr.mxu0 0.0
    %660 = vmatpush1.msra.mxu0 %v633
    %661 = vmatprep.subr.mxu0 0.0
    %662 = vmatpush1.msra.mxu0 %v634
    %663 = vmatprep.subr.mxu0 0.0
    %664 = vmatpush1.msra.mxu0 %v635
    %665 = vmatprep.subr.mxu0 0.0
    %666 = vmatpush1.msra.mxu0 %v636
    %667 = vmatprep.subr.mxu0 0.0
    %668 = vmatpush1.msra.mxu0 %v637
    %669 = vmatprep.subr.mxu0 0.0
    %670 = vmatpush1.msra.mxu0 %v638
    %671 = vmatprep.subr.mxu0 0.0
    %672 = vmatpush1.msra.mxu0 %v639
    %673 = vmatprep.subr.mxu0 0.0
    %674 = vmatpush1.msra.mxu0 %v640
    %675 = vmatprep.subr.mxu0 0.0
    %676 = vmatpush1.msra.mxu0 %v641
    %677 = vmatprep.subr.mxu0 0.0
    %678 = vmatpush1.msra.mxu0 %v642
    %679 = vmatprep.subr.mxu0 0.0
    %680 = vmatpush1.msra.mxu0 %v643
    %681 = vmatprep.subr.mxu0 0.0
    %682 = vmatpush1.msra.mxu0 %v644
    %683 = vmatprep.subr.mxu0 0.0
    %684 = vmatpush1.msra.mxu0 %v645
    %685 = vmatprep.subr.mxu0 0.0
    %686 = vmatpush1.msra.mxu0 %v646
    %687 = vmatprep.subr.mxu0 0.0
    %688 = vmatpush1.msra.mxu0 0.0
    %689 = vmatprep.subr.mxu0 0.0
    %690 = vmatpush1.msra.mxu0 0.0
    %691 = vmatprep.subr.mxu0 0.0
    %692 = vmatpush1.msra.mxu0 0.0
    %693 = vmatprep.subr.mxu0 0.0
    %694 = vmatpush1.msra.mxu0 0.0
    %695 = vmatprep.subr.mxu0 0.0
    %696 = vmatpush1.msra.mxu0 0.0
    %697 = vmatprep.subr.mxu0 0.0
    %698 = vmatpush1.msra.mxu0 0.0
    %699 = vmatprep.subr.mxu0 0.0
    %700 = vmatpush1.msra.mxu0 0.0
    %701 = vmatprep.subr.mxu0 0.0
    %702 = vmatpush1.msra.mxu0 0.0
    %703 = vmatprep.subr.mxu0 0.0
    %704 = vmatpush1.msra.mxu0 0.0
    %705 = vmatprep.subr.mxu0 0.0
    %706 = vmatpush1.msra.mxu0 0.0
    %707 = vmatprep.subr.mxu0 0.0
    %708 = vmatpush1.msra.mxu0 0.0
    %709 = vmatprep.subr.mxu0 0.0
    %710 = vmatpush1.msra.mxu0 0.0
    %711 = vmatprep.subr.mxu0 0.0
    %712 = vmatpush1.msra.mxu0 0.0
    %713 = vmatprep.subr.mxu0 0.0
    %714 = vmatpush1.msra.mxu0 0.0
    %715 = vmatprep.subr.mxu0 0.0
    %716 = vmatpush1.msra.mxu0 0.0
    %717 = vmatprep.subr.mxu0 0.0
    %718 = vmatpush1.msra.mxu0 0.0
    %719 = vmatprep.mubr.f32.mxu0 0.0
    %720 = vmatmul.mubr.f32.gmra.mrb[0].mxu0 %v629
    %v721 = vpop.f32.mrb[0].mxu0
    %v722 = vadd.f32 %v653, %v721
    %v723 = vpop.f32.mrb[0].mxu0
    %724 = vdwg.mxu0
    %v725 = vmax.f32 %v722, 0.0
    %s726 = scalar_lea.vmem [#allocation5], 896
    %v727 = vld [vmem:[%s726] sm:$0xff]
    %v728 = vld [vmem:[%s726 + $0x8] sm:$0xff]
    %v729 = vld [vmem:[%s726 + $0x10] sm:$0xff]
    %v730 = vld [vmem:[%s726 + $0x18] sm:$0xff]
    %v731 = vld [vmem:[%s726 + $0x20] sm:$0xff]
    %v732 = vld [vmem:[%s726 + $0x28] sm:$0xff]
    %v733 = vld [vmem:[%s726 + $0x30] sm:$0xff]
    %v734 = vld [vmem:[%s726 + $0x38] sm:$0xff]
    %v735 = vld [vmem:[%s726 + $0x40] sm:$0xff]
    %v736 = vld [vmem:[%s726 + $0x48] sm:$0xff]
    %v737 = vld [vmem:[%s726 + $0x50] sm:$0xff]
    %v738 = vld [vmem:[%s726 + $0x58] sm:$0xff]
    %v739 = vld [vmem:[%s726 + $0x60] sm:$0xff]
    %v740 = vld [vmem:[%s726 + $0x68] sm:$0xff]
    %v741 = vld [vmem:[%s726 + $0x70] sm:$0xff]
    %v742 = vld [vmem:[%s726 + $0x78] sm:$0xff]
    %s743 = scalar_lea.vmem [#allocation7], 7
    %v744 = vld [vmem:[%s743] sm:$0x1]
    %v746 = vlaneseq
    %v747 = vshrl.u32 %v746, 7
    %v748 = vsub.s32 0, %v747
    %v749 = vrot.slane %v744, %v748
    %751 = vmatprep.subr.mxu0 0.0
    %752 = vmatpush1.msra.mxu0 %v727
    %753 = vmatprep.subr.mxu0 0.0
    %754 = vmatpush1.msra.mxu0 %v728
    %755 = vmatprep.subr.mxu0 0.0
    %756 = vmatpush1.msra.mxu0 %v729
    %757 = vmatprep.subr.mxu0 0.0
    %758 = vmatpush1.msra.mxu0 %v730
    %759 = vmatprep.subr.mxu0 0.0
    %760 = vmatpush1.msra.mxu0 %v731
    %761 = vmatprep.subr.mxu0 0.0
    %762 = vmatpush1.msra.mxu0 %v732
    %763 = vmatprep.subr.mxu0 0.0
    %764 = vmatpush1.msra.mxu0 %v733
    %765 = vmatprep.subr.mxu0 0.0
    %766 = vmatpush1.msra.mxu0 %v734
    %767 = vmatprep.subr.mxu0 0.0
    %768 = vmatpush1.msra.mxu0 %v735
    %769 = vmatprep.subr.mxu0 0.0
    %770 = vmatpush1.msra.mxu0 %v736
    %771 = vmatprep.subr.mxu0 0.0
    %772 = vmatpush1.msra.mxu0 %v737
    %773 = vmatprep.subr.mxu0 0.0
    %774 = vmatpush1.msra.mxu0 %v738
    %775 = vmatprep.subr.mxu0 0.0
    %776 = vmatpush1.msra.mxu0 %v739
    %777 = vmatprep.subr.mxu0 0.0
    %778 = vmatpush1.msra.mxu0 %v740
    %779 = vmatprep.subr.mxu0 0.0
    %780 = vmatpush1.msra.mxu0 %v741
    %781 = vmatprep.subr.mxu0 0.0
    %782 = vmatpush1.msra.mxu0 %v742
    %783 = vmatprep.subr.mxu0 0.0
    %784 = vmatpush1.msra.mxu0 0.0
    %785 = vmatprep.subr.mxu0 0.0
    %786 = vmatpush1.msra.mxu0 0.0
    %787 = vmatprep.subr.mxu0 0.0
    %788 = vmatpush1.msra.mxu0 0.0
    %789 = vmatprep.subr.mxu0 0.0
    %790 = vmatpush1.msra.mxu0 0.0
    %791 = vmatprep.subr.mxu0 0.0
    %792 = vmatpush1.msra.mxu0 0.0
    %793 = vmatprep.subr.mxu0 0.0
    %794 = vmatpush1.msra.mxu0 0.0
    %795 = vmatprep.subr.mxu0 0.0
    %796 = vmatpush1.msra.mxu0 0.0
    %797 = vmatprep.subr.mxu0 0.0
    %798 = vmatpush1.msra.mxu0 0.0
    %799 = vmatprep.subr.mxu0 0.0
    %800 = vmatpush1.msra.mxu0 0.0
    %801 = vmatprep.subr.mxu0 0.0
    %802 = vmatpush1.msra.mxu0 0.0
    %803 = vmatprep.subr.mxu0 0.0
    %804 = vmatpush1.msra.mxu0 0.0
    %805 = vmatprep.subr.mxu0 0.0
    %806 = vmatpush1.msra.mxu0 0.0
    %807 = vmatprep.subr.mxu0 0.0
    %808 = vmatpush1.msra.mxu0 0.0
    %809 = vmatprep.subr.mxu0 0.0
    %810 = vmatpush1.msra.mxu0 0.0
    %811 = vmatprep.subr.mxu0 0.0
    %812 = vmatpush1.msra.mxu0 0.0
    %813 = vmatprep.subr.mxu0 0.0
    %814 = vmatpush1.msra.mxu0 0.0
    %815 = vmatprep.mubr.f32.mxu0 0.0
    %816 = vmatmul.mubr.f32.gmra.mrb[0].mxu0 %v725
    %v817 = vpop.f32.mrb[0].mxu0
    %v818 = vadd.f32 %v749, %v817
    %v819 = vpop.f32.mrb[0].mxu0
    %820 = vdwg.mxu0
    %v821 = vmax.f32 %v818, 0.0
    %s822 = scalar_lea.vmem [#allocation5], 1024
    %v823 = vld [vmem:[%s822] sm:$0xff]
    %v824 = vld [vmem:[%s822 + $0x8] sm:$0xff]
    %v825 = vld [vmem:[%s822 + $0x10] sm:$0xff]
    %v826 = vld [vmem:[%s822 + $0x18] sm:$0xff]
    %v827 = vld [vmem:[%s822 + $0x20] sm:$0xff]
    %v828 = vld [vmem:[%s822 + $0x28] sm:$0xff]
    %v829 = vld [vmem:[%s822 + $0x30] sm:$0xff]
    %v830 = vld [vmem:[%s822 + $0x38] sm:$0xff]
    %v831 = vld [vmem:[%s822 + $0x40] sm:$0xff]
    %v832 = vld [vmem:[%s822 + $0x48] sm:$0xff]
    %v833 = vld [vmem:[%s822 + $0x50] sm:$0xff]
    %v834 = vld [vmem:[%s822 + $0x58] sm:$0xff]
    %v835 = vld [vmem:[%s822 + $0x60] sm:$0xff]
    %v836 = vld [vmem:[%s822 + $0x68] sm:$0xff]
    %v837 = vld [vmem:[%s822 + $0x70] sm:$0xff]
    %v838 = vld [vmem:[%s822 + $0x78] sm:$0xff]
    %s839 = scalar_lea.vmem [#allocation7], 8
    %v840 = vld [vmem:[%s839] sm:$0x1]
    %v842 = vlaneseq
    %v843 = vshrl.u32 %v842, 7
    %v844 = vsub.s32 0, %v843
    %v845 = vrot.slane %v840, %v844
    %847 = vmatprep.subr.mxu0 0.0
    %848 = vmatpush1.msra.mxu0 %v823
    %849 = vmatprep.subr.mxu0 0.0
    %850 = vmatpush1.msra.mxu0 %v824
    %851 = vmatprep.subr.mxu0 0.0
    %852 = vmatpush1.msra.mxu0 %v825
    %853 = vmatprep.subr.mxu0 0.0
    %854 = vmatpush1.msra.mxu0 %v826
    %855 = vmatprep.subr.mxu0 0.0
    %856 = vmatpush1.msra.mxu0 %v827
    %857 = vmatprep.subr.mxu0 0.0
    %858 = vmatpush1.msra.mxu0 %v828
    %859 = vmatprep.subr.mxu0 0.0
    %860 = vmatpush1.msra.mxu0 %v829
    %861 = vmatprep.subr.mxu0 0.0
    %862 = vmatpush1.msra.mxu0 %v830
    %863 = vmatprep.subr.mxu0 0.0
    %864 = vmatpush1.msra.mxu0 %v831
    %865 = vmatprep.subr.mxu0 0.0
    %866 = vmatpush1.msra.mxu0 %v832
    %867 = vmatprep.subr.mxu0 0.0
    %868 = vmatpush1.msra.mxu0 %v833
    %869 = vmatprep.subr.mxu0 0.0
    %870 = vmatpush1.msra.mxu0 %v834
    %871 = vmatprep.subr.mxu0 0.0
    %872 = vmatpush1.msra.mxu0 %v835
    %873 = vmatprep.subr.mxu0 0.0
    %874 = vmatpush1.msra.mxu0 %v836
    %875 = vmatprep.subr.mxu0 0.0
    %876 = vmatpush1.msra.mxu0 %v837
    %877 = vmatprep.subr.mxu0 0.0
    %878 = vmatpush1.msra.mxu0 %v838
    %879 = vmatprep.subr.mxu0 0.0
    %880 = vmatpush1.msra.mxu0 0.0
    %881 = vmatprep.subr.mxu0 0.0
    %882 = vmatpush1.msra.mxu0 0.0
    %883 = vmatprep.subr.mxu0 0.0
    %884 = vmatpush1.msra.mxu0 0.0
    %885 = vmatprep.subr.mxu0 0.0
    %886 = vmatpush1.msra.mxu0 0.0
    %887 = vmatprep.subr.mxu0 0.0
    %888 = vmatpush1.msra.mxu0 0.0
    %889 = vmatprep.subr.mxu0 0.0
    %890 = vmatpush1.msra.mxu0 0.0
    %891 = vmatprep.subr.mxu0 0.0
    %892 = vmatpush1.msra.mxu0 0.0
    %893 = vmatprep.subr.mxu0 0.0
    %894 = vmatpush1.msra.mxu0 0.0
    %895 = vmatprep.subr.mxu0 0.0
    %896 = vmatpush1.msra.mxu0 0.0
    %897 = vmatprep.subr.mxu0 0.0
    %898 = vmatpush1.msra.mxu0 0.0
    %899 = vmatprep.subr.mxu0 0.0
    %900 = vmatpush1.msra.mxu0 0.0
    %901 = vmatprep.subr.mxu0 0.0
    %902 = vmatpush1.msra.mxu0 0.0
    %903 = vmatprep.subr.mxu0 0.0
    %904 = vmatpush1.msra.mxu0 0.0
    %905 = vmatprep.subr.mxu0 0.0
    %906 = vmatpush1.msra.mxu0 0.0
    %907 = vmatprep.subr.mxu0 0.0
    %908 = vmatpush1.msra.mxu0 0.0
    %909 = vmatprep.subr.mxu0 0.0
    %910 = vmatpush1.msra.mxu0 0.0
    %911 = vmatprep.mubr.f32.mxu0 0.0
    %912 = vmatmul.mubr.f32.gmra.mrb[0].mxu0 %v821
    %v913 = vpop.f32.mrb[0].mxu0
    %v914 = vadd.f32 %v845, %v913
    %v915 = vpop.f32.mrb[0].mxu0
    %916 = vdwg.mxu0
    %v917 = vadd.f32 %v914, %v533
    %v918 = vmax.f32 %v917, 0.0
    %s919 = scalar_lea.vmem [#allocation5], 1152
    %v920 = vld [vmem:[%s919] sm:$0xff]
    %v921 = vld [vmem:[%s919 + $0x8] sm:$0xff]
    %v922 = vld [vmem:[%s919 + $0x10] sm:$0xff]
    %v923 = vld [vmem:[%s919 + $0x18] sm:$0xff]
    %v924 = vld [vmem:[%s919 + $0x20] sm:$0xff]
    %v925 = vld [vmem:[%s919 + $0x28] sm:$0xff]
    %v926 = vld [vmem:[%s919 + $0x30] sm:$0xff]
    %v927 = vld [vmem:[%s919 + $0x38] sm:$0xff]
    %v928 = vld [vmem:[%s919 + $0x40] sm:$0xff]
    %v929 = vld [vmem:[%s919 + $0x48] sm:$0xff]
    %v930 = vld [vmem:[%s919 + $0x50] sm:$0xff]
    %v931 = vld [vmem:[%s919 + $0x58] sm:$0xff]
    %v932 = vld [vmem:[%s919 + $0x60] sm:$0xff]
    %v933 = vld [vmem:[%s919 + $0x68] sm:$0xff]
    %v934 = vld [vmem:[%s919 + $0x70] sm:$0xff]
    %v935 = vld [vmem:[%s919 + $0x78] sm:$0xff]
    %s936 = scalar_lea.vmem [#allocation7], 9
    %v937 = vld [vmem:[%s936] sm:$0x1]
    %v939 = vlaneseq
    %v940 = vshrl.u32 %v939, 7
    %v941 = vsub.s32 0, %v940
    %v942 = vrot.slane %v937, %v941
    %944 = vmatprep.subr.mxu0 0.0
    %945 = vmatpush1.msra.mxu0 %v920
    %946 = vmatprep.subr.mxu0 0.0
    %947 = vmatpush1.msra.mxu0 %v921
    %948 = vmatprep.subr.mxu0 0.0
    %949 = vmatpush1.msra.mxu0 %v922
    %950 = vmatprep.subr.mxu0 0.0
    %951 = vmatpush1.msra.mxu0 %v923
    %952 = vmatprep.subr.mxu0 0.0
    %953 = vmatpush1.msra.mxu0 %v924
    %954 = vmatprep.subr.mxu0 0.0
    %955 = vmatpush1.msra.mxu0 %v925
    %956 = vmatprep.subr.mxu0 0.0
    %957 = vmatpush1.msra.mxu0 %v926
    %958 = vmatprep.subr.mxu0 0.0
    %959 = vmatpush1.msra.mxu0 %v927
    %960 = vmatprep.subr.mxu0 0.0
    %961 = vmatpush1.msra.mxu0 %v928
    %962 = vmatprep.subr.mxu0 0.0
    %963 = vmatpush1.msra.mxu0 %v929
    %964 = vmatprep.subr.mxu0 0.0
    %965 = vmatpush1.msra.mxu0 %v930
    %966 = vmatprep.subr.mxu0 0.0
    %967 = vmatpush1.msra.mxu0 %v931
    %968 = vmatprep.subr.mxu0 0.0
    %969 = vmatpush1.msra.mxu0 %v932
    %970 = vmatprep.subr.mxu0 0.0
    %971 = vmatpush1.msra.mxu0 %v933
    %972 = vmatprep.subr.mxu0 0.0
    %973 = vmatpush1.msra.mxu0 %v934
    %974 = vmatprep.subr.mxu0 0.0
    %975 = vmatpush1.msra.mxu0 %v935
    %976 = vmatprep.subr.mxu0 0.0
    %977 = vmatpush1.msra.mxu0 0.0
    %978 = vmatprep.subr.mxu0 0.0
    %979 = vmatpush1.msra.mxu0 0.0
    %980 = vmatprep.subr.mxu0 0.0
    %981 = vmatpush1.msra.mxu0 0.0
    %982 = vmatprep.subr.mxu0 0.0
    %983 = vmatpush1.msra.mxu0 0.0
    %984 = vmatprep.subr.mxu0 0.0
    %985 = vmatpush1.msra.mxu0 0.0
    %986 = vmatprep.subr.mxu0 0.0
    %987 = vmatpush1.msra.mxu0 0.0
    %988 = vmatprep.subr.mxu0 0.0
    %989 = vmatpush1.msra.mxu0 0.0
    %990 = vmatprep.subr.mxu0 0.0
    %991 = vmatpush1.msra.mxu0 0.0
    %992 = vmatprep.subr.mxu0 0.0
    %993 = vmatpush1.msra.mxu0 0.0
    %994 = vmatprep.subr.mxu0 0.0
    %995 = vmatpush1.msra.mxu0 0.0
    %996 = vmatprep.subr.mxu0 0.0
    %997 = vmatpush1.msra.mxu0 0.0
    %998 = vmatprep.subr.mxu0 0.0
    %999 = vmatpush1.msra.mxu0 0.0
    %1000 = vmatprep.subr.mxu0 0.0
    %1001 = vmatpush1.msra.mxu0 0.0
    %1002 = vmatprep.subr.mxu0 0.0
    %1003 = vmatpush1.msra.mxu0 0.0
    %1004 = vmatprep.subr.mxu0 0.0
    %1005 = vmatpush1.msra.mxu0 0.0
    %1006 = vmatprep.subr.mxu0 0.0
    %1007 = vmatpush1.msra.mxu0 0.0
    %1008 = vmatprep.mubr.f32.mxu0 0.0
    %1009 = vmatmul.mubr.f32.gmra.mrb[0].mxu0 %v918
    %v1010 = vpop.f32.mrb[0].mxu0
    %v1011 = vadd.f32 %v942, %v1010
    %v1012 = vpop.f32.mrb[0].mxu0
    %1013 = vdwg.mxu0
    %v1014 = vmax.f32 %v1011, 0.0
    %s1015 = scalar_lea.vmem [#allocation5], 1280
    %v1016 = vld [vmem:[%s1015] sm:$0xff]
    %v1017 = vld [vmem:[%s1015 + $0x8] sm:$0xff]
    %v1018 = vld [vmem:[%s1015 + $0x10] sm:$0xff]
    %v1019 = vld [vmem:[%s1015 + $0x18] sm:$0xff]
    %v1020 = vld [vmem:[%s1015 + $0x20] sm:$0xff]
    %v1021 = vld [vmem:[%s1015 + $0x28] sm:$0xff]
    %v1022 = vld [vmem:[%s1015 + $0x30] sm:$0xff]
    %v1023 = vld [vmem:[%s1015 + $0x38] sm:$0xff]
    %v1024 = vld [vmem:[%s1015 + $0x40] sm:$0xff]
    %v1025 = vld [vmem:[%s1015 + $0x48] sm:$0xff]
    %v1026 = vld [vmem:[%s1015 + $0x50] sm:$0xff]
    %v1027 = vld [vmem:[%s1015 + $0x58] sm:$0xff]
    %v1028 = vld [vmem:[%s1015 + $0x60] sm:$0xff]
    %v1029 = vld [vmem:[%s1015 + $0x68] sm:$0xff]
    %v1030 = vld [vmem:[%s1015 + $0x70] sm:$0xff]
    %v1031 = vld [vmem:[%s1015 + $0x78] sm:$0xff]
    %s1032 = scalar_lea.vmem [#allocation7], 10
    %v1033 = vld [vmem:[%s1032] sm:$0x1]
    %v1035 = vlaneseq
    %v1036 = vshrl.u32 %v1035, 7
    %v1037 = vsub.s32 0, %v1036
    %v1038 = vrot.slane %v1033, %v1037
    %1040 = vmatprep.subr.mxu0 0.0
    %1041 = vmatpush1.msra.mxu0 %v1016
    %1042 = vmatprep.subr.mxu0 0.0
    %1043 = vmatpush1.msra.mxu0 %v1017
    %1044 = vmatprep.subr.mxu0 0.0
    %1045 = vmatpush1.msra.mxu0 %v1018
    %1046 = vmatprep.subr.mxu0 0.0
    %1047 = vmatpush1.msra.mxu0 %v1019
    %1048 = vmatprep.subr.mxu0 0.0
    %1049 = vmatpush1.msra.mxu0 %v1020
    %1050 = vmatprep.subr.mxu0 0.0
    %1051 = vmatpush1.msra.mxu0 %v1021
    %1052 = vmatprep.subr.mxu0 0.0
    %1053 = vmatpush1.msra.mxu0 %v1022
    %1054 = vmatprep.subr.mxu0 0.0
    %1055 = vmatpush1.msra.mxu0 %v1023
    %1056 = vmatprep.subr.mxu0 0.0
    %1057 = vmatpush1.msra.mxu0 %v1024
    %1058 = vmatprep.subr.mxu0 0.0
    %1059 = vmatpush1.msra.mxu0 %v1025
    %1060 = vmatprep.subr.mxu0 0.0
    %1061 = vmatpush1.msra.mxu0 %v1026
    %1062 = vmatprep.subr.mxu0 0.0
    %1063 = vmatpush1.msra.mxu0 %v1027
    %1064 = vmatprep.subr.mxu0 0.0
    %1065 = vmatpush1.msra.mxu0 %v1028
    %1066 = vmatprep.subr.mxu0 0.0
    %1067 = vmatpush1.msra.mxu0 %v1029
    %1068 = vmatprep.subr.mxu0 0.0
    %1069 = vmatpush1.msra.mxu0 %v1030
    %1070 = vmatprep.subr.mxu0 0.0
    %1071 = vmatpush1.msra.mxu0 %v1031
    %1072 = vmatprep.subr.mxu0 0.0
    %1073 = vmatpush1.msra.mxu0 0.0
    %1074 = vmatprep.subr.mxu0 0.0
    %1075 = vmatpush1.msra.mxu0 0.0
    %1076 = vmatprep.subr.mxu0 0.0
    %1077 = vmatpush1.msra.mxu0 0.0
    %1078 = vmatprep.subr.mxu0 0.0
    %1079 = vmatpush1.msra.mxu0 0.0
    %1080 = vmatprep.subr.mxu0 0.0
    %1081 = vmatpush1.msra.mxu0 0.0
    %1082 = vmatprep.subr.mxu0 0.0
    %1083 = vmatpush1.msra.mxu0 0.0
    %1084 = vmatprep.subr.mxu0 0.0
    %1085 = vmatpush1.msra.mxu0 0.0
    %1086 = vmatprep.subr.mxu0 0.0
    %1087 = vmatpush1.msra.mxu0 0.0
    %1088 = vmatprep.subr.mxu0 0.0
    %1089 = vmatpush1.msra.mxu0 0.0
    %1090 = vmatprep.subr.mxu0 0.0
    %1091 = vmatpush1.msra.mxu0 0.0
    %1092 = vmatprep.subr.mxu0 0.0
    %1093 = vmatpush1.msra.mxu0 0.0
    %1094 = vmatprep.subr.mxu0 0.0
    %1095 = vmatpush1.msra.mxu0 0.0
    %1096 = vmatprep.subr.mxu0 0.0
    %1097 = vmatpush1.msra.mxu0 0.0
    %1098 = vmatprep.subr.mxu0 0.0
    %1099 = vmatpush1.msra.mxu0 0.0
    %1100 = vmatprep.subr.mxu0 0.0
    %1101 = vmatpush1.msra.mxu0 0.0
    %1102 = vmatprep.subr.mxu0 0.0
    %1103 = vmatpush1.msra.mxu0 0.0
    %1104 = vmatprep.mubr.f32.mxu0 0.0
    %1105 = vmatmul.mubr.f32.gmra.mrb[0].mxu0 %v1014
    %v1106 = vpop.f32.mrb[0].mxu0
    %v1107 = vadd.f32 %v1038, %v1106
    %v1108 = vpop.f32.mrb[0].mxu0
    %1109 = vdwg.mxu0
    %v1110 = vmax.f32 %v1107, 0.0
    %s1111 = scalar_lea.vmem [#allocation5], 1408
    %v1112 = vld [vmem:[%s1111] sm:$0xff]
    %v1113 = vld [vmem:[%s1111 + $0x8] sm:$0xff]
    %v1114 = vld [vmem:[%s1111 + $0x10] sm:$0xff]
    %v1115 = vld [vmem:[%s1111 + $0x18] sm:$0xff]
    %v1116 = vld [vmem:[%s1111 + $0x20] sm:$0xff]
    %v1117 = vld [vmem:[%s1111 + $0x28] sm:$0xff]
    %v1118 = vld [vmem:[%s1111 + $0x30] sm:$0xff]
    %v1119 = vld [vmem:[%s1111 + $0x38] sm:$0xff]
    %v1120 = vld [vmem:[%s1111 + $0x40] sm:$0xff]
    %v1121 = vld [vmem:[%s1111 + $0x48] sm:$0xff]
    %v1122 = vld [vmem:[%s1111 + $0x50] sm:$0xff]
    %v1123 = vld [vmem:[%s1111 + $0x58] sm:$0xff]
    %v1124 = vld [vmem:[%s1111 + $0x60] sm:$0xff]
    %v1125 = vld [vmem:[%s1111 + $0x68] sm:$0xff]
    %v1126 = vld [vmem:[%s1111 + $0x70] sm:$0xff]
    %v1127 = vld [vmem:[%s1111 + $0x78] sm:$0xff]
    %s1128 = scalar_lea.vmem [#allocation7], 11
    %v1129 = vld [vmem:[%s1128] sm:$0x1]
    %v1131 = vlaneseq
    %v1132 = vshrl.u32 %v1131, 7
    %v1133 = vsub.s32 0, %v1132
    %v1134 = vrot.slane %v1129, %v1133
    %1136 = vmatprep.subr.mxu0 0.0
    %1137 = vmatpush1.msra.mxu0 %v1112
    %1138 = vmatprep.subr.mxu0 0.0
    %1139 = vmatpush1.msra.mxu0 %v1113
    %1140 = vmatprep.subr.mxu0 0.0
    %1141 = vmatpush1.msra.mxu0 %v1114
    %1142 = vmatprep.subr.mxu0 0.0
    %1143 = vmatpush1.msra.mxu0 %v1115
    %1144 = vmatprep.subr.mxu0 0.0
    %1145 = vmatpush1.msra.mxu0 %v1116
    %1146 = vmatprep.subr.mxu0 0.0
    %1147 = vmatpush1.msra.mxu0 %v1117
    %1148 = vmatprep.subr.mxu0 0.0
    %1149 = vmatpush1.msra.mxu0 %v1118
    %1150 = vmatprep.subr.mxu0 0.0
    %1151 = vmatpush1.msra.mxu0 %v1119
    %1152 = vmatprep.subr.mxu0 0.0
    %1153 = vmatpush1.msra.mxu0 %v1120
    %1154 = vmatprep.subr.mxu0 0.0
    %1155 = vmatpush1.msra.mxu0 %v1121
    %1156 = vmatprep.subr.mxu0 0.0
    %1157 = vmatpush1.msra.mxu0 %v1122
    %1158 = vmatprep.subr.mxu0 0.0
    %1159 = vmatpush1.msra.mxu0 %v1123
    %1160 = vmatprep.subr.mxu0 0.0
    %1161 = vmatpush1.msra.mxu0 %v1124
    %1162 = vmatprep.subr.mxu0 0.0
    %1163 = vmatpush1.msra.mxu0 %v1125
    %1164 = vmatprep.subr.mxu0 0.0
    %1165 = vmatpush1.msra.mxu0 %v1126
    %1166 = vmatprep.subr.mxu0 0.0
    %1167 = vmatpush1.msra.mxu0 %v1127
    %1168 = vmatprep.subr.mxu0 0.0
    %1169 = vmatpush1.msra.mxu0 0.0
    %1170 = vmatprep.subr.mxu0 0.0
    %1171 = vmatpush1.msra.mxu0 0.0
    %1172 = vmatprep.subr.mxu0 0.0
    %1173 = vmatpush1.msra.mxu0 0.0
    %1174 = vmatprep.subr.mxu0 0.0
    %1175 = vmatpush1.msra.mxu0 0.0
    %1176 = vmatprep.subr.mxu0 0.0
    %1177 = vmatpush1.msra.mxu0 0.0
    %1178 = vmatprep.subr.mxu0 0.0
    %1179 = vmatpush1.msra.mxu0 0.0
    %1180 = vmatprep.subr.mxu0 0.0
    %1181 = vmatpush1.msra.mxu0 0.0
    %1182 = vmatprep.subr.mxu0 0.0
    %1183 = vmatpush1.msra.mxu0 0.0
    %1184 = vmatprep.subr.mxu0 0.0
    %1185 = vmatpush1.msra.mxu0 0.0
    %1186 = vmatprep.subr.mxu0 0.0
    %1187 = vmatpush1.msra.mxu0 0.0
    %1188 = vmatprep.subr.mxu0 0.0
    %1189 = vmatpush1.msra.mxu0 0.0
    %1190 = vmatprep.subr.mxu0 0.0
    %1191 = vmatpush1.msra.mxu0 0.0
    %1192 = vmatprep.subr.mxu0 0.0
    %1193 = vmatpush1.msra.mxu0 0.0
    %1194 = vmatprep.subr.mxu0 0.0
    %1195 = vmatpush1.msra.mxu0 0.0
    %1196 = vmatprep.subr.mxu0 0.0
    %1197 = vmatpush1.msra.mxu0 0.0
    %1198 = vmatprep.subr.mxu0 0.0
    %1199 = vmatpush1.msra.mxu0 0.0
    %1200 = vmatprep.mubr.f32.mxu0 0.0
    %1201 = vmatmul.mubr.f32.gmra.mrb[0].mxu0 %v1110
    %v1202 = vpop.f32.mrb[0].mxu0
    %v1203 = vadd.f32 %v1134, %v1202
    %v1204 = vpop.f32.mrb[0].mxu0
    %1205 = vdwg.mxu0
    %v1206 = vmax.f32 %v1203, 0.0
    %s1207 = scalar_lea.vmem [#allocation5], 1536
    %v1208 = vld [vmem:[%s1207] sm:$0xff]
    %v1209 = vld [vmem:[%s1207 + $0x8] sm:$0xff]
    %v1210 = vld [vmem:[%s1207 + $0x10] sm:$0xff]
    %v1211 = vld [vmem:[%s1207 + $0x18] sm:$0xff]
    %v1212 = vld [vmem:[%s1207 + $0x20] sm:$0xff]
    %v1213 = vld [vmem:[%s1207 + $0x28] sm:$0xff]
    %v1214 = vld [vmem:[%s1207 + $0x30] sm:$0xff]
    %v1215 = vld [vmem:[%s1207 + $0x38] sm:$0xff]
    %v1216 = vld [vmem:[%s1207 + $0x40] sm:$0xff]
    %v1217 = vld [vmem:[%s1207 + $0x48] sm:$0xff]
    %v1218 = vld [vmem:[%s1207 + $0x50] sm:$0xff]
    %v1219 = vld [vmem:[%s1207 + $0x58] sm:$0xff]
    %v1220 = vld [vmem:[%s1207 + $0x60] sm:$0xff]
    %v1221 = vld [vmem:[%s1207 + $0x68] sm:$0xff]
    %v1222 = vld [vmem:[%s1207 + $0x70] sm:$0xff]
    %v1223 = vld [vmem:[%s1207 + $0x78] sm:$0xff]
    %s1224 = scalar_lea.vmem [#allocation7], 12
    %v1225 = vld [vmem:[%s1224] sm:$0x1]
    %v1227 = vlaneseq
    %v1228 = vshrl.u32 %v1227, 7
    %v1229 = vsub.s32 0, %v1228
    %v1230 = vrot.slane %v1225, %v1229
    %1232 = vmatprep.subr.mxu0 0.0
    %1233 = vmatpush1.msra.mxu0 %v1208
    %1234 = vmatprep.subr.mxu0 0.0
    %1235 = vmatpush1.msra.mxu0 %v1209
    %1236 = vmatprep.subr.mxu0 0.0
    %1237 = vmatpush1.msra.mxu0 %v1210
    %1238 = vmatprep.subr.mxu0 0.0
    %1239 = vmatpush1.msra.mxu0 %v1211
    %1240 = vmatprep.subr.mxu0 0.0
    %1241 = vmatpush1.msra.mxu0 %v1212
    %1242 = vmatprep.subr.mxu0 0.0
    %1243 = vmatpush1.msra.mxu0 %v1213
    %1244 = vmatprep.subr.mxu0 0.0
    %1245 = vmatpush1.msra.mxu0 %v1214
    %1246 = vmatprep.subr.mxu0 0.0
    %1247 = vmatpush1.msra.mxu0 %v1215
    %1248 = vmatprep.subr.mxu0 0.0
    %1249 = vmatpush1.msra.mxu0 %v1216
    %1250 = vmatprep.subr.mxu0 0.0
    %1251 = vmatpush1.msra.mxu0 %v1217
    %1252 = vmatprep.subr.mxu0 0.0
    %1253 = vmatpush1.msra.mxu0 %v1218
    %1254 = vmatprep.subr.mxu0 0.0
    %1255 = vmatpush1.msra.mxu0 %v1219
    %1256 = vmatprep.subr.mxu0 0.0
    %1257 = vmatpush1.msra.mxu0 %v1220
    %1258 = vmatprep.subr.mxu0 0.0
    %1259 = vmatpush1.msra.mxu0 %v1221
    %1260 = vmatprep.subr.mxu0 0.0
    %1261 = vmatpush1.msra.mxu0 %v1222
    %1262 = vmatprep.subr.mxu0 0.0
    %1263 = vmatpush1.msra.mxu0 %v1223
    %1264 = vmatprep.subr.mxu0 0.0
    %1265 = vmatpush1.msra.mxu0 0.0
    %1266 = vmatprep.subr.mxu0 0.0
    %1267 = vmatpush1.msra.mxu0 0.0
    %1268 = vmatprep.subr.mxu0 0.0
    %1269 = vmatpush1.msra.mxu0 0.0
    %1270 = vmatprep.subr.mxu0 0.0
    %1271 = vmatpush1.msra.mxu0 0.0
    %1272 = vmatprep.subr.mxu0 0.0
    %1273 = vmatpush1.msra.mxu0 0.0
    %1274 = vmatprep.subr.mxu0 0.0
    %1275 = vmatpush1.msra.mxu0 0.0
    %1276 = vmatprep.subr.mxu0 0.0
    %1277 = vmatpush1.msra.mxu0 0.0
    %1278 = vmatprep.subr.mxu0 0.0
    %1279 = vmatpush1.msra.mxu0 0.0
    %1280 = vmatprep.subr.mxu0 0.0
    %1281 = vmatpush1.msra.mxu0 0.0
    %1282 = vmatprep.subr.mxu0 0.0
    %1283 = vmatpush1.msra.mxu0 0.0
    %1284 = vmatprep.subr.mxu0 0.0
    %1285 = vmatpush1.msra.mxu0 0.0
    %1286 = vmatprep.subr.mxu0 0.0
    %1287 = vmatpush1.msra.mxu0 0.0
    %1288 = vmatprep.subr.mxu0 0.0
    %1289 = vmatpush1.msra.mxu0 0.0
    %1290 = vmatprep.subr.mxu0 0.0
    %1291 = vmatpush1.msra.mxu0 0.0
    %1292 = vmatprep.subr.mxu0 0.0
    %1293 = vmatpush1.msra.mxu0 0.0
    %1294 = vmatprep.subr.mxu0 0.0
    %1295 = vmatpush1.msra.mxu0 0.0
    %1296 = vmatprep.mubr.f32.mxu0 0.0
    %1297 = vmatmul.mubr.f32.gmra.mrb[0].mxu0 %v1206
    %v1298 = vpop.f32.mrb[0].mxu0
    %v1299 = vadd.f32 %v1230, %v1298
    %v1300 = vpop.f32.mrb[0].mxu0
    %1301 = vdwg.mxu0
    %v1302 = vadd.f32 %v1299, %v918
    %v1303 = vmax.f32 %v1302, 0.0
    %s1304 = scalar_lea.vmem [#allocation5], 1664
    %v1305 = vld [vmem:[%s1304] sm:$0xff]
    %v1306 = vld [vmem:[%s1304 + $0x8] sm:$0xff]
    %v1307 = vld [vmem:[%s1304 + $0x10] sm:$0xff]
    %v1308 = vld [vmem:[%s1304 + $0x18] sm:$0xff]
    %v1309 = vld [vmem:[%s1304 + $0x20] sm:$0xff]
    %v1310 = vld [vmem:[%s1304 + $0x28] sm:$0xff]
    %v1311 = vld [vmem:[%s1304 + $0x30] sm:$0xff]
    %v1312 = vld [vmem:[%s1304 + $0x38] sm:$0xff]
    %v1313 = vld [vmem:[%s1304 + $0x40] sm:$0xff]
    %v1314 = vld [vmem:[%s1304 + $0x48] sm:$0xff]
    %v1315 = vld [vmem:[%s1304 + $0x50] sm:$0xff]
    %v1316 = vld [vmem:[%s1304 + $0x58] sm:$0xff]
    %v1317 = vld [vmem:[%s1304 + $0x60] sm:$0xff]
    %v1318 = vld [vmem:[%s1304 + $0x68] sm:$0xff]
    %v1319 = vld [vmem:[%s1304 + $0x70] sm:$0xff]
    %v1320 = vld [vmem:[%s1304 + $0x78] sm:$0xff]
    %s1321 = scalar_lea.vmem [#allocation7], 13
    %v1322 = vld [vmem:[%s1321] sm:$0x1]
    %v1324 = vlaneseq
    %v1325 = vshrl.u32 %v1324, 7
    %v1326 = vsub.s32 0, %v1325
    %v1327 = vrot.slane %v1322, %v1326
    %1329 = vmatprep.subr.mxu0 0.0
    %1330 = vmatpush1.msra.mxu0 %v1305
    %1331 = vmatprep.subr.mxu0 0.0
    %1332 = vmatpush1.msra.mxu0 %v1306
    %1333 = vmatprep.subr.mxu0 0.0
    %1334 = vmatpush1.msra.mxu0 %v1307
    %1335 = vmatprep.subr.mxu0 0.0
    %1336 = vmatpush1.msra.mxu0 %v1308
    %1337 = vmatprep.subr.mxu0 0.0
    %1338 = vmatpush1.msra.mxu0 %v1309
    %1339 = vmatprep.subr.mxu0 0.0
    %1340 = vmatpush1.msra.mxu0 %v1310
    %1341 = vmatprep.subr.mxu0 0.0
    %1342 = vmatpush1.msra.mxu0 %v1311
    %1343 = vmatprep.subr.mxu0 0.0
    %1344 = vmatpush1.msra.mxu0 %v1312
    %1345 = vmatprep.subr.mxu0 0.0
    %1346 = vmatpush1.msra.mxu0 %v1313
    %1347 = vmatprep.subr.mxu0 0.0
    %1348 = vmatpush1.msra.mxu0 %v1314
    %1349 = vmatprep.subr.mxu0 0.0
    %1350 = vmatpush1.msra.mxu0 %v1315
    %1351 = vmatprep.subr.mxu0 0.0
    %1352 = vmatpush1.msra.mxu0 %v1316
    %1353 = vmatprep.subr.mxu0 0.0
    %1354 = vmatpush1.msra.mxu0 %v1317
    %1355 = vmatprep.subr.mxu0 0.0
    %1356 = vmatpush1.msra.mxu0 %v1318
    %1357 = vmatprep.subr.mxu0 0.0
    %1358 = vmatpush1.msra.mxu0 %v1319
    %1359 = vmatprep.subr.mxu0 0.0
    %1360 = vmatpush1.msra.mxu0 %v1320
    %1361 = vmatprep.subr.mxu0 0.0
    %1362 = vmatpush1.msra.mxu0 0.0
    %1363 = vmatprep.subr.mxu0 0.0
    %1364 = vmatpush1.msra.mxu0 0.0
    %1365 = vmatprep.subr.mxu0 0.0
    %1366 = vmatpush1.msra.mxu0 0.0
    %1367 = vmatprep.subr.mxu0 0.0
    %1368 = vmatpush1.msra.mxu0 0.0
    %1369 = vmatprep.subr.mxu0 0.0
    %1370 = vmatpush1.msra.mxu0 0.0
    %1371 = vmatprep.subr.mxu0 0.0
    %1372 = vmatpush1.msra.mxu0 0.0
    %1373 = vmatprep.subr.mxu0 0.0
    %1374 = vmatpush1.msra.mxu0 0.0
    %1375 = vmatprep.subr.mxu0 0.0
    %1376 = vmatpush1.msra.mxu0 0.0
    %1377 = vmatprep.subr.mxu0 0.0
    %1378 = vmatpush1.msra.mxu0 0.0
    %1379 = vmatprep.subr.mxu0 0.0
    %1380 = vmatpush1.msra.mxu0 0.0
    %1381 = vmatprep.subr.mxu0 0.0
    %1382 = vmatpush1.msra.mxu0 0.0
    %1383 = vmatprep.subr.mxu0 0.0
    %1384 = vmatpush1.msra.mxu0 0.0
    %1385 = vmatprep.subr.mxu0 0.0
    %1386 = vmatpush1.msra.mxu0 0.0
    %1387 = vmatprep.subr.mxu0 0.0
    %1388 = vmatpush1.msra.mxu0 0.0
    %1389 = vmatprep.subr.mxu0 0.0
    %1390 = vmatpush1.msra.mxu0 0.0
    %1391 = vmatprep.subr.mxu0 0.0
    %1392 = vmatpush1.msra.mxu0 0.0
    %1393 = vmatprep.mubr.f32.mxu0 0.0
    %1394 = vmatmul.mubr.f32.gmra.mrb[0].mxu0 %v1303
    %v1395 = vpop.f32.mrb[0].mxu0
    %v1396 = vadd.f32 %v1327, %v1395
    %v1397 = vpop.f32.mrb[0].mxu0
    %1398 = vdwg.mxu0
    %1399 = vst [vmem:[#allocation8] sm:$0xff] %v1396
    // Predicated region
    $region26: #{tpu_custom_call.1} parent=1 // pred_check
      _
    $region27: #{tpu_custom_call.1} parent=1 // pred_check_branch
      %1401 = sbr.rel (0) target = $region29
    $region28: #{tpu_custom_call.1} parent=1 // pred_region
      %s1403 = ssub.s32 128, 128
      %1404 = vsyncadd [#allocation4], %s1403
      %s1406 = sshll.u32 [#allocation8], 4
      %s1407 = int_to_ptr.vmem [resolvable:$true] %s1406
      %1409 = dma.vmem_to_hbm [thread:$0]  %s1407, 128, %s3, [#allocation4]
    $region29: #{tpu_custom_call.1} parent=1 // pred_fallthru
      _
    // Predicated region
    $region30: #{tpu_custom_call.1} parent=1 // pred_check
      _
    $region31: #{tpu_custom_call.1} parent=1 // pred_check_branch
      %1411 = sbr.rel (0) target = $region33
    $region32: #{tpu_custom_call.1} parent=1 // pred_region
      %1412 = dma.done [#allocation4], 128
    $region33: #{tpu_custom_call.1} parent=1 // pred_fallthru
      _
    %1413 = vsyncpa [#allocation3], 1
    %1414 = vsyncpa [#allocation6], 1
    %1415 = vsyncpa [#allocation4], 1

// kernel: tpu_custom_call.1
$region0: #{tpu_custom_call.1}
  #allocation0 [shape = 'u32[]', space=smem, size = 0x4, offset = 0x4, fixed_abs, tag = 'smem constant byte address 0x4 - core index']
  #allocation1 [shape = 'u32[144,128]{1,0:T(1,128)}', space=vmem, size = 0x12000, scoped, tag = 'internal scratch']
  %s0 = inlined_call_operand.hbm [shape: f32[8,128], index: 0, kind: input, shape index: {}]
  %s1 = inlined_call_operand.hbm [shape: f32[14,128,128], index: 1, kind: input, shape index: {}]
  %s2 = inlined_call_operand.hbm [shape: f32[14,1,128], index: 2, kind: input, shape index: {}]
  %s3 = inlined_call_operand.hbm [shape: f32[8,128], index: 3, kind: output, shape index: {}]
  %s4 = sld [smem:[#allocation0]]
  $region34: #{tpu_custom_call.1} parent=0
    _
  %s6 = ssub.s32 1, %s4
  %s7 = scalar_select 0, %s6, %s4
  $region1: #{tpu_custom_call.1} parent=0
    #allocation2 [shape = 'u8[4096]{0}', space=vmem, size = 0x1000, scoped, tag = 'input window, operand 0, single buffered']
    #allocation3 [shape = 's32[1]{0}', space=sflag, size = 0x4, scoped, tag = 'scoped memory for tpu_custom_call.1']
    #allocation4 [shape = 's32[1]{0}', space=sflag, size = 0x4, scoped, tag = 'scoped memory for tpu_custom_call.1']
    #allocation5 [shape = 'u8[917504]{0}', space=vmem, size = 0xe0000, scoped, tag = 'input window, operand 1, single buffered']
    #allocation6 [shape = 's32[1]{0}', space=sflag, size = 0x4, scoped, tag = 'scoped memory for tpu_custom_call.1']
    #allocation7 [shape = 'u8[7168]{0}', space=vmem, size = 0x1c00, scoped, tag = 'input window, operand 2, single buffered']
    #allocation8 [shape = 'u8[4096]{0}', space=vmem, size = 0x1000, scoped, tag = 'output window, operand 0, single buffered']
    %8 = vsyncpa [#allocation3], 0
    %9 = vsyncpa [#allocation6], 0
    %10 = vsyncpa [#allocation4], 0
    // Predicated region
    $region2: #{tpu_custom_call.1} parent=1 // pred_check
      _
    $region3: #{tpu_custom_call.1} parent=1 // pred_check_branch
      %12 = sbr.rel (0) target = $region5
    $region4: #{tpu_custom_call.1} parent=1 // pred_region
      %s14 = ssub.s32 128, 128
      %15 = vsyncadd [#allocation3], %s14
      %s17 = sshll.u32 [#allocation2], 4
      %s18 = int_to_ptr.vmem [resolvable:$true] %s17
      %20 = dma.hbm_to_vmem [thread:$0]  %s0, 128, %s18, [#allocation3]
    $region5: #{tpu_custom_call.1} parent=1 // pred_fallthru
      _
    // Predicated region
    $region6: #{tpu_custom_call.1} parent=1 // pred_check
      _
    $region7: #{tpu_custom_call.1} parent=1 // pred_check_branch
      %22 = sbr.rel (0) target = $region9
    $region8: #{tpu_custom_call.1} parent=1 // pred_region
      %s24 = ssub.s32 28672, 28672
      %25 = vsyncadd [#allocation6], %s24
      %s26 = sshll.u32 [#allocation5], 4
      %s27 = int_to_ptr.vmem [resolvable:$true] %s26
      %32 = dma.hbm_to_vmem [thread:$0]  %s1, 28672, %s27, [#allocation6], 128, 128, 8
    $region9: #{tpu_custom_call.1} parent=1 // pred_fallthru
      _
    // Predicated region
    $region10: #{tpu_custom_call.1} parent=1 // pred_check
      _
    $region11: #{tpu_custom_call.1} parent=1 // pred_check_branch
      %34 = sbr.rel (0) target = $region13
    $region12: #{tpu_custom_call.1} parent=1 // pred_region
      %s36 = ssub.s32 224, 224
      %37 = vsyncadd [#allocation6], %s36
      %s38 = sshll.u32 [#allocation7], 4
      %s39 = int_to_ptr.vmem [resolvable:$true] %s38
      %44 = dma.hbm_to_vmem [thread:$0]  %s2, 224, %s39, [#allocation6], 16, 16, 1
    $region13: #{tpu_custom_call.1} parent=1 // pred_fallthru
      _
    // Predicated region
    $region14: #{tpu_custom_call.1} parent=1 // pred_check
      _
    $region15: #{tpu_custom_call.1} parent=1 // pred_check_branch
      %46 = sbr.rel (0) target = $region17
    $region16: #{tpu_custom_call.1} parent=1 // pred_region
      %47 = dma.done [#allocation3], 128
    $region17: #{tpu_custom_call.1} parent=1 // pred_fallthru
      _
    // Predicated region
    $region18: #{tpu_custom_call.1} parent=1 // pred_check
      _
    $region19: #{tpu_custom_call.1} parent=1 // pred_check_branch
      %49 = sbr.rel (0) target = $region21
    $region20: #{tpu_custom_call.1} parent=1 // pred_region
      %50 = dma.done [#allocation6], 28672
    $region21: #{tpu_custom_call.1} parent=1 // pred_fallthru
      _
    // Predicated region
    $region22: #{tpu_custom_call.1} parent=1 // pred_check
      _
    $region23: #{tpu_custom_call.1} parent=1 // pred_check_branch
      %52 = sbr.rel (0) target = $region25
    $region24: #{tpu_custom_call.1} parent=1 // pred_region
      %53 = dma.done [#allocation6], 224
    $region25: #{tpu_custom_call.1} parent=1 // pred_fallthru
      _
    %v54 = vld [vmem:[#allocation2] sm:$0xff]
    %v55 = vld [vmem:[#allocation5] sm:$0xff]
    %v56 = vld [vmem:[#allocation5 + $0x8] sm:$0xff]
    %v57 = vld [vmem:[#allocation5 + $0x10] sm:$0xff]
    %v58 = vld [vmem:[#allocation5 + $0x18] sm:$0xff]
    %v59 = vld [vmem:[#allocation5 + $0x20] sm:$0xff]
    %v60 = vld [vmem:[#allocation5 + $0x28] sm:$0xff]
    %v61 = vld [vmem:[#allocation5 + $0x30] sm:$0xff]
    %v62 = vld [vmem:[#allocation5 + $0x38] sm:$0xff]
    %v63 = vld [vmem:[#allocation5 + $0x40] sm:$0xff]
    %v64 = vld [vmem:[#allocation5 + $0x48] sm:$0xff]
    %v65 = vld [vmem:[#allocation5 + $0x50] sm:$0xff]
    %v66 = vld [vmem:[#allocation5 + $0x58] sm:$0xff]
    %v67 = vld [vmem:[#allocation5 + $0x60] sm:$0xff]
    %v68 = vld [vmem:[#allocation5 + $0x68] sm:$0xff]
    %v69 = vld [vmem:[#allocation5 + $0x70] sm:$0xff]
    %v70 = vld [vmem:[#allocation5 + $0x78] sm:$0xff]
    %v71 = vld [vmem:[#allocation7] sm:$0x1]
    %v73 = vlaneseq
    %v74 = vshrl.u32 %v73, 7
    %v75 = vsub.s32 0, %v74
    %v76 = vrot.slane %v71, %v75
    %78 = vmatprep.subr.mxu0 0.0
    %79 = vmatpush1.msra.mxu0 %v55
    %80 = vmatprep.subr.mxu0 0.0
    %81 = vmatpush1.msra.mxu0 %v56
    %82 = vmatprep.subr.mxu0 0.0
    %83 = vmatpush1.msra.mxu0 %v57
    %84 = vmatprep.subr.mxu0 0.0
    %85 = vmatpush1.msra.mxu0 %v58
    %86 = vmatprep.subr.mxu0 0.0
    %87 = vmatpush1.msra.mxu0 %v59
    %88 = vmatprep.subr.mxu0 0.0
    %89 = vmatpush1.msra.mxu0 %v60
    %90 = vmatprep.subr.mxu0 0.0
    %91 = vmatpush1.msra.mxu0 %v61
    %92 = vmatprep.subr.mxu0 0.0
    %93 = vmatpush1.msra.mxu0 %v62
    %94 = vmatprep.subr.mxu0 0.0
    %95 = vmatpush1.msra.mxu0 %v63
    %96 = vmatprep.subr.mxu0 0.0
    %97 = vmatpush1.msra.mxu0 %v64
    %98 = vmatprep.subr.mxu0 0.0
    %99 = vmatpush1.msra.mxu0 %v65
    %100 = vmatprep.subr.mxu0 0.0
    %101 = vmatpush1.msra.mxu0 %v66
    %102 = vmatprep.subr.mxu0 0.0
    %103 = vmatpush1.msra.mxu0 %v67
    %104 = vmatprep.subr.mxu0 0.0
    %105 = vmatpush1.msra.mxu0 %v68
    %106 = vmatprep.subr.mxu0 0.0
    %107 = vmatpush1.msra.mxu0 %v69
    %108 = vmatprep.subr.mxu0 0.0
    %109 = vmatpush1.msra.mxu0 %v70
    %110 = vmatprep.subr.mxu0 0.0
    %111 = vmatpush1.msra.mxu0 0.0
    %112 = vmatprep.subr.mxu0 0.0
    %113 = vmatpush1.msra.mxu0 0.0
    %114 = vmatprep.subr.mxu0 0.0
    %115 = vmatpush1.msra.mxu0 0.0
    %116 = vmatprep.subr.mxu0 0.0
    %117 = vmatpush1.msra.mxu0 0.0
    %118 = vmatprep.subr.mxu0 0.0
    %119 = vmatpush1.msra.mxu0 0.0
    %120 = vmatprep.subr.mxu0 0.0
    %121 = vmatpush1.msra.mxu0 0.0
    %122 = vmatprep.subr.mxu0 0.0
    %123 = vmatpush1.msra.mxu0 0.0
    %124 = vmatprep.subr.mxu0 0.0
    %125 = vmatpush1.msra.mxu0 0.0
    %126 = vmatprep.subr.mxu0 0.0
    %127 = vmatpush1.msra.mxu0 0.0
    %128 = vmatprep.subr.mxu0 0.0
    %129 = vmatpush1.msra.mxu0 0.0
    %130 = vmatprep.subr.mxu0 0.0
    %131 = vmatpush1.msra.mxu0 0.0
    %132 = vmatprep.subr.mxu0 0.0
    %133 = vmatpush1.msra.mxu0 0.0
    %134 = vmatprep.subr.mxu0 0.0
    %135 = vmatpush1.msra.mxu0 0.0
    %136 = vmatprep.subr.mxu0 0.0
    %137 = vmatpush1.msra.mxu0 0.0
    %138 = vmatprep.subr.mxu0 0.0
    %139 = vmatpush1.msra.mxu0 0.0
    %140 = vmatprep.subr.mxu0 0.0
    %141 = vmatpush1.msra.mxu0 0.0
    %142 = vmatprep.mubr.f32.mxu0 0.0
    %143 = vmatmul.mubr.f32.gmra.mrb[0].mxu0 %v54
    %v144 = vpop.f32.mrb[0].mxu0
    %v145 = vadd.f32 %v76, %v144
    %v146 = vpop.f32.mrb[0].mxu0
    %147 = vdwg.mxu0
    %v148 = vmax.f32 %v145, 0.0
    %s149 = scalar_lea.vmem [#allocation5], 128
    %v150 = vld [vmem:[%s149] sm:$0xff]
    %v151 = vld [vmem:[%s149 + $0x8] sm:$0xff]
    %v152 = vld [vmem:[%s149 + $0x10] sm:$0xff]
    %v153 = vld [vmem:[%s149 + $0x18] sm:$0xff]
    %v154 = vld [vmem:[%s149 + $0x20] sm:$0xff]
    %v155 = vld [vmem:[%s149 + $0x28] sm:$0xff]
    %v156 = vld [vmem:[%s149 + $0x30] sm:$0xff]
    %v157 = vld [vmem:[%s149 + $0x38] sm:$0xff]
    %v158 = vld [vmem:[%s149 + $0x40] sm:$0xff]
    %v159 = vld [vmem:[%s149 + $0x48] sm:$0xff]
    %v160 = vld [vmem:[%s149 + $0x50] sm:$0xff]
    %v161 = vld [vmem:[%s149 + $0x58] sm:$0xff]
    %v162 = vld [vmem:[%s149 + $0x60] sm:$0xff]
    %v163 = vld [vmem:[%s149 + $0x68] sm:$0xff]
    %v164 = vld [vmem:[%s149 + $0x70] sm:$0xff]
    %v165 = vld [vmem:[%s149 + $0x78] sm:$0xff]
    %s166 = scalar_lea.vmem [#allocation7], 1
    %v167 = vld [vmem:[%s166] sm:$0x1]
    %v169 = vlaneseq
    %v170 = vshrl.u32 %v169, 7
    %v171 = vsub.s32 0, %v170
    %v172 = vrot.slane %v167, %v171
    %174 = vmatprep.subr.mxu0 0.0
    %175 = vmatpush1.msra.mxu0 %v150
    %176 = vmatprep.subr.mxu0 0.0
    %177 = vmatpush1.msra.mxu0 %v151
    %178 = vmatprep.subr.mxu0 0.0
    %179 = vmatpush1.msra.mxu0 %v152
    %180 = vmatprep.subr.mxu0 0.0
    %181 = vmatpush1.msra.mxu0 %v153
    %182 = vmatprep.subr.mxu0 0.0
    %183 = vmatpush1.msra.mxu0 %v154
    %184 = vmatprep.subr.mxu0 0.0
    %185 = vmatpush1.msra.mxu0 %v155
    %186 = vmatprep.subr.mxu0 0.0
    %187 = vmatpush1.msra.mxu0 %v156
    %188 = vmatprep.subr.mxu0 0.0
    %189 = vmatpush1.msra.mxu0 %v157
    %190 = vmatprep.subr.mxu0 0.0
    %191 = vmatpush1.msra.mxu0 %v158
    %192 = vmatprep.subr.mxu0 0.0
    %193 = vmatpush1.msra.mxu0 %v159
    %194 = vmatprep.subr.mxu0 0.0
    %195 = vmatpush1.msra.mxu0 %v160
    %196 = vmatprep.subr.mxu0 0.0
    %197 = vmatpush1.msra.mxu0 %v161
    %198 = vmatprep.subr.mxu0 0.0
    %199 = vmatpush1.msra.mxu0 %v162
    %200 = vmatprep.subr.mxu0 0.0
    %201 = vmatpush1.msra.mxu0 %v163
    %202 = vmatprep.subr.mxu0 0.0
    %203 = vmatpush1.msra.mxu0 %v164
    %204 = vmatprep.subr.mxu0 0.0
    %205 = vmatpush1.msra.mxu0 %v165
    %206 = vmatprep.subr.mxu0 0.0
    %207 = vmatpush1.msra.mxu0 0.0
    %208 = vmatprep.subr.mxu0 0.0
    %209 = vmatpush1.msra.mxu0 0.0
    %210 = vmatprep.subr.mxu0 0.0
    %211 = vmatpush1.msra.mxu0 0.0
    %212 = vmatprep.subr.mxu0 0.0
    %213 = vmatpush1.msra.mxu0 0.0
    %214 = vmatprep.subr.mxu0 0.0
    %215 = vmatpush1.msra.mxu0 0.0
    %216 = vmatprep.subr.mxu0 0.0
    %217 = vmatpush1.msra.mxu0 0.0
    %218 = vmatprep.subr.mxu0 0.0
    %219 = vmatpush1.msra.mxu0 0.0
    %220 = vmatprep.subr.mxu0 0.0
    %221 = vmatpush1.msra.mxu0 0.0
    %222 = vmatprep.subr.mxu0 0.0
    %223 = vmatpush1.msra.mxu0 0.0
    %224 = vmatprep.subr.mxu0 0.0
    %225 = vmatpush1.msra.mxu0 0.0
    %226 = vmatprep.subr.mxu0 0.0
    %227 = vmatpush1.msra.mxu0 0.0
    %228 = vmatprep.subr.mxu0 0.0
    %229 = vmatpush1.msra.mxu0 0.0
    %230 = vmatprep.subr.mxu0 0.0
    %231 = vmatpush1.msra.mxu0 0.0
    %232 = vmatprep.subr.mxu0 0.0
    %233 = vmatpush1.msra.mxu0 0.0
    %234 = vmatprep.subr.mxu0 0.0
    %235 = vmatpush1.msra.mxu0 0.0
    %236 = vmatprep.subr.mxu0 0.0
    %237 = vmatpush1.msra.mxu0 0.0
    %238 = vmatprep.mubr.f32.mxu0 0.0
    %239 = vmatmul.mubr.f32.gmra.mrb[0].mxu0 %v148
    %v240 = vpop.f32.mrb[0].mxu0
    %v241 = vadd.f32 %v172, %v240
    %v242 = vpop.f32.mrb[0].mxu0
    %243 = vdwg.mxu0
    %v244 = vmax.f32 %v241, 0.0
    %s245 = scalar_lea.vmem [#allocation5], 256
    %v246 = vld [vmem:[%s245] sm:$0xff]
    %v247 = vld [vmem:[%s245 + $0x8] sm:$0xff]
    %v248 = vld [vmem:[%s245 + $0x10] sm:$0xff]
    %v249 = vld [vmem:[%s245 + $0x18] sm:$0xff]
    %v250 = vld [vmem:[%s245 + $0x20] sm:$0xff]
    %v251 = vld [vmem:[%s245 + $0x28] sm:$0xff]
    %v252 = vld [vmem:[%s245 + $0x30] sm:$0xff]
    %v253 = vld [vmem:[%s245 + $0x38] sm:$0xff]
    %v254 = vld [vmem:[%s245 + $0x40] sm:$0xff]
    %v255 = vld [vmem:[%s245 + $0x48] sm:$0xff]
    %v256 = vld [vmem:[%s245 + $0x50] sm:$0xff]
    %v257 = vld [vmem:[%s245 + $0x58] sm:$0xff]
    %v258 = vld [vmem:[%s245 + $0x60] sm:$0xff]
    %v259 = vld [vmem:[%s245 + $0x68] sm:$0xff]
    %v260 = vld [vmem:[%s245 + $0x70] sm:$0xff]
    %v261 = vld [vmem:[%s245 + $0x78] sm:$0xff]
    %s262 = scalar_lea.vmem [#allocation7], 2
    %v263 = vld [vmem:[%s262] sm:$0x1]
    %v265 = vlaneseq
    %v266 = vshrl.u32 %v265, 7
    %v267 = vsub.s32 0, %v266
    %v268 = vrot.slane %v263, %v267
    %270 = vmatprep.subr.mxu0 0.0
    %271 = vmatpush1.msra.mxu0 %v246
    %272 = vmatprep.subr.mxu0 0.0
    %273 = vmatpush1.msra.mxu0 %v247
    %274 = vmatprep.subr.mxu0 0.0
    %275 = vmatpush1.msra.mxu0 %v248
    %276 = vmatprep.subr.mxu0 0.0
    %277 = vmatpush1.msra.mxu0 %v249
    %278 = vmatprep.subr.mxu0 0.0
    %279 = vmatpush1.msra.mxu0 %v250
    %280 = vmatprep.subr.mxu0 0.0
    %281 = vmatpush1.msra.mxu0 %v251
    %282 = vmatprep.subr.mxu0 0.0
    %283 = vmatpush1.msra.mxu0 %v252
    %284 = vmatprep.subr.mxu0 0.0
    %285 = vmatpush1.msra.mxu0 %v253
    %286 = vmatprep.subr.mxu0 0.0
    %287 = vmatpush1.msra.mxu0 %v254
    %288 = vmatprep.subr.mxu0 0.0
    %289 = vmatpush1.msra.mxu0 %v255
    %290 = vmatprep.subr.mxu0 0.0
    %291 = vmatpush1.msra.mxu0 %v256
    %292 = vmatprep.subr.mxu0 0.0
    %293 = vmatpush1.msra.mxu0 %v257
    %294 = vmatprep.subr.mxu0 0.0
    %295 = vmatpush1.msra.mxu0 %v258
    %296 = vmatprep.subr.mxu0 0.0
    %297 = vmatpush1.msra.mxu0 %v259
    %298 = vmatprep.subr.mxu0 0.0
    %299 = vmatpush1.msra.mxu0 %v260
    %300 = vmatprep.subr.mxu0 0.0
    %301 = vmatpush1.msra.mxu0 %v261
    %302 = vmatprep.subr.mxu0 0.0
    %303 = vmatpush1.msra.mxu0 0.0
    %304 = vmatprep.subr.mxu0 0.0
    %305 = vmatpush1.msra.mxu0 0.0
    %306 = vmatprep.subr.mxu0 0.0
    %307 = vmatpush1.msra.mxu0 0.0
    %308 = vmatprep.subr.mxu0 0.0
    %309 = vmatpush1.msra.mxu0 0.0
    %310 = vmatprep.subr.mxu0 0.0
    %311 = vmatpush1.msra.mxu0 0.0
    %312 = vmatprep.subr.mxu0 0.0
    %313 = vmatpush1.msra.mxu0 0.0
    %314 = vmatprep.subr.mxu0 0.0
    %315 = vmatpush1.msra.mxu0 0.0
    %316 = vmatprep.subr.mxu0 0.0
    %317 = vmatpush1.msra.mxu0 0.0
    %318 = vmatprep.subr.mxu0 0.0
    %319 = vmatpush1.msra.mxu0 0.0
    %320 = vmatprep.subr.mxu0 0.0
    %321 = vmatpush1.msra.mxu0 0.0
    %322 = vmatprep.subr.mxu0 0.0
    %323 = vmatpush1.msra.mxu0 0.0
    %324 = vmatprep.subr.mxu0 0.0
    %325 = vmatpush1.msra.mxu0 0.0
    %326 = vmatprep.subr.mxu0 0.0
    %327 = vmatpush1.msra.mxu0 0.0
    %328 = vmatprep.subr.mxu0 0.0
    %329 = vmatpush1.msra.mxu0 0.0
    %330 = vmatprep.subr.mxu0 0.0
    %331 = vmatpush1.msra.mxu0 0.0
    %332 = vmatprep.subr.mxu0 0.0
    %333 = vmatpush1.msra.mxu0 0.0
    %334 = vmatprep.mubr.f32.mxu0 0.0
    %335 = vmatmul.mubr.f32.gmra.mrb[0].mxu0 %v244
    %v336 = vpop.f32.mrb[0].mxu0
    %v337 = vadd.f32 %v268, %v336
    %v338 = vpop.f32.mrb[0].mxu0
    %339 = vdwg.mxu0
    %v340 = vmax.f32 %v337, 0.0
    %s341 = scalar_lea.vmem [#allocation5], 384
    %v342 = vld [vmem:[%s341] sm:$0xff]
    %v343 = vld [vmem:[%s341 + $0x8] sm:$0xff]
    %v344 = vld [vmem:[%s341 + $0x10] sm:$0xff]
    %v345 = vld [vmem:[%s341 + $0x18] sm:$0xff]
    %v346 = vld [vmem:[%s341 + $0x20] sm:$0xff]
    %v347 = vld [vmem:[%s341 + $0x28] sm:$0xff]
    %v348 = vld [vmem:[%s341 + $0x30] sm:$0xff]
    %v349 = vld [vmem:[%s341 + $0x38] sm:$0xff]
    %v350 = vld [vmem:[%s341 + $0x40] sm:$0xff]
    %v351 = vld [vmem:[%s341 + $0x48] sm:$0xff]
    %v352 = vld [vmem:[%s341 + $0x50] sm:$0xff]
    %v353 = vld [vmem:[%s341 + $0x58] sm:$0xff]
    %v354 = vld [vmem:[%s341 + $0x60] sm:$0xff]
    %v355 = vld [vmem:[%s341 + $0x68] sm:$0xff]
    %v356 = vld [vmem:[%s341 + $0x70] sm:$0xff]
    %v357 = vld [vmem:[%s341 + $0x78] sm:$0xff]
    %s358 = scalar_lea.vmem [#allocation7], 3
    %v359 = vld [vmem:[%s358] sm:$0x1]
    %v361 = vlaneseq
    %v362 = vshrl.u32 %v361, 7
    %v363 = vsub.s32 0, %v362
    %v364 = vrot.slane %v359, %v363
    %366 = vmatprep.subr.mxu0 0.0
    %367 = vmatpush1.msra.mxu0 %v342
    %368 = vmatprep.subr.mxu0 0.0
    %369 = vmatpush1.msra.mxu0 %v343
    %370 = vmatprep.subr.mxu0 0.0
    %371 = vmatpush1.msra.mxu0 %v344
    %372 = vmatprep.subr.mxu0 0.0
    %373 = vmatpush1.msra.mxu0 %v345
    %374 = vmatprep.subr.mxu0 0.0
    %375 = vmatpush1.msra.mxu0 %v346
    %376 = vmatprep.subr.mxu0 0.0
    %377 = vmatpush1.msra.mxu0 %v347
    %378 = vmatprep.subr.mxu0 0.0
    %379 = vmatpush1.msra.mxu0 %v348
    %380 = vmatprep.subr.mxu0 0.0
    %381 = vmatpush1.msra.mxu0 %v349
    %382 = vmatprep.subr.mxu0 0.0
    %383 = vmatpush1.msra.mxu0 %v350
    %384 = vmatprep.subr.mxu0 0.0
    %385 = vmatpush1.msra.mxu0 %v351
    %386 = vmatprep.subr.mxu0 0.0
    %387 = vmatpush1.msra.mxu0 %v352
    %388 = vmatprep.subr.mxu0 0.0
    %389 = vmatpush1.msra.mxu0 %v353
    %390 = vmatprep.subr.mxu0 0.0
    %391 = vmatpush1.msra.mxu0 %v354
    %392 = vmatprep.subr.mxu0 0.0
    %393 = vmatpush1.msra.mxu0 %v355
    %394 = vmatprep.subr.mxu0 0.0
    %395 = vmatpush1.msra.mxu0 %v356
    %396 = vmatprep.subr.mxu0 0.0
    %397 = vmatpush1.msra.mxu0 %v357
    %398 = vmatprep.subr.mxu0 0.0
    %399 = vmatpush1.msra.mxu0 0.0
    %400 = vmatprep.subr.mxu0 0.0
    %401 = vmatpush1.msra.mxu0 0.0
    %402 = vmatprep.subr.mxu0 0.0
    %403 = vmatpush1.msra.mxu0 0.0
    %404 = vmatprep.subr.mxu0 0.0
    %405 = vmatpush1.msra.mxu0 0.0
    %406 = vmatprep.subr.mxu0 0.0
    %407 = vmatpush1.msra.mxu0 0.0
    %408 = vmatprep.subr.mxu0 0.0
    %409 = vmatpush1.msra.mxu0 0.0
    %410 = vmatprep.subr.mxu0 0.0
    %411 = vmatpush1.msra.mxu0 0.0
    %412 = vmatprep.subr.mxu0 0.0
    %413 = vmatpush1.msra.mxu0 0.0
    %414 = vmatprep.subr.mxu0 0.0
    %415 = vmatpush1.msra.mxu0 0.0
    %416 = vmatprep.subr.mxu0 0.0
    %417 = vmatpush1.msra.mxu0 0.0
    %418 = vmatprep.subr.mxu0 0.0
    %419 = vmatpush1.msra.mxu0 0.0
    %420 = vmatprep.subr.mxu0 0.0
    %421 = vmatpush1.msra.mxu0 0.0
    %422 = vmatprep.subr.mxu0 0.0
    %423 = vmatpush1.msra.mxu0 0.0
    %424 = vmatprep.subr.mxu0 0.0
    %425 = vmatpush1.msra.mxu0 0.0
    %426 = vmatprep.subr.mxu0 0.0
    %427 = vmatpush1.msra.mxu0 0.0
    %428 = vmatprep.subr.mxu0 0.0
    %429 = vmatpush1.msra.mxu0 0.0
    %430 = vmatprep.mubr.f32.mxu0 0.0
    %431 = vmatmul.mubr.f32.gmra.mrb[0].mxu0 %v340
    %v432 = vpop.f32.mrb[0].mxu0
    %v433 = vadd.f32 %v364, %v432
    %v434 = vpop.f32.mrb[0].mxu0
    %435 = vdwg.mxu0
    %v436 = vmax.f32 %v433, 0.0
    %s437 = scalar_lea.vmem [#allocation5], 512
    %v438 = vld [vmem:[%s437] sm:$0xff]
    %v439 = vld [vmem:[%s437 + $0x8] sm:$0xff]
    %v440 = vld [vmem:[%s437 + $0x10] sm:$0xff]
    %v441 = vld [vmem:[%s437 + $0x18] sm:$0xff]
    %v442 = vld [vmem:[%s437 + $0x20] sm:$0xff]
    %v443 = vld [vmem:[%s437 + $0x28] sm:$0xff]
    %v444 = vld [vmem:[%s437 + $0x30] sm:$0xff]
    %v445 = vld [vmem:[%s437 + $0x38] sm:$0xff]
    %v446 = vld [vmem:[%s437 + $0x40] sm:$0xff]
    %v447 = vld [vmem:[%s437 + $0x48] sm:$0xff]
    %v448 = vld [vmem:[%s437 + $0x50] sm:$0xff]
    %v449 = vld [vmem:[%s437 + $0x58] sm:$0xff]
    %v450 = vld [vmem:[%s437 + $0x60] sm:$0xff]
    %v451 = vld [vmem:[%s437 + $0x68] sm:$0xff]
    %v452 = vld [vmem:[%s437 + $0x70] sm:$0xff]
    %v453 = vld [vmem:[%s437 + $0x78] sm:$0xff]
    %s454 = scalar_lea.vmem [#allocation7], 4
    %v455 = vld [vmem:[%s454] sm:$0x1]
    %v457 = vlaneseq
    %v458 = vshrl.u32 %v457, 7
    %v459 = vsub.s32 0, %v458
    %v460 = vrot.slane %v455, %v459
    %462 = vmatprep.subr.mxu0 0.0
    %463 = vmatpush1.msra.mxu0 %v438
    %464 = vmatprep.subr.mxu0 0.0
    %465 = vmatpush1.msra.mxu0 %v439
    %466 = vmatprep.subr.mxu0 0.0
    %467 = vmatpush1.msra.mxu0 %v440
    %468 = vmatprep.subr.mxu0 0.0
    %469 = vmatpush1.msra.mxu0 %v441
    %470 = vmatprep.subr.mxu0 0.0
    %471 = vmatpush1.msra.mxu0 %v442
    %472 = vmatprep.subr.mxu0 0.0
    %473 = vmatpush1.msra.mxu0 %v443
    %474 = vmatprep.subr.mxu0 0.0
    %475 = vmatpush1.msra.mxu0 %v444
    %476 = vmatprep.subr.mxu0 0.0
    %477 = vmatpush1.msra.mxu0 %v445
    %478 = vmatprep.subr.mxu0 0.0
    %479 = vmatpush1.msra.mxu0 %v446
    %480 = vmatprep.subr.mxu0 0.0
    %481 = vmatpush1.msra.mxu0 %v447
    %482 = vmatprep.subr.mxu0 0.0
    %483 = vmatpush1.msra.mxu0 %v448
    %484 = vmatprep.subr.mxu0 0.0
    %485 = vmatpush1.msra.mxu0 %v449
    %486 = vmatprep.subr.mxu0 0.0
    %487 = vmatpush1.msra.mxu0 %v450
    %488 = vmatprep.subr.mxu0 0.0
    %489 = vmatpush1.msra.mxu0 %v451
    %490 = vmatprep.subr.mxu0 0.0
    %491 = vmatpush1.msra.mxu0 %v452
    %492 = vmatprep.subr.mxu0 0.0
    %493 = vmatpush1.msra.mxu0 %v453
    %494 = vmatprep.subr.mxu0 0.0
    %495 = vmatpush1.msra.mxu0 0.0
    %496 = vmatprep.subr.mxu0 0.0
    %497 = vmatpush1.msra.mxu0 0.0
    %498 = vmatprep.subr.mxu0 0.0
    %499 = vmatpush1.msra.mxu0 0.0
    %500 = vmatprep.subr.mxu0 0.0
    %501 = vmatpush1.msra.mxu0 0.0
    %502 = vmatprep.subr.mxu0 0.0
    %503 = vmatpush1.msra.mxu0 0.0
    %504 = vmatprep.subr.mxu0 0.0
    %505 = vmatpush1.msra.mxu0 0.0
    %506 = vmatprep.subr.mxu0 0.0
    %507 = vmatpush1.msra.mxu0 0.0
    %508 = vmatprep.subr.mxu0 0.0
    %509 = vmatpush1.msra.mxu0 0.0
    %510 = vmatprep.subr.mxu0 0.0
    %511 = vmatpush1.msra.mxu0 0.0
    %512 = vmatprep.subr.mxu0 0.0
    %513 = vmatpush1.msra.mxu0 0.0
    %514 = vmatprep.subr.mxu0 0.0
    %515 = vmatpush1.msra.mxu0 0.0
    %516 = vmatprep.subr.mxu0 0.0
    %517 = vmatpush1.msra.mxu0 0.0
    %518 = vmatprep.subr.mxu0 0.0
    %519 = vmatpush1.msra.mxu0 0.0
    %520 = vmatprep.subr.mxu0 0.0
    %521 = vmatpush1.msra.mxu0 0.0
    %522 = vmatprep.subr.mxu0 0.0
    %523 = vmatpush1.msra.mxu0 0.0
    %524 = vmatprep.subr.mxu0 0.0
    %525 = vmatpush1.msra.mxu0 0.0
    %526 = vmatprep.mubr.f32.mxu0 0.0
    %527 = vmatmul.mubr.f32.gmra.mrb[0].mxu0 %v436
    %v528 = vpop.f32.mrb[0].mxu0
    %v529 = vadd.f32 %v460, %v528
    %v530 = vpop.f32.mrb[0].mxu0
    %531 = vdwg.mxu0
    %v532 = vadd.f32 %v529, %v148
    %v533 = vmax.f32 %v532, 0.0
    %s534 = scalar_lea.vmem [#allocation5], 640
    %v535 = vld [vmem:[%s534] sm:$0xff]
    %v536 = vld [vmem:[%s534 + $0x8] sm:$0xff]
    %v537 = vld [vmem:[%s534 + $0x10] sm:$0xff]
    %v538 = vld [vmem:[%s534 + $0x18] sm:$0xff]
    %v539 = vld [vmem:[%s534 + $0x20] sm:$0xff]
    %v540 = vld [vmem:[%s534 + $0x28] sm:$0xff]
    %v541 = vld [vmem:[%s534 + $0x30] sm:$0xff]
    %v542 = vld [vmem:[%s534 + $0x38] sm:$0xff]
    %v543 = vld [vmem:[%s534 + $0x40] sm:$0xff]
    %v544 = vld [vmem:[%s534 + $0x48] sm:$0xff]
    %v545 = vld [vmem:[%s534 + $0x50] sm:$0xff]
    %v546 = vld [vmem:[%s534 + $0x58] sm:$0xff]
    %v547 = vld [vmem:[%s534 + $0x60] sm:$0xff]
    %v548 = vld [vmem:[%s534 + $0x68] sm:$0xff]
    %v549 = vld [vmem:[%s534 + $0x70] sm:$0xff]
    %v550 = vld [vmem:[%s534 + $0x78] sm:$0xff]
    %s551 = scalar_lea.vmem [#allocation7], 5
    %v552 = vld [vmem:[%s551] sm:$0x1]
    %v554 = vlaneseq
    %v555 = vshrl.u32 %v554, 7
    %v556 = vsub.s32 0, %v555
    %v557 = vrot.slane %v552, %v556
    %559 = vmatprep.subr.mxu0 0.0
    %560 = vmatpush1.msra.mxu0 %v535
    %561 = vmatprep.subr.mxu0 0.0
    %562 = vmatpush1.msra.mxu0 %v536
    %563 = vmatprep.subr.mxu0 0.0
    %564 = vmatpush1.msra.mxu0 %v537
    %565 = vmatprep.subr.mxu0 0.0
    %566 = vmatpush1.msra.mxu0 %v538
    %567 = vmatprep.subr.mxu0 0.0
    %568 = vmatpush1.msra.mxu0 %v539
    %569 = vmatprep.subr.mxu0 0.0
    %570 = vmatpush1.msra.mxu0 %v540
    %571 = vmatprep.subr.mxu0 0.0
    %572 = vmatpush1.msra.mxu0 %v541
    %573 = vmatprep.subr.mxu0 0.0
    %574 = vmatpush1.msra.mxu0 %v542
    %575 = vmatprep.subr.mxu0 0.0
    %576 = vmatpush1.msra.mxu0 %v543
    %577 = vmatprep.subr.mxu0 0.0
    %578 = vmatpush1.msra.mxu0 %v544
    %579 = vmatprep.subr.mxu0 0.0
    %580 = vmatpush1.msra.mxu0 %v545
    %581 = vmatprep.subr.mxu0 0.0
    %582 = vmatpush1.msra.mxu0 %v546
    %583 = vmatprep.subr.mxu0 0.0
    %584 = vmatpush1.msra.mxu0 %v547
    %585 = vmatprep.subr.mxu0 0.0
    %586 = vmatpush1.msra.mxu0 %v548
    %587 = vmatprep.subr.mxu0 0.0
    %588 = vmatpush1.msra.mxu0 %v549
    %589 = vmatprep.subr.mxu0 0.0
    %590 = vmatpush1.msra.mxu0 %v550
    %591 = vmatprep.subr.mxu0 0.0
    %592 = vmatpush1.msra.mxu0 0.0
    %593 = vmatprep.subr.mxu0 0.0
    %594 = vmatpush1.msra.mxu0 0.0
    %595 = vmatprep.subr.mxu0 0.0
    %596 = vmatpush1.msra.mxu0 0.0
    %597 = vmatprep.subr.mxu0 0.0
    %598 = vmatpush1.msra.mxu0 0.0
    %599 = vmatprep.subr.mxu0 0.0
    %600 = vmatpush1.msra.mxu0 0.0
    %601 = vmatprep.subr.mxu0 0.0
    %602 = vmatpush1.msra.mxu0 0.0
    %603 = vmatprep.subr.mxu0 0.0
    %604 = vmatpush1.msra.mxu0 0.0
    %605 = vmatprep.subr.mxu0 0.0
    %606 = vmatpush1.msra.mxu0 0.0
    %607 = vmatprep.subr.mxu0 0.0
    %608 = vmatpush1.msra.mxu0 0.0
    %609 = vmatprep.subr.mxu0 0.0
    %610 = vmatpush1.msra.mxu0 0.0
    %611 = vmatprep.subr.mxu0 0.0
    %612 = vmatpush1.msra.mxu0 0.0
    %613 = vmatprep.subr.mxu0 0.0
    %614 = vmatpush1.msra.mxu0 0.0
    %615 = vmatprep.subr.mxu0 0.0
    %616 = vmatpush1.msra.mxu0 0.0
    %617 = vmatprep.subr.mxu0 0.0
    %618 = vmatpush1.msra.mxu0 0.0
    %619 = vmatprep.subr.mxu0 0.0
    %620 = vmatpush1.msra.mxu0 0.0
    %621 = vmatprep.subr.mxu0 0.0
    %622 = vmatpush1.msra.mxu0 0.0
    %623 = vmatprep.mubr.f32.mxu0 0.0
    %624 = vmatmul.mubr.f32.gmra.mrb[0].mxu0 %v533
    %v625 = vpop.f32.mrb[0].mxu0
    %v626 = vadd.f32 %v557, %v625
    %v627 = vpop.f32.mrb[0].mxu0
    %628 = vdwg.mxu0
    %v629 = vmax.f32 %v626, 0.0
    %s630 = scalar_lea.vmem [#allocation5], 768
    %v631 = vld [vmem:[%s630] sm:$0xff]
    %v632 = vld [vmem:[%s630 + $0x8] sm:$0xff]
    %v633 = vld [vmem:[%s630 + $0x10] sm:$0xff]
    %v634 = vld [vmem:[%s630 + $0x18] sm:$0xff]
    %v635 = vld [vmem:[%s630 + $0x20] sm:$0xff]
    %v636 = vld [vmem:[%s630 + $0x28] sm:$0xff]
    %v637 = vld [vmem:[%s630 + $0x30] sm:$0xff]
    %v638 = vld [vmem:[%s630 + $0x38] sm:$0xff]
    %v639 = vld [vmem:[%s630 + $0x40] sm:$0xff]
    %v640 = vld [vmem:[%s630 + $0x48] sm:$0xff]
    %v641 = vld [vmem:[%s630 + $0x50] sm:$0xff]
    %v642 = vld [vmem:[%s630 + $0x58] sm:$0xff]
    %v643 = vld [vmem:[%s630 + $0x60] sm:$0xff]
    %v644 = vld [vmem:[%s630 + $0x68] sm:$0xff]
    %v645 = vld [vmem:[%s630 + $0x70] sm:$0xff]
    %v646 = vld [vmem:[%s630 + $0x78] sm:$0xff]
    %s647 = scalar_lea.vmem [#allocation7], 6
    %v648 = vld [vmem:[%s647] sm:$0x1]
    %v650 = vlaneseq
    %v651 = vshrl.u32 %v650, 7
    %v652 = vsub.s32 0, %v651
    %v653 = vrot.slane %v648, %v652
    %655 = vmatprep.subr.mxu0 0.0
    %656 = vmatpush1.msra.mxu0 %v631
    %657 = vmatprep.subr.mxu0 0.0
    %658 = vmatpush1.msra.mxu0 %v632
    %659 = vmatprep.subr.mxu0 0.0
    %660 = vmatpush1.msra.mxu0 %v633
    %661 = vmatprep.subr.mxu0 0.0
    %662 = vmatpush1.msra.mxu0 %v634
    %663 = vmatprep.subr.mxu0 0.0
    %664 = vmatpush1.msra.mxu0 %v635
    %665 = vmatprep.subr.mxu0 0.0
    %666 = vmatpush1.msra.mxu0 %v636
    %667 = vmatprep.subr.mxu0 0.0
    %668 = vmatpush1.msra.mxu0 %v637
    %669 = vmatprep.subr.mxu0 0.0
    %670 = vmatpush1.msra.mxu0 %v638
    %671 = vmatprep.subr.mxu0 0.0
    %672 = vmatpush1.msra.mxu0 %v639
    %673 = vmatprep.subr.mxu0 0.0
    %674 = vmatpush1.msra.mxu0 %v640
    %675 = vmatprep.subr.mxu0 0.0
    %676 = vmatpush1.msra.mxu0 %v641
    %677 = vmatprep.subr.mxu0 0.0
    %678 = vmatpush1.msra.mxu0 %v642
    %679 = vmatprep.subr.mxu0 0.0
    %680 = vmatpush1.msra.mxu0 %v643
    %681 = vmatprep.subr.mxu0 0.0
    %682 = vmatpush1.msra.mxu0 %v644
    %683 = vmatprep.subr.mxu0 0.0
    %684 = vmatpush1.msra.mxu0 %v645
    %685 = vmatprep.subr.mxu0 0.0
    %686 = vmatpush1.msra.mxu0 %v646
    %687 = vmatprep.subr.mxu0 0.0
    %688 = vmatpush1.msra.mxu0 0.0
    %689 = vmatprep.subr.mxu0 0.0
    %690 = vmatpush1.msra.mxu0 0.0
    %691 = vmatprep.subr.mxu0 0.0
    %692 = vmatpush1.msra.mxu0 0.0
    %693 = vmatprep.subr.mxu0 0.0
    %694 = vmatpush1.msra.mxu0 0.0
    %695 = vmatprep.subr.mxu0 0.0
    %696 = vmatpush1.msra.mxu0 0.0
    %697 = vmatprep.subr.mxu0 0.0
    %698 = vmatpush1.msra.mxu0 0.0
    %699 = vmatprep.subr.mxu0 0.0
    %700 = vmatpush1.msra.mxu0 0.0
    %701 = vmatprep.subr.mxu0 0.0
    %702 = vmatpush1.msra.mxu0 0.0
    %703 = vmatprep.subr.mxu0 0.0
    %704 = vmatpush1.msra.mxu0 0.0
    %705 = vmatprep.subr.mxu0 0.0
    %706 = vmatpush1.msra.mxu0 0.0
    %707 = vmatprep.subr.mxu0 0.0
    %708 = vmatpush1.msra.mxu0 0.0
    %709 = vmatprep.subr.mxu0 0.0
    %710 = vmatpush1.msra.mxu0 0.0
    %711 = vmatprep.subr.mxu0 0.0
    %712 = vmatpush1.msra.mxu0 0.0
    %713 = vmatprep.subr.mxu0 0.0
    %714 = vmatpush1.msra.mxu0 0.0
    %715 = vmatprep.subr.mxu0 0.0
    %716 = vmatpush1.msra.mxu0 0.0
    %717 = vmatprep.subr.mxu0 0.0
    %718 = vmatpush1.msra.mxu0 0.0
    %719 = vmatprep.mubr.f32.mxu0 0.0
    %720 = vmatmul.mubr.f32.gmra.mrb[0].mxu0 %v629
    %v721 = vpop.f32.mrb[0].mxu0
    %v722 = vadd.f32 %v653, %v721
    %v723 = vpop.f32.mrb[0].mxu0
    %724 = vdwg.mxu0
    %v725 = vmax.f32 %v722, 0.0
    %s726 = scalar_lea.vmem [#allocation5], 896
    %v727 = vld [vmem:[%s726] sm:$0xff]
    %v728 = vld [vmem:[%s726 + $0x8] sm:$0xff]
    %v729 = vld [vmem:[%s726 + $0x10] sm:$0xff]
    %v730 = vld [vmem:[%s726 + $0x18] sm:$0xff]
    %v731 = vld [vmem:[%s726 + $0x20] sm:$0xff]
    %v732 = vld [vmem:[%s726 + $0x28] sm:$0xff]
    %v733 = vld [vmem:[%s726 + $0x30] sm:$0xff]
    %v734 = vld [vmem:[%s726 + $0x38] sm:$0xff]
    %v735 = vld [vmem:[%s726 + $0x40] sm:$0xff]
    %v736 = vld [vmem:[%s726 + $0x48] sm:$0xff]
    %v737 = vld [vmem:[%s726 + $0x50] sm:$0xff]
    %v738 = vld [vmem:[%s726 + $0x58] sm:$0xff]
    %v739 = vld [vmem:[%s726 + $0x60] sm:$0xff]
    %v740 = vld [vmem:[%s726 + $0x68] sm:$0xff]
    %v741 = vld [vmem:[%s726 + $0x70] sm:$0xff]
    %v742 = vld [vmem:[%s726 + $0x78] sm:$0xff]
    %s743 = scalar_lea.vmem [#allocation7], 7
    %v744 = vld [vmem:[%s743] sm:$0x1]
    %v746 = vlaneseq
    %v747 = vshrl.u32 %v746, 7
    %v748 = vsub.s32 0, %v747
    %v749 = vrot.slane %v744, %v748
    %751 = vmatprep.subr.mxu0 0.0
    %752 = vmatpush1.msra.mxu0 %v727
    %753 = vmatprep.subr.mxu0 0.0
    %754 = vmatpush1.msra.mxu0 %v728
    %755 = vmatprep.subr.mxu0 0.0
    %756 = vmatpush1.msra.mxu0 %v729
    %757 = vmatprep.subr.mxu0 0.0
    %758 = vmatpush1.msra.mxu0 %v730
    %759 = vmatprep.subr.mxu0 0.0
    %760 = vmatpush1.msra.mxu0 %v731
    %761 = vmatprep.subr.mxu0 0.0
    %762 = vmatpush1.msra.mxu0 %v732
    %763 = vmatprep.subr.mxu0 0.0
    %764 = vmatpush1.msra.mxu0 %v733
    %765 = vmatprep.subr.mxu0 0.0
    %766 = vmatpush1.msra.mxu0 %v734
    %767 = vmatprep.subr.mxu0 0.0
    %768 = vmatpush1.msra.mxu0 %v735
    %769 = vmatprep.subr.mxu0 0.0
    %770 = vmatpush1.msra.mxu0 %v736
    %771 = vmatprep.subr.mxu0 0.0
    %772 = vmatpush1.msra.mxu0 %v737
    %773 = vmatprep.subr.mxu0 0.0
    %774 = vmatpush1.msra.mxu0 %v738
    %775 = vmatprep.subr.mxu0 0.0
    %776 = vmatpush1.msra.mxu0 %v739
    %777 = vmatprep.subr.mxu0 0.0
    %778 = vmatpush1.msra.mxu0 %v740
    %779 = vmatprep.subr.mxu0 0.0
    %780 = vmatpush1.msra.mxu0 %v741
    %781 = vmatprep.subr.mxu0 0.0
    %782 = vmatpush1.msra.mxu0 %v742
    %783 = vmatprep.subr.mxu0 0.0
    %784 = vmatpush1.msra.mxu0 0.0
    %785 = vmatprep.subr.mxu0 0.0
    %786 = vmatpush1.msra.mxu0 0.0
    %787 = vmatprep.subr.mxu0 0.0
    %788 = vmatpush1.msra.mxu0 0.0
    %789 = vmatprep.subr.mxu0 0.0
    %790 = vmatpush1.msra.mxu0 0.0
    %791 = vmatprep.subr.mxu0 0.0
    %792 = vmatpush1.msra.mxu0 0.0
    %793 = vmatprep.subr.mxu0 0.0
    %794 = vmatpush1.msra.mxu0 0.0
    %795 = vmatprep.subr.mxu0 0.0
    %796 = vmatpush1.msra.mxu0 0.0
    %797 = vmatprep.subr.mxu0 0.0
    %798 = vmatpush1.msra.mxu0 0.0
    %799 = vmatprep.subr.mxu0 0.0
    %800 = vmatpush1.msra.mxu0 0.0
    %801 = vmatprep.subr.mxu0 0.0
    %802 = vmatpush1.msra.mxu0 0.0
    %803 = vmatprep.subr.mxu0 0.0
    %804 = vmatpush1.msra.mxu0 0.0
    %805 = vmatprep.subr.mxu0 0.0
    %806 = vmatpush1.msra.mxu0 0.0
    %807 = vmatprep.subr.mxu0 0.0
    %808 = vmatpush1.msra.mxu0 0.0
    %809 = vmatprep.subr.mxu0 0.0
    %810 = vmatpush1.msra.mxu0 0.0
    %811 = vmatprep.subr.mxu0 0.0
    %812 = vmatpush1.msra.mxu0 0.0
    %813 = vmatprep.subr.mxu0 0.0
    %814 = vmatpush1.msra.mxu0 0.0
    %815 = vmatprep.mubr.f32.mxu0 0.0
    %816 = vmatmul.mubr.f32.gmra.mrb[0].mxu0 %v725
    %v817 = vpop.f32.mrb[0].mxu0
    %v818 = vadd.f32 %v749, %v817
    %v819 = vpop.f32.mrb[0].mxu0
    %820 = vdwg.mxu0
    %v821 = vmax.f32 %v818, 0.0
    %s822 = scalar_lea.vmem [#allocation5], 1024
    %v823 = vld [vmem:[%s822] sm:$0xff]
    %v824 = vld [vmem:[%s822 + $0x8] sm:$0xff]
    %v825 = vld [vmem:[%s822 + $0x10] sm:$0xff]
    %v826 = vld [vmem:[%s822 + $0x18] sm:$0xff]
    %v827 = vld [vmem:[%s822 + $0x20] sm:$0xff]
    %v828 = vld [vmem:[%s822 + $0x28] sm:$0xff]
    %v829 = vld [vmem:[%s822 + $0x30] sm:$0xff]
    %v830 = vld [vmem:[%s822 + $0x38] sm:$0xff]
    %v831 = vld [vmem:[%s822 + $0x40] sm:$0xff]
    %v832 = vld [vmem:[%s822 + $0x48] sm:$0xff]
    %v833 = vld [vmem:[%s822 + $0x50] sm:$0xff]
    %v834 = vld [vmem:[%s822 + $0x58] sm:$0xff]
    %v835 = vld [vmem:[%s822 + $0x60] sm:$0xff]
    %v836 = vld [vmem:[%s822 + $0x68] sm:$0xff]
    %v837 = vld [vmem:[%s822 + $0x70] sm:$0xff]
    %v838 = vld [vmem:[%s822 + $0x78] sm:$0xff]
    %s839 = scalar_lea.vmem [#allocation7], 8
    %v840 = vld [vmem:[%s839] sm:$0x1]
    %v842 = vlaneseq
    %v843 = vshrl.u32 %v842, 7
    %v844 = vsub.s32 0, %v843
    %v845 = vrot.slane %v840, %v844
    %847 = vmatprep.subr.mxu0 0.0
    %848 = vmatpush1.msra.mxu0 %v823
    %849 = vmatprep.subr.mxu0 0.0
    %850 = vmatpush1.msra.mxu0 %v824
    %851 = vmatprep.subr.mxu0 0.0
    %852 = vmatpush1.msra.mxu0 %v825
    %853 = vmatprep.subr.mxu0 0.0
    %854 = vmatpush1.msra.mxu0 %v826
    %855 = vmatprep.subr.mxu0 0.0
    %856 = vmatpush1.msra.mxu0 %v827
    %857 = vmatprep.subr.mxu0 0.0
    %858 = vmatpush1.msra.mxu0 %v828
    %859 = vmatprep.subr.mxu0 0.0
    %860 = vmatpush1.msra.mxu0 %v829
    %861 = vmatprep.subr.mxu0 0.0
    %862 = vmatpush1.msra.mxu0 %v830
    %863 = vmatprep.subr.mxu0 0.0
    %864 = vmatpush1.msra.mxu0 %v831
    %865 = vmatprep.subr.mxu0 0.0
    %866 = vmatpush1.msra.mxu0 %v832
    %867 = vmatprep.subr.mxu0 0.0
    %868 = vmatpush1.msra.mxu0 %v833
    %869 = vmatprep.subr.mxu0 0.0
    %870 = vmatpush1.msra.mxu0 %v834
    %871 = vmatprep.subr.mxu0 0.0
    %872 = vmatpush1.msra.mxu0 %v835
    %873 = vmatprep.subr.mxu0 0.0
    %874 = vmatpush1.msra.mxu0 %v836
    %875 = vmatprep.subr.mxu0 0.0
    %876 = vmatpush1.msra.mxu0 %v837
    %877 = vmatprep.subr.mxu0 0.0
    %878 = vmatpush1.msra.mxu0 %v838
    %879 = vmatprep.subr.mxu0 0.0
    %880 = vmatpush1.msra.mxu0 0.0
    %881 = vmatprep.subr.mxu0 0.0
    %882 = vmatpush1.msra.mxu0 0.0
    %883 = vmatprep.subr.mxu0 0.0
    %884 = vmatpush1.msra.mxu0 0.0
    %885 = vmatprep.subr.mxu0 0.0
    %886 = vmatpush1.msra.mxu0 0.0
    %887 = vmatprep.subr.mxu0 0.0
    %888 = vmatpush1.msra.mxu0 0.0
    %889 = vmatprep.subr.mxu0 0.0
    %890 = vmatpush1.msra.mxu0 0.0
    %891 = vmatprep.subr.mxu0 0.0
    %892 = vmatpush1.msra.mxu0 0.0
    %893 = vmatprep.subr.mxu0 0.0
    %894 = vmatpush1.msra.mxu0 0.0
    %895 = vmatprep.subr.mxu0 0.0
    %896 = vmatpush1.msra.mxu0 0.0
    %897 = vmatprep.subr.mxu0 0.0
    %898 = vmatpush1.msra.mxu0 0.0
    %899 = vmatprep.subr.mxu0 0.0
    %900 = vmatpush1.msra.mxu0 0.0
    %901 = vmatprep.subr.mxu0 0.0
    %902 = vmatpush1.msra.mxu0 0.0
    %903 = vmatprep.subr.mxu0 0.0
    %904 = vmatpush1.msra.mxu0 0.0
    %905 = vmatprep.subr.mxu0 0.0
    %906 = vmatpush1.msra.mxu0 0.0
    %907 = vmatprep.subr.mxu0 0.0
    %908 = vmatpush1.msra.mxu0 0.0
    %909 = vmatprep.subr.mxu0 0.0
    %910 = vmatpush1.msra.mxu0 0.0
    %911 = vmatprep.mubr.f32.mxu0 0.0
    %912 = vmatmul.mubr.f32.gmra.mrb[0].mxu0 %v821
    %v913 = vpop.f32.mrb[0].mxu0
    %v914 = vadd.f32 %v845, %v913
    %v915 = vpop.f32.mrb[0].mxu0
    %916 = vdwg.mxu0
    %v917 = vadd.f32 %v914, %v533
    %v918 = vmax.f32 %v917, 0.0
    %s919 = scalar_lea.vmem [#allocation5], 1152
    %v920 = vld [vmem:[%s919] sm:$0xff]
    %v921 = vld [vmem:[%s919 + $0x8] sm:$0xff]
    %v922 = vld [vmem:[%s919 + $0x10] sm:$0xff]
    %v923 = vld [vmem:[%s919 + $0x18] sm:$0xff]
    %v924 = vld [vmem:[%s919 + $0x20] sm:$0xff]
    %v925 = vld [vmem:[%s919 + $0x28] sm:$0xff]
    %v926 = vld [vmem:[%s919 + $0x30] sm:$0xff]
    %v927 = vld [vmem:[%s919 + $0x38] sm:$0xff]
    %v928 = vld [vmem:[%s919 + $0x40] sm:$0xff]
    %v929 = vld [vmem:[%s919 + $0x48] sm:$0xff]
    %v930 = vld [vmem:[%s919 + $0x50] sm:$0xff]
    %v931 = vld [vmem:[%s919 + $0x58] sm:$0xff]
    %v932 = vld [vmem:[%s919 + $0x60] sm:$0xff]
    %v933 = vld [vmem:[%s919 + $0x68] sm:$0xff]
    %v934 = vld [vmem:[%s919 + $0x70] sm:$0xff]
    %v935 = vld [vmem:[%s919 + $0x78] sm:$0xff]
    %s936 = scalar_lea.vmem [#allocation7], 9
    %v937 = vld [vmem:[%s936] sm:$0x1]
    %v939 = vlaneseq
    %v940 = vshrl.u32 %v939, 7
    %v941 = vsub.s32 0, %v940
    %v942 = vrot.slane %v937, %v941
    %944 = vmatprep.subr.mxu0 0.0
    %945 = vmatpush1.msra.mxu0 %v920
    %946 = vmatprep.subr.mxu0 0.0
    %947 = vmatpush1.msra.mxu0 %v921
    %948 = vmatprep.subr.mxu0 0.0
    %949 = vmatpush1.msra.mxu0 %v922
    %950 = vmatprep.subr.mxu0 0.0
    %951 = vmatpush1.msra.mxu0 %v923
    %952 = vmatprep.subr.mxu0 0.0
    %953 = vmatpush1.msra.mxu0 %v924
    %954 = vmatprep.subr.mxu0 0.0
    %955 = vmatpush1.msra.mxu0 %v925
    %956 = vmatprep.subr.mxu0 0.0
    %957 = vmatpush1.msra.mxu0 %v926
    %958 = vmatprep.subr.mxu0 0.0
    %959 = vmatpush1.msra.mxu0 %v927
    %960 = vmatprep.subr.mxu0 0.0
    %961 = vmatpush1.msra.mxu0 %v928
    %962 = vmatprep.subr.mxu0 0.0
    %963 = vmatpush1.msra.mxu0 %v929
    %964 = vmatprep.subr.mxu0 0.0
    %965 = vmatpush1.msra.mxu0 %v930
    %966 = vmatprep.subr.mxu0 0.0
    %967 = vmatpush1.msra.mxu0 %v931
    %968 = vmatprep.subr.mxu0 0.0
    %969 = vmatpush1.msra.mxu0 %v932
    %970 = vmatprep.subr.mxu0 0.0
    %971 = vmatpush1.msra.mxu0 %v933
    %972 = vmatprep.subr.mxu0 0.0
    %973 = vmatpush1.msra.mxu0 %v934
    %974 = vmatprep.subr.mxu0 0.0
    %975 = vmatpush1.msra.mxu0 %v935
    %976 = vmatprep.subr.mxu0 0.0
    %977 = vmatpush1.msra.mxu0 0.0
    %978 = vmatprep.subr.mxu0 0.0
    %979 = vmatpush1.msra.mxu0 0.0
    %980 = vmatprep.subr.mxu0 0.0
    %981 = vmatpush1.msra.mxu0 0.0
    %982 = vmatprep.subr.mxu0 0.0
    %983 = vmatpush1.msra.mxu0 0.0
    %984 = vmatprep.subr.mxu0 0.0
    %985 = vmatpush1.msra.mxu0 0.0
    %986 = vmatprep.subr.mxu0 0.0
    %987 = vmatpush1.msra.mxu0 0.0
    %988 = vmatprep.subr.mxu0 0.0
    %989 = vmatpush1.msra.mxu0 0.0
    %990 = vmatprep.subr.mxu0 0.0
    %991 = vmatpush1.msra.mxu0 0.0
    %992 = vmatprep.subr.mxu0 0.0
    %993 = vmatpush1.msra.mxu0 0.0
    %994 = vmatprep.subr.mxu0 0.0
    %995 = vmatpush1.msra.mxu0 0.0
    %996 = vmatprep.subr.mxu0 0.0
    %997 = vmatpush1.msra.mxu0 0.0
    %998 = vmatprep.subr.mxu0 0.0
    %999 = vmatpush1.msra.mxu0 0.0
    %1000 = vmatprep.subr.mxu0 0.0
    %1001 = vmatpush1.msra.mxu0 0.0
    %1002 = vmatprep.subr.mxu0 0.0
    %1003 = vmatpush1.msra.mxu0 0.0
    %1004 = vmatprep.subr.mxu0 0.0
    %1005 = vmatpush1.msra.mxu0 0.0
    %1006 = vmatprep.subr.mxu0 0.0
    %1007 = vmatpush1.msra.mxu0 0.0
    %1008 = vmatprep.mubr.f32.mxu0 0.0
    %1009 = vmatmul.mubr.f32.gmra.mrb[0].mxu0 %v918
    %v1010 = vpop.f32.mrb[0].mxu0
    %v1011 = vadd.f32 %v942, %v1010
    %v1012 = vpop.f32.mrb[0].mxu0
    %1013 = vdwg.mxu0
    %v1014 = vmax.f32 %v1011, 0.0
    %s1015 = scalar_lea.vmem [#allocation5], 1280
    %v1016 = vld [vmem:[%s1015] sm:$0xff]
    %v1017 = vld [vmem:[%s1015 + $0x8] sm:$0xff]
    %v1018 = vld [vmem:[%s1015 + $0x10] sm:$0xff]
    %v1019 = vld [vmem:[%s1015 + $0x18] sm:$0xff]
    %v1020 = vld [vmem:[%s1015 + $0x20] sm:$0xff]
    %v1021 = vld [vmem:[%s1015 + $0x28] sm:$0xff]
    %v1022 = vld [vmem:[%s1015 + $0x30] sm:$0xff]
    %v1023 = vld [vmem:[%s1015 + $0x38] sm:$0xff]
    %v1024 = vld [vmem:[%s1015 + $0x40] sm:$0xff]
    %v1025 = vld [vmem:[%s1015 + $0x48] sm:$0xff]
    %v1026 = vld [vmem:[%s1015 + $0x50] sm:$0xff]
    %v1027 = vld [vmem:[%s1015 + $0x58] sm:$0xff]
    %v1028 = vld [vmem:[%s1015 + $0x60] sm:$0xff]
    %v1029 = vld [vmem:[%s1015 + $0x68] sm:$0xff]
    %v1030 = vld [vmem:[%s1015 + $0x70] sm:$0xff]
    %v1031 = vld [vmem:[%s1015 + $0x78] sm:$0xff]
    %s1032 = scalar_lea.vmem [#allocation7], 10
    %v1033 = vld [vmem:[%s1032] sm:$0x1]
    %v1035 = vlaneseq
    %v1036 = vshrl.u32 %v1035, 7
    %v1037 = vsub.s32 0, %v1036
    %v1038 = vrot.slane %v1033, %v1037
    %1040 = vmatprep.subr.mxu0 0.0
    %1041 = vmatpush1.msra.mxu0 %v1016
    %1042 = vmatprep.subr.mxu0 0.0
    %1043 = vmatpush1.msra.mxu0 %v1017
    %1044 = vmatprep.subr.mxu0 0.0
    %1045 = vmatpush1.msra.mxu0 %v1018
    %1046 = vmatprep.subr.mxu0 0.0
    %1047 = vmatpush1.msra.mxu0 %v1019
    %1048 = vmatprep.subr.mxu0 0.0
    %1049 = vmatpush1.msra.mxu0 %v1020
    %1050 = vmatprep.subr.mxu0 0.0
    %1051 = vmatpush1.msra.mxu0 %v1021
    %1052 = vmatprep.subr.mxu0 0.0
    %1053 = vmatpush1.msra.mxu0 %v1022
    %1054 = vmatprep.subr.mxu0 0.0
    %1055 = vmatpush1.msra.mxu0 %v1023
    %1056 = vmatprep.subr.mxu0 0.0
    %1057 = vmatpush1.msra.mxu0 %v1024
    %1058 = vmatprep.subr.mxu0 0.0
    %1059 = vmatpush1.msra.mxu0 %v1025
    %1060 = vmatprep.subr.mxu0 0.0
    %1061 = vmatpush1.msra.mxu0 %v1026
    %1062 = vmatprep.subr.mxu0 0.0
    %1063 = vmatpush1.msra.mxu0 %v1027
    %1064 = vmatprep.subr.mxu0 0.0
    %1065 = vmatpush1.msra.mxu0 %v1028
    %1066 = vmatprep.subr.mxu0 0.0
    %1067 = vmatpush1.msra.mxu0 %v1029
    %1068 = vmatprep.subr.mxu0 0.0
    %1069 = vmatpush1.msra.mxu0 %v1030
    %1070 = vmatprep.subr.mxu0 0.0
    %1071 = vmatpush1.msra.mxu0 %v1031
    %1072 = vmatprep.subr.mxu0 0.0
    %1073 = vmatpush1.msra.mxu0 0.0
    %1074 = vmatprep.subr.mxu0 0.0
    %1075 = vmatpush1.msra.mxu0 0.0
    %1076 = vmatprep.subr.mxu0 0.0
    %1077 = vmatpush1.msra.mxu0 0.0
    %1078 = vmatprep.subr.mxu0 0.0
    %1079 = vmatpush1.msra.mxu0 0.0
    %1080 = vmatprep.subr.mxu0 0.0
    %1081 = vmatpush1.msra.mxu0 0.0
    %1082 = vmatprep.subr.mxu0 0.0
    %1083 = vmatpush1.msra.mxu0 0.0
    %1084 = vmatprep.subr.mxu0 0.0
    %1085 = vmatpush1.msra.mxu0 0.0
    %1086 = vmatprep.subr.mxu0 0.0
    %1087 = vmatpush1.msra.mxu0 0.0
    %1088 = vmatprep.subr.mxu0 0.0
    %1089 = vmatpush1.msra.mxu0 0.0
    %1090 = vmatprep.subr.mxu0 0.0
    %1091 = vmatpush1.msra.mxu0 0.0
    %1092 = vmatprep.subr.mxu0 0.0
    %1093 = vmatpush1.msra.mxu0 0.0
    %1094 = vmatprep.subr.mxu0 0.0
    %1095 = vmatpush1.msra.mxu0 0.0
    %1096 = vmatprep.subr.mxu0 0.0
    %1097 = vmatpush1.msra.mxu0 0.0
    %1098 = vmatprep.subr.mxu0 0.0
    %1099 = vmatpush1.msra.mxu0 0.0
    %1100 = vmatprep.subr.mxu0 0.0
    %1101 = vmatpush1.msra.mxu0 0.0
    %1102 = vmatprep.subr.mxu0 0.0
    %1103 = vmatpush1.msra.mxu0 0.0
    %1104 = vmatprep.mubr.f32.mxu0 0.0
    %1105 = vmatmul.mubr.f32.gmra.mrb[0].mxu0 %v1014
    %v1106 = vpop.f32.mrb[0].mxu0
    %v1107 = vadd.f32 %v1038, %v1106
    %v1108 = vpop.f32.mrb[0].mxu0
    %1109 = vdwg.mxu0
    %v1110 = vmax.f32 %v1107, 0.0
    %s1111 = scalar_lea.vmem [#allocation5], 1408
    %v1112 = vld [vmem:[%s1111] sm:$0xff]
    %v1113 = vld [vmem:[%s1111 + $0x8] sm:$0xff]
    %v1114 = vld [vmem:[%s1111 + $0x10] sm:$0xff]
    %v1115 = vld [vmem:[%s1111 + $0x18] sm:$0xff]
    %v1116 = vld [vmem:[%s1111 + $0x20] sm:$0xff]
    %v1117 = vld [vmem:[%s1111 + $0x28] sm:$0xff]
    %v1118 = vld [vmem:[%s1111 + $0x30] sm:$0xff]
    %v1119 = vld [vmem:[%s1111 + $0x38] sm:$0xff]
    %v1120 = vld [vmem:[%s1111 + $0x40] sm:$0xff]
    %v1121 = vld [vmem:[%s1111 + $0x48] sm:$0xff]
    %v1122 = vld [vmem:[%s1111 + $0x50] sm:$0xff]
    %v1123 = vld [vmem:[%s1111 + $0x58] sm:$0xff]
    %v1124 = vld [vmem:[%s1111 + $0x60] sm:$0xff]
    %v1125 = vld [vmem:[%s1111 + $0x68] sm:$0xff]
    %v1126 = vld [vmem:[%s1111 + $0x70] sm:$0xff]
    %v1127 = vld [vmem:[%s1111 + $0x78] sm:$0xff]
    %s1128 = scalar_lea.vmem [#allocation7], 11
    %v1129 = vld [vmem:[%s1128] sm:$0x1]
    %v1131 = vlaneseq
    %v1132 = vshrl.u32 %v1131, 7
    %v1133 = vsub.s32 0, %v1132
    %v1134 = vrot.slane %v1129, %v1133
    %1136 = vmatprep.subr.mxu0 0.0
    %1137 = vmatpush1.msra.mxu0 %v1112
    %1138 = vmatprep.subr.mxu0 0.0
    %1139 = vmatpush1.msra.mxu0 %v1113
    %1140 = vmatprep.subr.mxu0 0.0
    %1141 = vmatpush1.msra.mxu0 %v1114
    %1142 = vmatprep.subr.mxu0 0.0
    %1143 = vmatpush1.msra.mxu0 %v1115
    %1144 = vmatprep.subr.mxu0 0.0
    %1145 = vmatpush1.msra.mxu0 %v1116
    %1146 = vmatprep.subr.mxu0 0.0
    %1147 = vmatpush1.msra.mxu0 %v1117
    %1148 = vmatprep.subr.mxu0 0.0
    %1149 = vmatpush1.msra.mxu0 %v1118
    %1150 = vmatprep.subr.mxu0 0.0
    %1151 = vmatpush1.msra.mxu0 %v1119
    %1152 = vmatprep.subr.mxu0 0.0
    %1153 = vmatpush1.msra.mxu0 %v1120
    %1154 = vmatprep.subr.mxu0 0.0
    %1155 = vmatpush1.msra.mxu0 %v1121
    %1156 = vmatprep.subr.mxu0 0.0
    %1157 = vmatpush1.msra.mxu0 %v1122
    %1158 = vmatprep.subr.mxu0 0.0
    %1159 = vmatpush1.msra.mxu0 %v1123
    %1160 = vmatprep.subr.mxu0 0.0
    %1161 = vmatpush1.msra.mxu0 %v1124
    %1162 = vmatprep.subr.mxu0 0.0
    %1163 = vmatpush1.msra.mxu0 %v1125
    %1164 = vmatprep.subr.mxu0 0.0
    %1165 = vmatpush1.msra.mxu0 %v1126
    %1166 = vmatprep.subr.mxu0 0.0
    %1167 = vmatpush1.msra.mxu0 %v1127
    %1168 = vmatprep.subr.mxu0 0.0
    %1169 = vmatpush1.msra.mxu0 0.0
    %1170 = vmatprep.subr.mxu0 0.0
    %1171 = vmatpush1.msra.mxu0 0.0
    %1172 = vmatprep.subr.mxu0 0.0
    %1173 = vmatpush1.msra.mxu0 0.0
    %1174 = vmatprep.subr.mxu0 0.0
    %1175 = vmatpush1.msra.mxu0 0.0
    %1176 = vmatprep.subr.mxu0 0.0
    %1177 = vmatpush1.msra.mxu0 0.0
    %1178 = vmatprep.subr.mxu0 0.0
    %1179 = vmatpush1.msra.mxu0 0.0
    %1180 = vmatprep.subr.mxu0 0.0
    %1181 = vmatpush1.msra.mxu0 0.0
    %1182 = vmatprep.subr.mxu0 0.0
    %1183 = vmatpush1.msra.mxu0 0.0
    %1184 = vmatprep.subr.mxu0 0.0
    %1185 = vmatpush1.msra.mxu0 0.0
    %1186 = vmatprep.subr.mxu0 0.0
    %1187 = vmatpush1.msra.mxu0 0.0
    %1188 = vmatprep.subr.mxu0 0.0
    %1189 = vmatpush1.msra.mxu0 0.0
    %1190 = vmatprep.subr.mxu0 0.0
    %1191 = vmatpush1.msra.mxu0 0.0
    %1192 = vmatprep.subr.mxu0 0.0
    %1193 = vmatpush1.msra.mxu0 0.0
    %1194 = vmatprep.subr.mxu0 0.0
    %1195 = vmatpush1.msra.mxu0 0.0
    %1196 = vmatprep.subr.mxu0 0.0
    %1197 = vmatpush1.msra.mxu0 0.0
    %1198 = vmatprep.subr.mxu0 0.0
    %1199 = vmatpush1.msra.mxu0 0.0
    %1200 = vmatprep.mubr.f32.mxu0 0.0
    %1201 = vmatmul.mubr.f32.gmra.mrb[0].mxu0 %v1110
    %v1202 = vpop.f32.mrb[0].mxu0
    %v1203 = vadd.f32 %v1134, %v1202
    %v1204 = vpop.f32.mrb[0].mxu0
    %1205 = vdwg.mxu0
    %v1206 = vmax.f32 %v1203, 0.0
    %s1207 = scalar_lea.vmem [#allocation5], 1536
    %v1208 = vld [vmem:[%s1207] sm:$0xff]
    %v1209 = vld [vmem:[%s1207 + $0x8] sm:$0xff]
    %v1210 = vld [vmem:[%s1207 + $0x10] sm:$0xff]
    %v1211 = vld [vmem:[%s1207 + $0x18] sm:$0xff]
    %v1212 = vld [vmem:[%s1207 + $0x20] sm:$0xff]
    %v1213 = vld [vmem:[%s1207 + $0x28] sm:$0xff]
    %v1214 = vld [vmem:[%s1207 + $0x30] sm:$0xff]
    %v1215 = vld [vmem:[%s1207 + $0x38] sm:$0xff]
    %v1216 = vld [vmem:[%s1207 + $0x40] sm:$0xff]
    %v1217 = vld [vmem:[%s1207 + $0x48] sm:$0xff]
    %v1218 = vld [vmem:[%s1207 + $0x50] sm:$0xff]
    %v1219 = vld [vmem:[%s1207 + $0x58] sm:$0xff]
    %v1220 = vld [vmem:[%s1207 + $0x60] sm:$0xff]
    %v1221 = vld [vmem:[%s1207 + $0x68] sm:$0xff]
    %v1222 = vld [vmem:[%s1207 + $0x70] sm:$0xff]
    %v1223 = vld [vmem:[%s1207 + $0x78] sm:$0xff]
    %s1224 = scalar_lea.vmem [#allocation7], 12
    %v1225 = vld [vmem:[%s1224] sm:$0x1]
    %v1227 = vlaneseq
    %v1228 = vshrl.u32 %v1227, 7
    %v1229 = vsub.s32 0, %v1228
    %v1230 = vrot.slane %v1225, %v1229
    %1232 = vmatprep.subr.mxu0 0.0
    %1233 = vmatpush1.msra.mxu0 %v1208
    %1234 = vmatprep.subr.mxu0 0.0
    %1235 = vmatpush1.msra.mxu0 %v1209
    %1236 = vmatprep.subr.mxu0 0.0
    %1237 = vmatpush1.msra.mxu0 %v1210
    %1238 = vmatprep.subr.mxu0 0.0
    %1239 = vmatpush1.msra.mxu0 %v1211
    %1240 = vmatprep.subr.mxu0 0.0
    %1241 = vmatpush1.msra.mxu0 %v1212
    %1242 = vmatprep.subr.mxu0 0.0
    %1243 = vmatpush1.msra.mxu0 %v1213
    %1244 = vmatprep.subr.mxu0 0.0
    %1245 = vmatpush1.msra.mxu0 %v1214
    %1246 = vmatprep.subr.mxu0 0.0
    %1247 = vmatpush1.msra.mxu0 %v1215
    %1248 = vmatprep.subr.mxu0 0.0
    %1249 = vmatpush1.msra.mxu0 %v1216
    %1250 = vmatprep.subr.mxu0 0.0
    %1251 = vmatpush1.msra.mxu0 %v1217
    %1252 = vmatprep.subr.mxu0 0.0
    %1253 = vmatpush1.msra.mxu0 %v1218
    %1254 = vmatprep.subr.mxu0 0.0
    %1255 = vmatpush1.msra.mxu0 %v1219
    %1256 = vmatprep.subr.mxu0 0.0
    %1257 = vmatpush1.msra.mxu0 %v1220
    %1258 = vmatprep.subr.mxu0 0.0
    %1259 = vmatpush1.msra.mxu0 %v1221
    %1260 = vmatprep.subr.mxu0 0.0
    %1261 = vmatpush1.msra.mxu0 %v1222
    %1262 = vmatprep.subr.mxu0 0.0
    %1263 = vmatpush1.msra.mxu0 %v1223
    %1264 = vmatprep.subr.mxu0 0.0
    %1265 = vmatpush1.msra.mxu0 0.0
    %1266 = vmatprep.subr.mxu0 0.0
    %1267 = vmatpush1.msra.mxu0 0.0
    %1268 = vmatprep.subr.mxu0 0.0
    %1269 = vmatpush1.msra.mxu0 0.0
    %1270 = vmatprep.subr.mxu0 0.0
    %1271 = vmatpush1.msra.mxu0 0.0
    %1272 = vmatprep.subr.mxu0 0.0
    %1273 = vmatpush1.msra.mxu0 0.0
    %1274 = vmatprep.subr.mxu0 0.0
    %1275 = vmatpush1.msra.mxu0 0.0
    %1276 = vmatprep.subr.mxu0 0.0
    %1277 = vmatpush1.msra.mxu0 0.0
    %1278 = vmatprep.subr.mxu0 0.0
    %1279 = vmatpush1.msra.mxu0 0.0
    %1280 = vmatprep.subr.mxu0 0.0
    %1281 = vmatpush1.msra.mxu0 0.0
    %1282 = vmatprep.subr.mxu0 0.0
    %1283 = vmatpush1.msra.mxu0 0.0
    %1284 = vmatprep.subr.mxu0 0.0
    %1285 = vmatpush1.msra.mxu0 0.0
    %1286 = vmatprep.subr.mxu0 0.0
    %1287 = vmatpush1.msra.mxu0 0.0
    %1288 = vmatprep.subr.mxu0 0.0
    %1289 = vmatpush1.msra.mxu0 0.0
    %1290 = vmatprep.subr.mxu0 0.0
    %1291 = vmatpush1.msra.mxu0 0.0
    %1292 = vmatprep.subr.mxu0 0.0
    %1293 = vmatpush1.msra.mxu0 0.0
    %1294 = vmatprep.subr.mxu0 0.0
    %1295 = vmatpush1.msra.mxu0 0.0
    %1296 = vmatprep.mubr.f32.mxu0 0.0
    %1297 = vmatmul.mubr.f32.gmra.mrb[0].mxu0 %v1206
    %v1298 = vpop.f32.mrb[0].mxu0
    %v1299 = vadd.f32 %v1230, %v1298
    %v1300 = vpop.f32.mrb[0].mxu0
    %1301 = vdwg.mxu0
    %v1302 = vadd.f32 %v1299, %v918
    %v1303 = vmax.f32 %v1302, 0.0
    %s1304 = scalar_lea.vmem [#allocation5], 1664
    %v1305 = vld [vmem:[%s1304] sm:$0xff]
    %v1306 = vld [vmem:[%s1304 + $0x8] sm:$0xff]
    %v1307 = vld [vmem:[%s1304 + $0x10] sm:$0xff]
    %v1308 = vld [vmem:[%s1304 + $0x18] sm:$0xff]
    %v1309 = vld [vmem:[%s1304 + $0x20] sm:$0xff]
    %v1310 = vld [vmem:[%s1304 + $0x28] sm:$0xff]
    %v1311 = vld [vmem:[%s1304 + $0x30] sm:$0xff]
    %v1312 = vld [vmem:[%s1304 + $0x38] sm:$0xff]
    %v1313 = vld [vmem:[%s1304 + $0x40] sm:$0xff]
    %v1314 = vld [vmem:[%s1304 + $0x48] sm:$0xff]
    %v1315 = vld [vmem:[%s1304 + $0x50] sm:$0xff]
    %v1316 = vld [vmem:[%s1304 + $0x58] sm:$0xff]
    %v1317 = vld [vmem:[%s1304 + $0x60] sm:$0xff]
    %v1318 = vld [vmem:[%s1304 + $0x68] sm:$0xff]
    %v1319 = vld [vmem:[%s1304 + $0x70] sm:$0xff]
    %v1320 = vld [vmem:[%s1304 + $0x78] sm:$0xff]
    %s1321 = scalar_lea.vmem [#allocation7], 13
    %v1322 = vld [vmem:[%s1321] sm:$0x1]
    %v1324 = vlaneseq
    %v1325 = vshrl.u32 %v1324, 7
    %v1326 = vsub.s32 0, %v1325
    %v1327 = vrot.slane %v1322, %v1326
    %1329 = vmatprep.subr.mxu0 0.0
    %1330 = vmatpush1.msra.mxu0 %v1305
    %1331 = vmatprep.subr.mxu0 0.0
    %1332 = vmatpush1.msra.mxu0 %v1306
    %1333 = vmatprep.subr.mxu0 0.0
    %1334 = vmatpush1.msra.mxu0 %v1307
    %1335 = vmatprep.subr.mxu0 0.0
    %1336 = vmatpush1.msra.mxu0 %v1308
    %1337 = vmatprep.subr.mxu0 0.0
    %1338 = vmatpush1.msra.mxu0 %v1309
    %1339 = vmatprep.subr.mxu0 0.0
    %1340 = vmatpush1.msra.mxu0 %v1310
    %1341 = vmatprep.subr.mxu0 0.0
    %1342 = vmatpush1.msra.mxu0 %v1311
    %1343 = vmatprep.subr.mxu0 0.0
    %1344 = vmatpush1.msra.mxu0 %v1312
    %1345 = vmatprep.subr.mxu0 0.0
    %1346 = vmatpush1.msra.mxu0 %v1313
    %1347 = vmatprep.subr.mxu0 0.0
    %1348 = vmatpush1.msra.mxu0 %v1314
    %1349 = vmatprep.subr.mxu0 0.0
    %1350 = vmatpush1.msra.mxu0 %v1315
    %1351 = vmatprep.subr.mxu0 0.0
    %1352 = vmatpush1.msra.mxu0 %v1316
    %1353 = vmatprep.subr.mxu0 0.0
    %1354 = vmatpush1.msra.mxu0 %v1317
    %1355 = vmatprep.subr.mxu0 0.0
    %1356 = vmatpush1.msra.mxu0 %v1318
    %1357 = vmatprep.subr.mxu0 0.0
    %1358 = vmatpush1.msra.mxu0 %v1319
    %1359 = vmatprep.subr.mxu0 0.0
    %1360 = vmatpush1.msra.mxu0 %v1320
    %1361 = vmatprep.subr.mxu0 0.0
    %1362 = vmatpush1.msra.mxu0 0.0
    %1363 = vmatprep.subr.mxu0 0.0
    %1364 = vmatpush1.msra.mxu0 0.0
    %1365 = vmatprep.subr.mxu0 0.0
    %1366 = vmatpush1.msra.mxu0 0.0
    %1367 = vmatprep.subr.mxu0 0.0
    %1368 = vmatpush1.msra.mxu0 0.0
    %1369 = vmatprep.subr.mxu0 0.0
    %1370 = vmatpush1.msra.mxu0 0.0
    %1371 = vmatprep.subr.mxu0 0.0
    %1372 = vmatpush1.msra.mxu0 0.0
    %1373 = vmatprep.subr.mxu0 0.0
    %1374 = vmatpush1.msra.mxu0 0.0
    %1375 = vmatprep.subr.mxu0 0.0
    %1376 = vmatpush1.msra.mxu0 0.0
    %1377 = vmatprep.subr.mxu0 0.0
    %1378 = vmatpush1.msra.mxu0 0.0
    %1379 = vmatprep.subr.mxu0 0.0
    %1380 = vmatpush1.msra.mxu0 0.0
    %1381 = vmatprep.subr.mxu0 0.0
    %1382 = vmatpush1.msra.mxu0 0.0
    %1383 = vmatprep.subr.mxu0 0.0
    %1384 = vmatpush1.msra.mxu0 0.0
    %1385 = vmatprep.subr.mxu0 0.0
    %1386 = vmatpush1.msra.mxu0 0.0
    %1387 = vmatprep.subr.mxu0 0.0
    %1388 = vmatpush1.msra.mxu0 0.0
    %1389 = vmatprep.subr.mxu0 0.0
    %1390 = vmatpush1.msra.mxu0 0.0
    %1391 = vmatprep.subr.mxu0 0.0
    %1392 = vmatpush1.msra.mxu0 0.0
    %1393 = vmatprep.mubr.f32.mxu0 0.0
    %1394 = vmatmul.mubr.f32.gmra.mrb[0].mxu0 %v1303
    %v1395 = vpop.f32.mrb[0].mxu0
    %v1396 = vadd.f32 %v1327, %v1395
    %v1397 = vpop.f32.mrb[0].mxu0
    %1398 = vdwg.mxu0
    %1399 = vst [vmem:[#allocation8] sm:$0xff] %v1396
    // Predicated region
    $region26: #{tpu_custom_call.1} parent=1 // pred_check
      _
    $region27: #{tpu_custom_call.1} parent=1 // pred_check_branch
      %1401 = sbr.rel (0) target = $region29
    $region28: #{tpu_custom_call.1} parent=1 // pred_region
      %s1403 = ssub.s32 128, 128
      %1404 = vsyncadd [#allocation4], %s1403
      %s1406 = sshll.u32 [#allocation8], 4
      %s1407 = int_to_ptr.vmem [resolvable:$true] %s1406
      %1409 = dma.vmem_to_hbm [thread:$0]  %s1407, 128, %s3, [#allocation4]
    $region29: #{tpu_custom_call.1} parent=1 // pred_fallthru
      _
    // Predicated region
    $region30: #{tpu_custom_call.1} parent=1 // pred_check
      _
    $region31: #{tpu_custom_call.1} parent=1 // pred_check_branch
      %1411 = sbr.rel (0) target = $region33
    $region32: #{tpu_custom_call.1} parent=1 // pred_region
      %1412 = dma.done [#allocation4], 128
    $region33: #{tpu_custom_call.1} parent=1 // pred_fallthru
      _
    %1413 = vsyncpa [#allocation3], 1
    %1414 = vsyncpa [#allocation6], 1
    %1415 = vsyncpa [#allocation4], 1

</llo_original>
